<compile_context>
chip_gen: v6e
topology: v6e:2x2x1
jax: 0.10.0
libtpu: 0.0.40
codegen_flags: <defaults>
</compile_context>

<pallas_src>
import jax
import jax.numpy as jnp
from jax import lax
from jax.experimental import pallas as pl
from jax.experimental.pallas import tpu as pltpu

EPS = 1e-5
SLOPE = 0.2
F32 = jnp.float32
BF16 = jnp.bfloat16


def _leaky_relu(x):
    return jnp.where(x > 0, x, SLOPE * x)


# ---------------------------------------------------------------------------
# Stage 1: fused fc1 (block-diagonal) -> leaky -> fc2 -> (z2, partial BN stats)
# ---------------------------------------------------------------------------
def _stage1_kernel(xc_ref, w1_ref, w2_ref, vec_ref, z2_ref, stats_ref):
    # xc: [tm, K_pad] bf16 ; w1: [K_pad, 2048] bf16 (block-diagonal w11 / w12)
    h = jnp.dot(xc_ref[...], w1_ref[...], preferred_element_type=F32)
    h = _leaky_relu(h + vec_ref[:, 0:2048])            # + [b11 | b12]
    # fc2 -- the concat is already materialized by the block-diagonal fc1
    z2 = jnp.dot(h.astype(BF16), w2_ref[...], preferred_element_type=F32)
    z2 = z2 + vec_ref[:, 2048:2560]                    # + b2
    z2_ref[...] = z2
    # per-tile partial BatchNorm statistics (single pass: sum, sum of squares)
    stats_ref[0, 0:1, :] = jnp.sum(z2, axis=0, keepdims=True)
    stats_ref[0, 1:2, :] = jnp.sum(z2 * z2, axis=0, keepdims=True)


# ---------------------------------------------------------------------------
# Stage 2: BN2 -> leaky -> fc3 -> (z3, partial BN stats)
# ---------------------------------------------------------------------------
def _stage2_kernel(z2_ref, w3_ref, vec_ref, z3_ref, stats_ref):
    z2 = z2_ref[...]
    g = vec_ref[:, 0:512]
    b = vec_ref[:, 512:1024]
    mean = vec_ref[:, 1024:1536]
    var = vec_ref[:, 1536:2048]
    b3 = vec_ref[:, 2048:2304]
    scale = g * lax.rsqrt(var + EPS)                   # rsqrt -> EUP slot
    h = _leaky_relu((z2 - mean) * scale + b)
    z3 = jnp.dot(h.astype(BF16), w3_ref[...], preferred_element_type=F32) + b3
    z3_ref[...] = z3
    stats_ref[0, 0:1, :] = jnp.sum(z3, axis=0, keepdims=True)
    stats_ref[0, 1:2, :] = jnp.sum(z3 * z3, axis=0, keepdims=True)


# ---------------------------------------------------------------------------
# Stage 3: BN3 -> leaky -> fc4 (N padded to 128 lanes) -> sigmoid
# ---------------------------------------------------------------------------
def _stage3_kernel(z3_ref, w4_ref, vec_ref, y_ref):
    z3 = z3_ref[...]
    g = vec_ref[:, 0:256]
    b = vec_ref[:, 256:512]
    mean = vec_ref[:, 512:768]
    var = vec_ref[:, 768:1024]
    b4 = vec_ref[:, 1024:]
    scale = g * lax.rsqrt(var + EPS)
    h = _leaky_relu((z3 - mean) * scale + b)
    o = jnp.dot(h.astype(BF16), w4_ref[...], preferred_element_type=F32) + b4
    y_ref[...] = jax.nn.sigmoid(o)


# ---------------------------------------------------------------------------
# Wrapper
# ---------------------------------------------------------------------------
def _pick_tile(batch, max_tile=256):
    t = min(batch, max_tile)
    t -= t % 8
    while batch % t != 0:
        t -= 8
    return t


def conditional_bn_discriminator(x, c, params, *, max_tile=256):
    """x: [B, x_size], c: [B, class_num] -> y: [B, y_size] (training-mode BN)."""
    B, x_size = x.shape
    class_num = c.shape[1]
    y_size = params["w4"].shape[1]
    if B % 8 != 0:
        raise ValueError("batch must be a multiple of 8")
        # TODO(synk): support ragged batches via a row mask in the stats pass.
    tile = _pick_tile(B, max_tile)
    nt = B // tile

    k_in = x_size + class_num
    k_pad = max(128, -(-k_in // 128) * 128)
    n_pad = max(128, -(-y_size // 128) * 128)

    par = pltpu.CompilerParams(dimension_semantics=("parallel",))

    # ---- one-time layout plumbing (wrapper side) ----
    xc = jnp.zeros((B, k_pad), F32)
    xc = xc.at[:, :x_size].set(x).at[:, x_size:k_in].set(c).astype(BF16)

    w1 = jnp.zeros((k_pad, 2048), F32)
    w1 = (w1.at[:x_size, :1024].set(params["w11"])
            .at[x_size:k_in, 1024:].set(params["w12"])).astype(BF16)
    w2 = params["w2"].astype(BF16)
    w3 = params["w3"].astype(BF16)
    w4 = jnp.zeros((256, n_pad), F32).at[:, :y_size].set(params["w4"]).astype(BF16)
    b4 = jnp.zeros((n_pad,), F32).at[:y_size].set(params["b4"])

    vec1 = jnp.concatenate([params["b11"], params["b12"], params["b2"]])[None, :]

    # ---- stage 1 ----
    z2, s2 = pl.pallas_call(
        _stage1_kernel,
        grid=(nt,),
        in_specs=[
            pl.BlockSpec((tile, k_pad), lambda i: (i, 0)),
            pl.BlockSpec((k_pad, 2048), lambda i: (0, 0)),   # resident weights
            pl.BlockSpec((2048, 512), lambda i: (0, 0)),     # resident weights
            pl.BlockSpec((1, 2560), lambda i: (0, 0)),       # packed small vectors
        ],
        out_specs=(
            pl.BlockSpec((tile, 512), lambda i: (i, 0)),
            pl.BlockSpec((1, 2, 512), lambda i: (i, 0, 0)),
        ),
        out_shape=(
            jax.ShapeDtypeStruct((B, 512), F32),
            jax.ShapeDtypeStruct((nt, 2, 512), F32),
        ),
        compiler_params=par,
    )(xc, w1, w2, vec1)

    tot2 = jnp.sum(s2, axis=0)
    mean2 = tot2[0] / B
    var2 = jnp.maximum(tot2[1] / B - mean2 * mean2, 0.0)
    vec2 = jnp.concatenate(
        [params["g2"], params["be2"], mean2, var2, params["b3"]])[None, :]

    # ---- stage 2 ----
    z3, s3 = pl.pallas_call(
        _stage2_kernel,
        grid=(nt,),
        in_specs=[
            pl.BlockSpec((tile, 512), lambda i: (i, 0)),
            pl.BlockSpec((512, 256), lambda i: (0, 0)),
            pl.BlockSpec((1, 2304), lambda i: (0, 0)),
        ],
        out_specs=(
            pl.BlockSpec((tile, 256), lambda i: (i, 0)),
            pl.BlockSpec((1, 2, 256), lambda i: (i, 0, 0)),
        ),
        out_shape=(
            jax.ShapeDtypeStruct((B, 256), F32),
            jax.ShapeDtypeStruct((nt, 2, 256), F32),
        ),
        compiler_params=par,
    )(z2, w3, vec2)

    tot3 = jnp.sum(s3, axis=0)
    mean3 = tot3[0] / B
    var3 = jnp.maximum(tot3[1] / B - mean3 * mean3, 0.0)
    vec3 = jnp.concatenate(
        [params["g3"], params["be3"], mean3, var3, b4])[None, :]

    # ---- stage 3 ----
    y_pad = pl.pallas_call(
        _stage3_kernel,
        grid=(nt,),
        in_specs=[
            pl.BlockSpec((tile, 256), lambda i: (i, 0)),
            pl.BlockSpec((256, n_pad), lambda i: (0, 0)),
            pl.BlockSpec((1, 1024 + n_pad), lambda i: (0, 0)),
        ],
        out_specs=pl.BlockSpec((tile, n_pad), lambda i: (i, 0)),
        out_shape=jax.ShapeDtypeStruct((B, n_pad), F32),
        compiler_params=par,
    )(z3, w4, vec3)

    return y_pad[:, :y_size]


# ---------------------------------------------------------------------------
# Params (weight_init(0, 0.02), biases zero, BN gamma=1 / beta=0) and reference
# ---------------------------------------------------------------------------
def init_params(key, x_size, class_num, y_size, std=0.02):
    ks = jax.random.split(key, 5)

    def lin(k, fin, fout):
        w = (std * jax.random.normal(k, (fin, fout))).astype(F32)
        return w, jnp.zeros((fout,), F32)

    w11, b11 = lin(ks[0], x_size, 1024)
    w12, b12 = lin(ks[1], class_num, 1024)
    w2, b2 = lin(ks[2], 2048, 512)
    w3, b3 = lin(ks[3], 512, 256)
    w4, b4 = lin(ks[4], 256, y_size)
    return dict(
        w11=w11, b11=b11, w12=w12, b12=b12,
        w2=w2, b2=b2, g2=jnp.ones((512,), F32), be2=jnp.zeros((512,), F32),
        w3=w3, b3=b3, g3=jnp.ones((256,), F32), be3=jnp.zeros((256,), F32),
        w4=w4, b4=b4,
    )


def reference_forward(x, c, p, eps=EPS):
    # Pure-JAX reference of the PyTorch forward (training-mode BN), using the
    # same bf16-matmul / f32-accumulate numerics as the kernels.
    def mm(a, w):
        return jnp.dot(a.astype(BF16), w.astype(BF16), preferred_element_type=F32)

    def lrelu(v):
        return jnp.where(v > 0, v, SLOPE * v)

    def bn(v, g, b):
        m = jnp.mean(v, axis=0)
        var = jnp.maximum(jnp.mean(v * v, axis=0) - m * m, 0.0)
        return (v - m) * (g * lax.rsqrt(var + eps)) + b

    h1 = lrelu(mm(x, p["w11"]) + p["b11"])
    h2 = lrelu(mm(c, p["w12"]) + p["b12"])
    h = jnp.concatenate([h1, h2], axis=-1)
    h = lrelu(bn(mm(h, p["w2"]) + p["b2"], p["g2"], p["be2"]))
    h = lrelu(bn(mm(h, p["w3"]) + p["b3"], p["g3"], p["be3"]))
    return jax.nn.sigmoid(mm(h, p["w4"]) + p["b4"])


if __name__ == "__main__":
    B, x_size, class_num, y_size = 8, 32, 10, 1

    key = jax.random.PRNGKey(0)
    kx, kc, kp = jax.random.split(key, 3)

    x = jax.random.normal(kx, (B, x_size), dtype=F32)
    labels = jax.random.randint(kc, (B,), 0, class_num)
    c = jax.nn.one_hot(labels, class_num, dtype=F32)

    params = init_params(kp, x_size, class_num, y_size)

    fwd = jax.jit(lambda xx, cc: conditional_bn_discriminator(xx, cc, params))
    y = jax.block_until_ready(fwd(x, c))

    y_ref = reference_forward(x, c, params)
    assert y.shape == (B, y_size)
    assert jnp.allclose(y, y_ref, atol=1e-3, rtol=1e-3), float(
        jnp.max(jnp.abs(y - y_ref)))

    print("KERNEL_OK")
</pallas_src>

<mosaic_0001>
module attributes {stable_mosaic.version = 11 : i64} {
  func.func @_stage1_kernel(%arg0: i32, %arg1: memref<8x128xbf16, #tpu.memory_space<vmem>>, %arg2: memref<128x2048xbf16, #tpu.memory_space<vmem>>, %arg3: memref<2048x512xbf16, #tpu.memory_space<vmem>>, %arg4: memref<1x2560xf32, #tpu.memory_space<vmem>>, %arg5: memref<8x512xf32, #tpu.memory_space<vmem>>, %arg6: memref<1x2x512xf32, #tpu.memory_space<vmem>>) attributes {dimension_semantics = [#tpu.dimension_semantics<parallel>], iteration_bounds = array<i64: 1>, scalar_prefetch = 0 : i64, scratch_operands = 0 : i64, tpu.core_type = #tpu.core_type<tc>, window_params = [{transform_indices = @transform_0, window_bounds = array<i64: 8, 128>}, {pipeline_mode = #tpu.pipeline_mode<synchronous>, transform_indices = @transform_1, window_bounds = array<i64: 128, 2048>}, {pipeline_mode = #tpu.pipeline_mode<synchronous>, transform_indices = @transform_2, window_bounds = array<i64: 2048, 512>}, {pipeline_mode = #tpu.pipeline_mode<synchronous>, transform_indices = @transform_3, window_bounds = array<i64: 1, 2560>}, {transform_indices = @transform_4, window_bounds = array<i64: 8, 512>}, {transform_indices = @transform_5, window_bounds = array<i64: 1, 2, 512>}]} {
    %c0 = arith.constant 0 : index
    %c0_0 = arith.constant 0 : index
    %0 = vector.load %arg1[%c0, %c0_0] : memref<8x128xbf16, #tpu.memory_space<vmem>>, vector<8x128xbf16>
    %c0_1 = arith.constant 0 : index
    %c0_2 = arith.constant 0 : index
    %1 = vector.load %arg2[%c0_1, %c0_2] : memref<128x2048xbf16, #tpu.memory_space<vmem>>, vector<128x2048xbf16>
    %cst = arith.constant dense<0.000000e+00> : vector<8x2048xf32>
    %2 = tpu.matmul %0, %1, %cst {dimension_numbers = #tpu.dot_dimension_numbers<[1], [0], [0], [1], [0, 0, 1, 1], [], []>} : vector<8x128xbf16>, vector<128x2048xbf16>, vector<8x2048xf32> -> vector<8x2048xf32>
    %c0_3 = arith.constant 0 : index
    %c0_4 = arith.constant 0 : index
    %3 = vector.load %arg4[%c0_3, %c0_4] : memref<1x2560xf32, #tpu.memory_space<vmem>>, vector<1x2048xf32>
    %4 = vector.broadcast %3 : vector<1x2048xf32> to vector<8x2048xf32>
    %5 = arith.addf %2, %4 : vector<8x2048xf32>
    %cst_5 = arith.constant 0.000000e+00 : f32
    %6 = vector.broadcast %cst_5 : f32 to vector<8x2048xf32>
    %7 = arith.cmpf ogt, %5, %6 : vector<8x2048xf32>
    %cst_6 = arith.constant 2.000000e-01 : f32
    %8 = vector.broadcast %cst_6 : f32 to vector<8x2048xf32>
    %9 = arith.mulf %8, %5 : vector<8x2048xf32>
    %10 = arith.select %7, %5, %9 : vector<8x2048xi1>, vector<8x2048xf32>
    %11 = arith.truncf %10 : vector<8x2048xf32> to vector<8x2048xbf16>
    %c0_7 = arith.constant 0 : index
    %c0_8 = arith.constant 0 : index
    %12 = vector.load %arg3[%c0_7, %c0_8] : memref<2048x512xbf16, #tpu.memory_space<vmem>>, vector<2048x512xbf16>
    %cst_9 = arith.constant dense<0.000000e+00> : vector<8x512xf32>
    %13 = tpu.matmul %11, %12, %cst_9 {dimension_numbers = #tpu.dot_dimension_numbers<[1], [0], [0], [1], [0, 0, 1, 1], [], []>} : vector<8x2048xbf16>, vector<2048x512xbf16>, vector<8x512xf32> -> vector<8x512xf32>
    %c0_10 = arith.constant 0 : index
    %c2048 = arith.constant 2048 : index
    %14 = vector.load %arg4[%c0_10, %c2048] : memref<1x2560xf32, #tpu.memory_space<vmem>>, vector<1x512xf32>
    %15 = vector.broadcast %14 : vector<1x512xf32> to vector<8x512xf32>
    %16 = arith.addf %13, %15 : vector<8x512xf32>
    %c0_11 = arith.constant 0 : index
    %c0_12 = arith.constant 0 : index
    %17 = vector.load %arg5[%c0_11, %c0_12] : memref<8x512xf32, #tpu.memory_space<vmem>>, vector<8x512xf32>
    tpu.vector_store %arg5[%c0_11, %c0_12], %16 {strides = array<i32>} : memref<8x512xf32, #tpu.memory_space<vmem>>, vector<8x512xf32>,
    %cst_13 = arith.constant dense<0.000000e+00> : vector<512xf32>
    %18 = vector.multi_reduction <add>, %16, %cst_13 [0] : vector<8x512xf32> to vector<512xf32>
    %19 = vector.shape_cast %18 : vector<512xf32> to vector<1x512xf32>
    %c0_14 = arith.constant 0 : index
    %c0_15 = arith.constant 0 : index
    %c0_16 = arith.constant 0 : index
    %20 = vector.load %arg6[%c0_14, %c0_15, %c0_16] : memref<1x2x512xf32, #tpu.memory_space<vmem>>, vector<1x1x512xf32>
    %21 = vector.shape_cast %20 : vector<1x1x512xf32> to vector<1x512xf32>
    %22 = vector.shape_cast %19 : vector<1x512xf32> to vector<1x1x512xf32>
    tpu.vector_store %arg6[%c0_14, %c0_15, %c0_16], %22 {strides = array<i32>} : memref<1x2x512xf32, #tpu.memory_space<vmem>>, vector<1x1x512xf32>,
    %23 = arith.mulf %16, %16 : vector<8x512xf32>
    %cst_17 = arith.constant dense<0.000000e+00> : vector<512xf32>
    %24 = vector.multi_reduction <add>, %23, %cst_17 [0] : vector<8x512xf32> to vector<512xf32>
    %25 = vector.shape_cast %24 : vector<512xf32> to vector<1x512xf32>
    %c0_18 = arith.constant 0 : index
    %c1 = arith.constant 1 : index
    %c0_19 = arith.constant 0 : index
    %26 = vector.load %arg6[%c0_18, %c1, %c0_19] : memref<1x2x512xf32, #tpu.memory_space<vmem>>, vector<1x1x512xf32>
    %27 = vector.shape_cast %26 : vector<1x1x512xf32> to vector<1x512xf32>
    %28 = vector.shape_cast %25 : vector<1x512xf32> to vector<1x1x512xf32>
    tpu.vector_store %arg6[%c0_18, %c1, %c0_19], %28 {strides = array<i32>} : memref<1x2x512xf32, #tpu.memory_space<vmem>>, vector<1x1x512xf32>,
    return
  }
  func.func @transform_0(%arg0: i32) -> (i32, i32) {
    %c0_i32 = arith.constant 0 : i32
    %c0_i32_0 = arith.constant 0 : i32
    return %arg0, %c0_i32 : i32, i32
  }
  func.func @transform_1(%arg0: i32) -> (i32, i32) {
    %c0_i32 = arith.constant 0 : i32
    %c0_i32_0 = arith.constant 0 : i32
    %c0_i32_1 = arith.constant 0 : i32
    return %c0_i32, %c0_i32_0 : i32, i32
  }
  func.func @transform_2(%arg0: i32) -> (i32, i32) {
    %c0_i32 = arith.constant 0 : i32
    %c0_i32_0 = arith.constant 0 : i32
    %c0_i32_1 = arith.constant 0 : i32
    return %c0_i32, %c0_i32_0 : i32, i32
  }
  func.func @transform_3(%arg0: i32) -> (i32, i32) {
    %c0_i32 = arith.constant 0 : i32
    %c0_i32_0 = arith.constant 0 : i32
    %c0_i32_1 = arith.constant 0 : i32
    return %c0_i32, %c0_i32_0 : i32, i32
  }
  func.func @transform_4(%arg0: i32) -> (i32, i32) {
    %c0_i32 = arith.constant 0 : i32
    %c0_i32_0 = arith.constant 0 : i32
    return %arg0, %c0_i32 : i32, i32
  }
  func.func @transform_5(%arg0: i32) -> (i32, i32, i32) {
    %c0_i32 = arith.constant 0 : i32
    %c0_i32_0 = arith.constant 0 : i32
    %c0_i32_1 = arith.constant 0 : i32
    return %arg0, %c0_i32, %c0_i32_0 : i32, i32, i32
  }
}

module attributes {stable_mosaic.version = 11 : i64} {
  func.func @_stage2_kernel(%arg0: i32, %arg1: memref<8x512xf32, #tpu.memory_space<vmem>>, %arg2: memref<512x256xbf16, #tpu.memory_space<vmem>>, %arg3: memref<1x2304xf32, #tpu.memory_space<vmem>>, %arg4: memref<8x256xf32, #tpu.memory_space<vmem>>, %arg5: memref<1x2x256xf32, #tpu.memory_space<vmem>>) attributes {dimension_semantics = [#tpu.dimension_semantics<parallel>], iteration_bounds = array<i64: 1>, scalar_prefetch = 0 : i64, scratch_operands = 0 : i64, tpu.core_type = #tpu.core_type<tc>, window_params = [{transform_indices = @transform_0, window_bounds = array<i64: 8, 512>}, {pipeline_mode = #tpu.pipeline_mode<synchronous>, transform_indices = @transform_1, window_bounds = array<i64: 512, 256>}, {pipeline_mode = #tpu.pipeline_mode<synchronous>, transform_indices = @transform_2, window_bounds = array<i64: 1, 2304>}, {transform_indices = @transform_3, window_bounds = array<i64: 8, 256>}, {transform_indices = @transform_4, window_bounds = array<i64: 1, 2, 256>}]} {
    %c0 = arith.constant 0 : index
    %c0_0 = arith.constant 0 : index
    %0 = vector.load %arg1[%c0, %c0_0] : memref<8x512xf32, #tpu.memory_space<vmem>>, vector<8x512xf32>
    %c0_1 = arith.constant 0 : index
    %c0_2 = arith.constant 0 : index
    %1 = vector.load %arg3[%c0_1, %c0_2] : memref<1x2304xf32, #tpu.memory_space<vmem>>, vector<1x512xf32>
    %c0_3 = arith.constant 0 : index
    %c512 = arith.constant 512 : index
    %2 = vector.load %arg3[%c0_3, %c512] : memref<1x2304xf32, #tpu.memory_space<vmem>>, vector<1x512xf32>
    %c0_4 = arith.constant 0 : index
    %c1024 = arith.constant 1024 : index
    %3 = vector.load %arg3[%c0_4, %c1024] : memref<1x2304xf32, #tpu.memory_space<vmem>>, vector<1x512xf32>
    %c0_5 = arith.constant 0 : index
    %c1536 = arith.constant 1536 : index
    %4 = vector.load %arg3[%c0_5, %c1536] : memref<1x2304xf32, #tpu.memory_space<vmem>>, vector<1x512xf32>
    %c0_6 = arith.constant 0 : index
    %c2048 = arith.constant 2048 : index
    %5 = vector.load %arg3[%c0_6, %c2048] : memref<1x2304xf32, #tpu.memory_space<vmem>>, vector<1x256xf32>
    %cst = arith.constant 9.99999974E-6 : f32
    %6 = vector.broadcast %cst : f32 to vector<1x512xf32>
    %7 = arith.addf %4, %6 : vector<1x512xf32>
    %8 = math.rsqrt %7 : vector<1x512xf32>
    %9 = arith.mulf %1, %8 : vector<1x512xf32>
    %10 = vector.broadcast %3 : vector<1x512xf32> to vector<8x512xf32>
    %11 = arith.subf %0, %10 : vector<8x512xf32>
    %12 = vector.broadcast %9 : vector<1x512xf32> to vector<8x512xf32>
    %13 = arith.mulf %11, %12 : vector<8x512xf32>
    %14 = vector.broadcast %2 : vector<1x512xf32> to vector<8x512xf32>
    %15 = arith.addf %13, %14 : vector<8x512xf32>
    %cst_7 = arith.constant 0.000000e+00 : f32
    %16 = vector.broadcast %cst_7 : f32 to vector<8x512xf32>
    %17 = arith.cmpf ogt, %15, %16 : vector<8x512xf32>
    %cst_8 = arith.constant 2.000000e-01 : f32
    %18 = vector.broadcast %cst_8 : f32 to vector<8x512xf32>
    %19 = arith.mulf %18, %15 : vector<8x512xf32>
    %20 = arith.select %17, %15, %19 : vector<8x512xi1>, vector<8x512xf32>
    %21 = arith.truncf %20 : vector<8x512xf32> to vector<8x512xbf16>
    %c0_9 = arith.constant 0 : index
    %c0_10 = arith.constant 0 : index
    %22 = vector.load %arg2[%c0_9, %c0_10] : memref<512x256xbf16, #tpu.memory_space<vmem>>, vector<512x256xbf16>
    %cst_11 = arith.constant dense<0.000000e+00> : vector<8x256xf32>
    %23 = tpu.matmul %21, %22, %cst_11 {dimension_numbers = #tpu.dot_dimension_numbers<[1], [0], [0], [1], [0, 0, 1, 1], [], []>} : vector<8x512xbf16>, vector<512x256xbf16>, vector<8x256xf32> -> vector<8x256xf32>
    %24 = vector.broadcast %5 : vector<1x256xf32> to vector<8x256xf32>
    %25 = arith.addf %23, %24 : vector<8x256xf32>
    %c0_12 = arith.constant 0 : index
    %c0_13 = arith.constant 0 : index
    %26 = vector.load %arg4[%c0_12, %c0_13] : memref<8x256xf32, #tpu.memory_space<vmem>>, vector<8x256xf32>
    tpu.vector_store %arg4[%c0_12, %c0_13], %25 {strides = array<i32>} : memref<8x256xf32, #tpu.memory_space<vmem>>, vector<8x256xf32>,
    %cst_14 = arith.constant dense<0.000000e+00> : vector<256xf32>
    %27 = vector.multi_reduction <add>, %25, %cst_14 [0] : vector<8x256xf32> to vector<256xf32>
    %28 = vector.shape_cast %27 : vector<256xf32> to vector<1x256xf32>
    %c0_15 = arith.constant 0 : index
    %c0_16 = arith.constant 0 : index
    %c0_17 = arith.constant 0 : index
    %29 = vector.load %arg5[%c0_15, %c0_16, %c0_17] : memref<1x2x256xf32, #tpu.memory_space<vmem>>, vector<1x1x256xf32>
    %30 = vector.shape_cast %29 : vector<1x1x256xf32> to vector<1x256xf32>
    %31 = vector.shape_cast %28 : vector<1x256xf32> to vector<1x1x256xf32>
    tpu.vector_store %arg5[%c0_15, %c0_16, %c0_17], %31 {strides = array<i32>} : memref<1x2x256xf32, #tpu.memory_space<vmem>>, vector<1x1x256xf32>,
    %32 = arith.mulf %25, %25 : vector<8x256xf32>
    %cst_18 = arith.constant dense<0.000000e+00> : vector<256xf32>
    %33 = vector.multi_reduction <add>, %32, %cst_18 [0] : vector<8x256xf32> to vector<256xf32>
    %34 = vector.shape_cast %33 : vector<256xf32> to vector<1x256xf32>
    %c0_19 = arith.constant 0 : index
    %c1 = arith.constant 1 : index
    %c0_20 = arith.constant 0 : index
    %35 = vector.load %arg5[%c0_19, %c1, %c0_20] : memref<1x2x256xf32, #tpu.memory_space<vmem>>, vector<1x1x256xf32>
    %36 = vector.shape_cast %35 : vector<1x1x256xf32> to vector<1x256xf32>
    %37 = vector.shape_cast %34 : vector<1x256xf32> to vector<1x1x256xf32>
    tpu.vector_store %arg5[%c0_19, %c1, %c0_20], %37 {strides = array<i32>} : memref<1x2x256xf32, #tpu.memory_space<vmem>>, vector<1x1x256xf32>,
    return
  }
  func.func @transform_0(%arg0: i32) -> (i32, i32) {
    %c0_i32 = arith.constant 0 : i32
    %c0_i32_0 = arith.constant 0 : i32
    return %arg0, %c0_i32 : i32, i32
  }
  func.func @transform_1(%arg0: i32) -> (i32, i32) {
    %c0_i32 = arith.constant 0 : i32
    %c0_i32_0 = arith.constant 0 : i32
    %c0_i32_1 = arith.constant 0 : i32
    return %c0_i32, %c0_i32_0 : i32, i32
  }
  func.func @transform_2(%arg0: i32) -> (i32, i32) {
    %c0_i32 = arith.constant 0 : i32
    %c0_i32_0 = arith.constant 0 : i32
    %c0_i32_1 = arith.constant 0 : i32
    return %c0_i32, %c0_i32_0 : i32, i32
  }
  func.func @transform_3(%arg0: i32) -> (i32, i32) {
    %c0_i32 = arith.constant 0 : i32
    %c0_i32_0 = arith.constant 0 : i32
    return %arg0, %c0_i32 : i32, i32
  }
  func.func @transform_4(%arg0: i32) -> (i32, i32, i32) {
    %c0_i32 = arith.constant 0 : i32
    %c0_i32_0 = arith.constant 0 : i32
    %c0_i32_1 = arith.constant 0 : i32
    return %arg0, %c0_i32, %c0_i32_0 : i32, i32, i32
  }
}

module attributes {stable_mosaic.version = 11 : i64} {
  func.func @_stage3_kernel(%arg0: i32, %arg1: memref<8x256xf32, #tpu.memory_space<vmem>>, %arg2: memref<256x128xbf16, #tpu.memory_space<vmem>>, %arg3: memref<1x1152xf32, #tpu.memory_space<vmem>>, %arg4: memref<8x128xf32, #tpu.memory_space<vmem>>) attributes {dimension_semantics = [#tpu.dimension_semantics<parallel>], iteration_bounds = array<i64: 1>, scalar_prefetch = 0 : i64, scratch_operands = 0 : i64, tpu.core_type = #tpu.core_type<tc>, window_params = [{transform_indices = @transform_0, window_bounds = array<i64: 8, 256>}, {pipeline_mode = #tpu.pipeline_mode<synchronous>, transform_indices = @transform_1, window_bounds = array<i64: 256, 128>}, {pipeline_mode = #tpu.pipeline_mode<synchronous>, transform_indices = @transform_2, window_bounds = array<i64: 1, 1152>}, {transform_indices = @transform_3, window_bounds = array<i64: 8, 128>}]} {
    %c0 = arith.constant 0 : index
    %c0_0 = arith.constant 0 : index
    %0 = vector.load %arg1[%c0, %c0_0] : memref<8x256xf32, #tpu.memory_space<vmem>>, vector<8x256xf32>
    %c0_1 = arith.constant 0 : index
    %c0_2 = arith.constant 0 : index
    %1 = vector.load %arg3[%c0_1, %c0_2] : memref<1x1152xf32, #tpu.memory_space<vmem>>, vector<1x256xf32>
    %c0_3 = arith.constant 0 : index
    %c256 = arith.constant 256 : index
    %2 = vector.load %arg3[%c0_3, %c256] : memref<1x1152xf32, #tpu.memory_space<vmem>>, vector<1x256xf32>
    %c0_4 = arith.constant 0 : index
    %c512 = arith.constant 512 : index
    %3 = vector.load %arg3[%c0_4, %c512] : memref<1x1152xf32, #tpu.memory_space<vmem>>, vector<1x256xf32>
    %c0_5 = arith.constant 0 : index
    %c768 = arith.constant 768 : index
    %4 = vector.load %arg3[%c0_5, %c768] : memref<1x1152xf32, #tpu.memory_space<vmem>>, vector<1x256xf32>
    %c0_6 = arith.constant 0 : index
    %c1024 = arith.constant 1024 : index
    %5 = vector.load %arg3[%c0_6, %c1024] : memref<1x1152xf32, #tpu.memory_space<vmem>>, vector<1x128xf32>
    %cst = arith.constant 9.99999974E-6 : f32
    %6 = vector.broadcast %cst : f32 to vector<1x256xf32>
    %7 = arith.addf %4, %6 : vector<1x256xf32>
    %8 = math.rsqrt %7 : vector<1x256xf32>
    %9 = arith.mulf %1, %8 : vector<1x256xf32>
    %10 = vector.broadcast %3 : vector<1x256xf32> to vector<8x256xf32>
    %11 = arith.subf %0, %10 : vector<8x256xf32>
    %12 = vector.broadcast %9 : vector<1x256xf32> to vector<8x256xf32>
    %13 = arith.mulf %11, %12 : vector<8x256xf32>
    %14 = vector.broadcast %2 : vector<1x256xf32> to vector<8x256xf32>
    %15 = arith.addf %13, %14 : vector<8x256xf32>
    %cst_7 = arith.constant 0.000000e+00 : f32
    %16 = vector.broadcast %cst_7 : f32 to vector<8x256xf32>
    %17 = arith.cmpf ogt, %15, %16 : vector<8x256xf32>
    %cst_8 = arith.constant 2.000000e-01 : f32
    %18 = vector.broadcast %cst_8 : f32 to vector<8x256xf32>
    %19 = arith.mulf %18, %15 : vector<8x256xf32>
    %20 = arith.select %17, %15, %19 : vector<8x256xi1>, vector<8x256xf32>
    %21 = arith.truncf %20 : vector<8x256xf32> to vector<8x256xbf16>
    %c0_9 = arith.constant 0 : index
    %c0_10 = arith.constant 0 : index
    %22 = vector.load %arg2[%c0_9, %c0_10] : memref<256x128xbf16, #tpu.memory_space<vmem>>, vector<256x128xbf16>
    %cst_11 = arith.constant dense<0.000000e+00> : vector<8x128xf32>
    %23 = tpu.matmul %21, %22, %cst_11 {dimension_numbers = #tpu.dot_dimension_numbers<[1], [0], [0], [1], [0, 0, 1, 1], [], []>} : vector<8x256xbf16>, vector<256x128xbf16>, vector<8x128xf32> -> vector<8x128xf32>
    %24 = vector.broadcast %5 : vector<1x128xf32> to vector<8x128xf32>
    %25 = arith.addf %23, %24 : vector<8x128xf32>
    %26 = arith.negf %25 : vector<8x128xf32>
    %27 = math.exp %26 : vector<8x128xf32>
    %cst_12 = arith.constant 1.000000e+00 : f32
    %28 = vector.broadcast %cst_12 : f32 to vector<8x128xf32>
    %29 = arith.addf %28, %27 : vector<8x128xf32>
    %30 = arith.divf %28, %29 : vector<8x128xf32>
    %c0_13 = arith.constant 0 : index
    %c0_14 = arith.constant 0 : index
    %31 = vector.load %arg4[%c0_13, %c0_14] : memref<8x128xf32, #tpu.memory_space<vmem>>, vector<8x128xf32>
    tpu.vector_store %arg4[%c0_13, %c0_14], %30 {strides = array<i32>} : memref<8x128xf32, #tpu.memory_space<vmem>>, vector<8x128xf32>,
    return
  }
  func.func @transform_0(%arg0: i32) -> (i32, i32) {
    %c0_i32 = arith.constant 0 : i32
    %c0_i32_0 = arith.constant 0 : i32
    return %arg0, %c0_i32 : i32, i32
  }
  func.func @transform_1(%arg0: i32) -> (i32, i32) {
    %c0_i32 = arith.constant 0 : i32
    %c0_i32_0 = arith.constant 0 : i32
    %c0_i32_1 = arith.constant 0 : i32
    return %c0_i32, %c0_i32_0 : i32, i32
  }
  func.func @transform_2(%arg0: i32) -> (i32, i32) {
    %c0_i32 = arith.constant 0 : i32
    %c0_i32_0 = arith.constant 0 : i32
    %c0_i32_1 = arith.constant 0 : i32
    return %c0_i32, %c0_i32_0 : i32, i32
  }
  func.func @transform_3(%arg0: i32) -> (i32, i32) {
    %c0_i32 = arith.constant 0 : i32
    %c0_i32_0 = arith.constant 0 : i32
    return %arg0, %c0_i32 : i32, i32
  }
}

</mosaic_0001>

<llo_original>
// kernel: custom-call.1
$region0: #{custom-call.1}
  %s0 = inlined_call_operand.vmem [shape: f32[2304], index: 0, kind: output, shape index: {}]

// kernel: custom-call
$region0: #{custom-call}
  %s0 = inlined_call_operand.vmem [shape: f32[1152], index: 0, kind: output, shape index: {}]

// kernel: _lambda_.5
$region0: #{_lambda_.5}
  #allocation0 [shape = 'u32[]', space=smem, size = 0x4, offset = 0x4, fixed_abs, tag = 'smem constant byte address 0x4 - core index']
  #allocation1 [shape = 'u32[144,128]{1,0:T(1,128)}', space=vmem, size = 0x12000, scoped, tag = 'internal scratch']
  %s0 = inlined_call_operand.vmem [shape: f32[8,256], index: 0, kind: input, shape index: {}]
  %s1 = inlined_call_operand.vmem [shape: bf16[256,128], index: 1, kind: input, shape index: {}]
  %s2 = inlined_call_operand.vmem [shape: f32[1,1152], index: 2, kind: input, shape index: {}]
  %s3 = inlined_call_operand.vmem [shape: f32[8,128], index: 3, kind: output, shape index: {}]
  %s4 = sld [smem:[#allocation0]]
  $region22: #{_lambda_.5} parent=0
    _
  %s6 = ssub.s32 1, %s4
  %s7 = scalar_select 0, %s6, %s4
  // Predicated region
  $region2: #{_lambda_.5} parent=0 // pred_check
    _
  $region3: #{_lambda_.5} parent=0 // pred_check_branch
    %9 = sbr.rel (0) target = $region5
  $region4: #{_lambda_.5} parent=0 // pred_region
    _
  $region5: #{_lambda_.5} parent=0 // pred_fallthru
    _
  // Predicated region
  $region6: #{_lambda_.5} parent=0 // pred_check
    _
  $region7: #{_lambda_.5} parent=0 // pred_check_branch
    %11 = sbr.rel (0) target = $region9
  $region8: #{_lambda_.5} parent=0 // pred_region
    _
  $region9: #{_lambda_.5} parent=0 // pred_fallthru
    _
  // Predicated region
  $region10: #{_lambda_.5} parent=0 // pred_check
    _
  $region11: #{_lambda_.5} parent=0 // pred_check_branch
    %13 = sbr.rel (0) target = $region13
  $region12: #{_lambda_.5} parent=0 // pred_region
    _
  $region13: #{_lambda_.5} parent=0 // pred_fallthru
    _
  %v15 = vld [vmem:[%s0] sm:$0xff]
  %v16 = vld [vmem:[%s0 + $0x8] sm:$0xff]
  %v17 = vld [vmem:[%s2] sm:$0x3]
  %v18 = vld [vmem:[%s2 + $0x2] sm:$0x3]
  %v19 = vld [vmem:[%s2 + $0x4] sm:$0x3]
  %v20 = vld [vmem:[%s2 + $0x6] sm:$0x3]
  %v21 = vld [vmem:[%s2 + $0x8] sm:$0x1]
  %v22 = vadd.f32 %v20, 1e-05
  %v23 = vrsqrt.pop %v22
  %v24 = vmul.f32 %v17, %v23
  %v26 = vlaneseq
  %v27 = vshrl.u32 %v26, 7
  %v28 = vsub.s32 0, %v27
  %v29 = vrot.slane %v19, %v28
  %v30 = vlaneseq
  %v31 = vshrl.u32 %v30, 7
  %v32 = vsub.s32 1, %v31
  %v33 = vrot.slane %v19, %v32
  %v36 = vsub.f32 %v15, %v29
  %v37 = vsub.f32 %v16, %v33
  %v39 = vlaneseq
  %v40 = vshrl.u32 %v39, 7
  %v41 = vsub.s32 0, %v40
  %v42 = vrot.slane %v24, %v41
  %v43 = vlaneseq
  %v44 = vshrl.u32 %v43, 7
  %v45 = vsub.s32 1, %v44
  %v46 = vrot.slane %v24, %v45
  %v49 = vmul.f32 %v36, %v42
  %v50 = vmul.f32 %v37, %v46
  %v52 = vlaneseq
  %v53 = vshrl.u32 %v52, 7
  %v54 = vsub.s32 0, %v53
  %v55 = vrot.slane %v18, %v54
  %v56 = vlaneseq
  %v57 = vshrl.u32 %v56, 7
  %v58 = vsub.s32 1, %v57
  %v59 = vrot.slane %v18, %v58
  %v62 = vadd.f32 %v49, %v55
  %v63 = vadd.f32 %v50, %v59
  %vm64 = vcmp.gt.f32.partialorder %v62, 0.0
  %vm65 = vcmp.gt.f32.partialorder %v63, 0.0
  %v66 = vmul.f32 %v62, 0.2
  %v67 = vmul.f32 %v63, 0.2
  %v68 = vsel %vm64, %v62, %v66
  %v69 = vsel %vm65, %v63, %v67
  %v70 = vpack.c.bf16 %v68, %v68
  %v71 = vpack.c.bf16 %v69, %v69
  %v72 = vld [vmem:[%s1] sm:$0xf]
  %v73 = vld [vmem:[%s1 + $0x4] sm:$0xf]
  %v74 = vld [vmem:[%s1 + $0x8] sm:$0xf]
  %v75 = vld [vmem:[%s1 + $0xc] sm:$0xf]
  %v76 = vld [vmem:[%s1 + $0x10] sm:$0xf]
  %v77 = vld [vmem:[%s1 + $0x14] sm:$0xf]
  %v78 = vld [vmem:[%s1 + $0x18] sm:$0xf]
  %v79 = vld [vmem:[%s1 + $0x1c] sm:$0xf]
  %v80 = vld [vmem:[%s1 + $0x20] sm:$0xf]
  %v81 = vld [vmem:[%s1 + $0x24] sm:$0xf]
  %v82 = vld [vmem:[%s1 + $0x28] sm:$0xf]
  %v83 = vld [vmem:[%s1 + $0x2c] sm:$0xf]
  %v84 = vld [vmem:[%s1 + $0x30] sm:$0xf]
  %v85 = vld [vmem:[%s1 + $0x34] sm:$0xf]
  %v86 = vld [vmem:[%s1 + $0x38] sm:$0xf]
  %v87 = vld [vmem:[%s1 + $0x3c] sm:$0xf]
  %v88 = vld [vmem:[%s1 + $0x40] sm:$0xf]
  %v89 = vld [vmem:[%s1 + $0x44] sm:$0xf]
  %v90 = vld [vmem:[%s1 + $0x48] sm:$0xf]
  %v91 = vld [vmem:[%s1 + $0x4c] sm:$0xf]
  %v92 = vld [vmem:[%s1 + $0x50] sm:$0xf]
  %v93 = vld [vmem:[%s1 + $0x54] sm:$0xf]
  %v94 = vld [vmem:[%s1 + $0x58] sm:$0xf]
  %v95 = vld [vmem:[%s1 + $0x5c] sm:$0xf]
  %v96 = vld [vmem:[%s1 + $0x60] sm:$0xf]
  %v97 = vld [vmem:[%s1 + $0x64] sm:$0xf]
  %v98 = vld [vmem:[%s1 + $0x68] sm:$0xf]
  %v99 = vld [vmem:[%s1 + $0x6c] sm:$0xf]
  %v100 = vld [vmem:[%s1 + $0x70] sm:$0xf]
  %v101 = vld [vmem:[%s1 + $0x74] sm:$0xf]
  %v102 = vld [vmem:[%s1 + $0x78] sm:$0xf]
  %v103 = vld [vmem:[%s1 + $0x7c] sm:$0xf]
  %v105 = vlaneseq
  %v106 = vshrl.u32 %v105, 7
  %v107 = vsub.s32 0, %v106
  %v108 = vrot.slane %v21, %v107
  %v142 = vunpack.c.l.b16 %v72
  %v143 = vunpack.c.l.b16 %v73
  %v144 = vunpack.c.l.b16 %v74
  %v145 = vunpack.c.l.b16 %v75
  %v146 = vunpack.c.l.b16 %v76
  %v147 = vunpack.c.l.b16 %v77
  %v148 = vunpack.c.l.b16 %v78
  %v149 = vunpack.c.l.b16 %v79
  %v150 = vunpack.c.l.b16 %v80
  %v151 = vunpack.c.l.b16 %v81
  %v152 = vunpack.c.l.b16 %v82
  %v153 = vunpack.c.l.b16 %v83
  %v154 = vunpack.c.l.b16 %v84
  %v155 = vunpack.c.l.b16 %v85
  %v156 = vunpack.c.l.b16 %v86
  %v157 = vunpack.c.l.b16 %v87
  %v158 = vunpack.c.l.b16 %v88
  %v159 = vunpack.c.l.b16 %v89
  %v160 = vunpack.c.l.b16 %v90
  %v161 = vunpack.c.l.b16 %v91
  %v162 = vunpack.c.l.b16 %v92
  %v163 = vunpack.c.l.b16 %v93
  %v164 = vunpack.c.l.b16 %v94
  %v165 = vunpack.c.l.b16 %v95
  %v166 = vunpack.c.l.b16 %v96
  %v167 = vunpack.c.l.b16 %v97
  %v168 = vunpack.c.l.b16 %v98
  %v169 = vunpack.c.l.b16 %v99
  %v170 = vunpack.c.l.b16 %v100
  %v171 = vunpack.c.l.b16 %v101
  %v172 = vunpack.c.l.b16 %v102
  %v173 = vunpack.c.l.b16 %v103
  %v174 = vpack.c.b16 %v143, %v142
  %v175 = vpack.c.b16 %v145, %v144
  %v176 = vpack.c.b16 %v147, %v146
  %v177 = vpack.c.b16 %v149, %v148
  %v178 = vpack.c.b16 %v151, %v150
  %v179 = vpack.c.b16 %v153, %v152
  %v180 = vpack.c.b16 %v155, %v154
  %v181 = vpack.c.b16 %v157, %v156
  %v182 = vpack.c.b16 %v159, %v158
  %v183 = vpack.c.b16 %v161, %v160
  %v184 = vpack.c.b16 %v163, %v162
  %v185 = vpack.c.b16 %v165, %v164
  %v186 = vpack.c.b16 %v167, %v166
  %v187 = vpack.c.b16 %v169, %v168
  %v188 = vpack.c.b16 %v171, %v170
  %v189 = vpack.c.b16 %v173, %v172
  %206 = vmatprep.subr.bf16.mxu0 0
  %207 = vmatpush1.bf16.msra.mxu0 %v181
  %208 = vmatprep.subr.bf16.mxu0 0
  %209 = vmatpush1.bf16.msra.mxu0 %v180
  %210 = vmatprep.subr.bf16.mxu0 0
  %211 = vmatpush1.bf16.msra.mxu0 %v179
  %212 = vmatprep.subr.bf16.mxu0 0
  %213 = vmatpush1.bf16.msra.mxu0 %v178
  %214 = vmatprep.subr.bf16.mxu0 0
  %215 = vmatpush1.bf16.msra.mxu0 %v177
  %216 = vmatprep.subr.bf16.mxu0 0
  %217 = vmatpush1.bf16.msra.mxu0 %v176
  %218 = vmatprep.subr.bf16.mxu0 0
  %219 = vmatpush1.bf16.msra.mxu0 %v175
  %220 = vmatprep.subr.bf16.mxu0 0
  %221 = vmatpush1.bf16.msra.mxu0 %v174
  %222 = vmatprep.subr.bf16.mxu0 0
  %223 = vmatpush2.bf16.msra.mxu0 %v189
  %224 = vmatprep.subr.bf16.mxu0 0
  %225 = vmatpush2.bf16.msra.mxu0 %v188
  %226 = vmatprep.subr.bf16.mxu0 0
  %227 = vmatpush2.bf16.msra.mxu0 %v187
  %228 = vmatprep.subr.bf16.mxu0 0
  %229 = vmatpush2.bf16.msra.mxu0 %v186
  %230 = vmatprep.subr.bf16.mxu0 0
  %231 = vmatpush2.bf16.msra.mxu0 %v185
  %232 = vmatprep.subr.bf16.mxu0 0
  %233 = vmatpush2.bf16.msra.mxu0 %v184
  %234 = vmatprep.subr.bf16.mxu0 0
  %235 = vmatpush2.bf16.msra.mxu0 %v183
  %236 = vmatprep.subr.bf16.mxu0 0
  %237 = vmatpush2.bf16.msra.mxu0 %v182
  %238 = vmatprep.mubr.bf16.mxu0 %v71
  %239 = vmatmul.mubr.bf16.gmra.mxu0 %v70
  %v240 = vpop.f32.mrf.mxu0
  %v241 = vadd.f32 %v108, %v240
  %v242 = vpop.f32.mrf.mxu0
  %v243 = vpop.f32.mrf.mxu0
  %v244 = vpop.f32.mrf.mxu0
  %245 = vdwg.mxu0
  %v246 = vxor.u32 %v241, 2147483648
  %v247 = vmul.f32 %v246, 1.442695
  %v248 = vpow.pop %v247
  %v249 = vadd.f32 %v248, 1.0
  %v250 = vrcp.pop %v249
  %v251 = vmul.f32 1.0, %v250
  %252 = vst [vmem:[%s3] sm:$0xff] %v251
  // Predicated region
  $region14: #{_lambda_.5} parent=0 // pred_check
    _
  $region15: #{_lambda_.5} parent=0 // pred_check_branch
    %254 = sbr.rel (0) target = $region17
  $region16: #{_lambda_.5} parent=0 // pred_region
    _
  $region17: #{_lambda_.5} parent=0 // pred_fallthru
    _
  // Predicated region
  $region18: #{_lambda_.5} parent=0 // pred_check
    _
  $region19: #{_lambda_.5} parent=0 // pred_check_branch
    %256 = sbr.rel (0) target = $region21
  $region20: #{_lambda_.5} parent=0 // pred_region
    _
  $region21: #{_lambda_.5} parent=0 // pred_fallthru
    _

// kernel: _lambda_.4
$region0: #{_lambda_.4}
  #allocation0 [shape = 'u32[]', space=smem, size = 0x4, offset = 0x4, fixed_abs, tag = 'smem constant byte address 0x4 - core index']
  #allocation1 [shape = 'u32[144,128]{1,0:T(1,128)}', space=vmem, size = 0x12000, scoped, tag = 'internal scratch']
  %s0 = inlined_call_operand.vmem [shape: f32[8,512], index: 0, kind: input, shape index: {}]
  %s1 = inlined_call_operand.vmem [shape: bf16[512,256], index: 1, kind: input, shape index: {}]
  %s2 = inlined_call_operand.vmem [shape: f32[1,2304], index: 2, kind: input, shape index: {}]
  %s3 = inlined_call_operand.vmem [shape: f32[8,256], index: 3, kind: output, shape index: {0}]
  %s4 = inlined_call_operand.vmem [shape: f32[1,2,256], index: 4, kind: output, shape index: {1}]
  %5 = xla_tuple %s3, %s4
  %s6 = sld [smem:[#allocation0]]
  $region30: #{_lambda_.4} parent=0
    _
  %s8 = ssub.s32 1, %s6
  %s9 = scalar_select 0, %s8, %s6
  // Predicated region
  $region2: #{_lambda_.4} parent=0 // pred_check
    _
  $region3: #{_lambda_.4} parent=0 // pred_check_branch
    %11 = sbr.rel (0) target = $region5
  $region4: #{_lambda_.4} parent=0 // pred_region
    _
  $region5: #{_lambda_.4} parent=0 // pred_fallthru
    _
  // Predicated region
  $region6: #{_lambda_.4} parent=0 // pred_check
    _
  $region7: #{_lambda_.4} parent=0 // pred_check_branch
    %13 = sbr.rel (0) target = $region9
  $region8: #{_lambda_.4} parent=0 // pred_region
    _
  $region9: #{_lambda_.4} parent=0 // pred_fallthru
    _
  // Predicated region
  $region10: #{_lambda_.4} parent=0 // pred_check
    _
  $region11: #{_lambda_.4} parent=0 // pred_check_branch
    %15 = sbr.rel (0) target = $region13
  $region12: #{_lambda_.4} parent=0 // pred_region
    _
  $region13: #{_lambda_.4} parent=0 // pred_fallthru
    _
  %v16 = vld [vmem:[%s0] sm:$0xff]
  %v17 = vld [vmem:[%s0 + $0x8] sm:$0xff]
  %v18 = vld [vmem:[%s0 + $0x10] sm:$0xff]
  %v19 = vld [vmem:[%s0 + $0x18] sm:$0xff]
  %v20 = vld [vmem:[%s2] sm:$0xf]
  %v21 = vld [vmem:[%s2 + $0x4] sm:$0xf]
  %v22 = vld [vmem:[%s2 + $0x8] sm:$0xf]
  %v23 = vld [vmem:[%s2 + $0xc] sm:$0xf]
  %v24 = vld [vmem:[%s2 + $0x10] sm:$0x3]
  %v25 = vadd.f32 %v23, 1e-05
  %v26 = vrsqrt.pop %v25
  %v27 = vmul.f32 %v20, %v26
  %v29 = vlaneseq
  %v30 = vshrl.u32 %v29, 7
  %v31 = vsub.s32 0, %v30
  %v32 = vrot.slane %v22, %v31
  %v33 = vlaneseq
  %v34 = vshrl.u32 %v33, 7
  %v35 = vsub.s32 1, %v34
  %v36 = vrot.slane %v22, %v35
  %v37 = vlaneseq
  %v38 = vshrl.u32 %v37, 7
  %v39 = vsub.s32 2, %v38
  %v40 = vrot.slane %v22, %v39
  %v41 = vlaneseq
  %v42 = vshrl.u32 %v41, 7
  %v43 = vsub.s32 3, %v42
  %v44 = vrot.slane %v22, %v43
  %v49 = vsub.f32 %v16, %v32
  %v50 = vsub.f32 %v17, %v36
  %v51 = vsub.f32 %v18, %v40
  %v52 = vsub.f32 %v19, %v44
  %v54 = vlaneseq
  %v55 = vshrl.u32 %v54, 7
  %v56 = vsub.s32 0, %v55
  %v57 = vrot.slane %v27, %v56
  %v58 = vlaneseq
  %v59 = vshrl.u32 %v58, 7
  %v60 = vsub.s32 1, %v59
  %v61 = vrot.slane %v27, %v60
  %v62 = vlaneseq
  %v63 = vshrl.u32 %v62, 7
  %v64 = vsub.s32 2, %v63
  %v65 = vrot.slane %v27, %v64
  %v66 = vlaneseq
  %v67 = vshrl.u32 %v66, 7
  %v68 = vsub.s32 3, %v67
  %v69 = vrot.slane %v27, %v68
  %v74 = vmul.f32 %v49, %v57
  %v75 = vmul.f32 %v50, %v61
  %v76 = vmul.f32 %v51, %v65
  %v77 = vmul.f32 %v52, %v69
  %v79 = vlaneseq
  %v80 = vshrl.u32 %v79, 7
  %v81 = vsub.s32 0, %v80
  %v82 = vrot.slane %v21, %v81
  %v83 = vlaneseq
  %v84 = vshrl.u32 %v83, 7
  %v85 = vsub.s32 1, %v84
  %v86 = vrot.slane %v21, %v85
  %v87 = vlaneseq
  %v88 = vshrl.u32 %v87, 7
  %v89 = vsub.s32 2, %v88
  %v90 = vrot.slane %v21, %v89
  %v91 = vlaneseq
  %v92 = vshrl.u32 %v91, 7
  %v93 = vsub.s32 3, %v92
  %v94 = vrot.slane %v21, %v93
  %v99 = vadd.f32 %v74, %v82
  %v100 = vadd.f32 %v75, %v86
  %v101 = vadd.f32 %v76, %v90
  %v102 = vadd.f32 %v77, %v94
  %vm103 = vcmp.gt.f32.partialorder %v99, 0.0
  %vm104 = vcmp.gt.f32.partialorder %v100, 0.0
  %vm105 = vcmp.gt.f32.partialorder %v101, 0.0
  %vm106 = vcmp.gt.f32.partialorder %v102, 0.0
  %v107 = vmul.f32 %v99, 0.2
  %v108 = vmul.f32 %v100, 0.2
  %v109 = vmul.f32 %v101, 0.2
  %v110 = vmul.f32 %v102, 0.2
  %v111 = vsel %vm103, %v99, %v107
  %v112 = vsel %vm104, %v100, %v108
  %v113 = vsel %vm105, %v101, %v109
  %v114 = vsel %vm106, %v102, %v110
  %v115 = vpack.c.bf16 %v111, %v111
  %v116 = vpack.c.bf16 %v112, %v112
  %v117 = vpack.c.bf16 %v113, %v113
  %v118 = vpack.c.bf16 %v114, %v114
  %v119 = vld [vmem:[%s1] sm:$0xff]
  %v120 = vld [vmem:[%s1 + $0x8] sm:$0xff]
  %v121 = vld [vmem:[%s1 + $0x10] sm:$0xff]
  %v122 = vld [vmem:[%s1 + $0x18] sm:$0xff]
  %v123 = vld [vmem:[%s1 + $0x20] sm:$0xff]
  %v124 = vld [vmem:[%s1 + $0x28] sm:$0xff]
  %v125 = vld [vmem:[%s1 + $0x30] sm:$0xff]
  %v126 = vld [vmem:[%s1 + $0x38] sm:$0xff]
  %v127 = vld [vmem:[%s1 + $0x40] sm:$0xff]
  %v128 = vld [vmem:[%s1 + $0x48] sm:$0xff]
  %v129 = vld [vmem:[%s1 + $0x50] sm:$0xff]
  %v130 = vld [vmem:[%s1 + $0x58] sm:$0xff]
  %v131 = vld [vmem:[%s1 + $0x60] sm:$0xff]
  %v132 = vld [vmem:[%s1 + $0x68] sm:$0xff]
  %v133 = vld [vmem:[%s1 + $0x70] sm:$0xff]
  %v134 = vld [vmem:[%s1 + $0x78] sm:$0xff]
  %v135 = vld [vmem:[%s1 + $0x80] sm:$0xff]
  %v136 = vld [vmem:[%s1 + $0x88] sm:$0xff]
  %v137 = vld [vmem:[%s1 + $0x90] sm:$0xff]
  %v138 = vld [vmem:[%s1 + $0x98] sm:$0xff]
  %v139 = vld [vmem:[%s1 + $0xa0] sm:$0xff]
  %v140 = vld [vmem:[%s1 + $0xa8] sm:$0xff]
  %v141 = vld [vmem:[%s1 + $0xb0] sm:$0xff]
  %v142 = vld [vmem:[%s1 + $0xb8] sm:$0xff]
  %v143 = vld [vmem:[%s1 + $0xc0] sm:$0xff]
  %v144 = vld [vmem:[%s1 + $0xc8] sm:$0xff]
  %v145 = vld [vmem:[%s1 + $0xd0] sm:$0xff]
  %v146 = vld [vmem:[%s1 + $0xd8] sm:$0xff]
  %v147 = vld [vmem:[%s1 + $0xe0] sm:$0xff]
  %v148 = vld [vmem:[%s1 + $0xe8] sm:$0xff]
  %v149 = vld [vmem:[%s1 + $0xf0] sm:$0xff]
  %v150 = vld [vmem:[%s1 + $0xf8] sm:$0xff]
  %v151 = vld [vmem:[%s1 + $0x100] sm:$0xff]
  %v152 = vld [vmem:[%s1 + $0x108] sm:$0xff]
  %v153 = vld [vmem:[%s1 + $0x110] sm:$0xff]
  %v154 = vld [vmem:[%s1 + $0x118] sm:$0xff]
  %v155 = vld [vmem:[%s1 + $0x120] sm:$0xff]
  %v156 = vld [vmem:[%s1 + $0x128] sm:$0xff]
  %v157 = vld [vmem:[%s1 + $0x130] sm:$0xff]
  %v158 = vld [vmem:[%s1 + $0x138] sm:$0xff]
  %v159 = vld [vmem:[%s1 + $0x140] sm:$0xff]
  %v160 = vld [vmem:[%s1 + $0x148] sm:$0xff]
  %v161 = vld [vmem:[%s1 + $0x150] sm:$0xff]
  %v162 = vld [vmem:[%s1 + $0x158] sm:$0xff]
  %v163 = vld [vmem:[%s1 + $0x160] sm:$0xff]
  %v164 = vld [vmem:[%s1 + $0x168] sm:$0xff]
  %v165 = vld [vmem:[%s1 + $0x170] sm:$0xff]
  %v166 = vld [vmem:[%s1 + $0x178] sm:$0xff]
  %v167 = vld [vmem:[%s1 + $0x180] sm:$0xff]
  %v168 = vld [vmem:[%s1 + $0x188] sm:$0xff]
  %v169 = vld [vmem:[%s1 + $0x190] sm:$0xff]
  %v170 = vld [vmem:[%s1 + $0x198] sm:$0xff]
  %v171 = vld [vmem:[%s1 + $0x1a0] sm:$0xff]
  %v172 = vld [vmem:[%s1 + $0x1a8] sm:$0xff]
  %v173 = vld [vmem:[%s1 + $0x1b0] sm:$0xff]
  %v174 = vld [vmem:[%s1 + $0x1b8] sm:$0xff]
  %v175 = vld [vmem:[%s1 + $0x1c0] sm:$0xff]
  %v176 = vld [vmem:[%s1 + $0x1c8] sm:$0xff]
  %v177 = vld [vmem:[%s1 + $0x1d0] sm:$0xff]
  %v178 = vld [vmem:[%s1 + $0x1d8] sm:$0xff]
  %v179 = vld [vmem:[%s1 + $0x1e0] sm:$0xff]
  %v180 = vld [vmem:[%s1 + $0x1e8] sm:$0xff]
  %v181 = vld [vmem:[%s1 + $0x1f0] sm:$0xff]
  %v182 = vld [vmem:[%s1 + $0x1f8] sm:$0xff]
  %v184 = vlaneseq
  %v185 = vshrl.u32 %v184, 7
  %v186 = vsub.s32 0, %v185
  %v187 = vrot.slane %v24, %v186
  %v188 = vlaneseq
  %v189 = vshrl.u32 %v188, 7
  %v190 = vsub.s32 1, %v189
  %v191 = vrot.slane %v24, %v190
  %v258 = vunpack.c.l.b16 %v119
  %v259 = vunpack.c.h.b16 %v119
  %v260 = vunpack.c.l.b16 %v120
  %v261 = vunpack.c.h.b16 %v120
  %v262 = vunpack.c.l.b16 %v121
  %v263 = vunpack.c.h.b16 %v121
  %v264 = vunpack.c.l.b16 %v122
  %v265 = vunpack.c.h.b16 %v122
  %v266 = vunpack.c.l.b16 %v123
  %v267 = vunpack.c.h.b16 %v123
  %v268 = vunpack.c.l.b16 %v124
  %v269 = vunpack.c.h.b16 %v124
  %v270 = vunpack.c.l.b16 %v125
  %v271 = vunpack.c.h.b16 %v125
  %v272 = vunpack.c.l.b16 %v126
  %v273 = vunpack.c.h.b16 %v126
  %v274 = vunpack.c.l.b16 %v127
  %v275 = vunpack.c.h.b16 %v127
  %v276 = vunpack.c.l.b16 %v128
  %v277 = vunpack.c.h.b16 %v128
  %v278 = vunpack.c.l.b16 %v129
  %v279 = vunpack.c.h.b16 %v129
  %v280 = vunpack.c.l.b16 %v130
  %v281 = vunpack.c.h.b16 %v130
  %v282 = vunpack.c.l.b16 %v131
  %v283 = vunpack.c.h.b16 %v131
  %v284 = vunpack.c.l.b16 %v132
  %v285 = vunpack.c.h.b16 %v132
  %v286 = vunpack.c.l.b16 %v133
  %v287 = vunpack.c.h.b16 %v133
  %v288 = vunpack.c.l.b16 %v134
  %v289 = vunpack.c.h.b16 %v134
  %v290 = vunpack.c.l.b16 %v135
  %v291 = vunpack.c.h.b16 %v135
  %v292 = vunpack.c.l.b16 %v136
  %v293 = vunpack.c.h.b16 %v136
  %v294 = vunpack.c.l.b16 %v137
  %v295 = vunpack.c.h.b16 %v137
  %v296 = vunpack.c.l.b16 %v138
  %v297 = vunpack.c.h.b16 %v138
  %v298 = vunpack.c.l.b16 %v139
  %v299 = vunpack.c.h.b16 %v139
  %v300 = vunpack.c.l.b16 %v140
  %v301 = vunpack.c.h.b16 %v140
  %v302 = vunpack.c.l.b16 %v141
  %v303 = vunpack.c.h.b16 %v141
  %v304 = vunpack.c.l.b16 %v142
  %v305 = vunpack.c.h.b16 %v142
  %v306 = vunpack.c.l.b16 %v143
  %v307 = vunpack.c.h.b16 %v143
  %v308 = vunpack.c.l.b16 %v144
  %v309 = vunpack.c.h.b16 %v144
  %v310 = vunpack.c.l.b16 %v145
  %v311 = vunpack.c.h.b16 %v145
  %v312 = vunpack.c.l.b16 %v146
  %v313 = vunpack.c.h.b16 %v146
  %v314 = vunpack.c.l.b16 %v147
  %v315 = vunpack.c.h.b16 %v147
  %v316 = vunpack.c.l.b16 %v148
  %v317 = vunpack.c.h.b16 %v148
  %v318 = vunpack.c.l.b16 %v149
  %v319 = vunpack.c.h.b16 %v149
  %v320 = vunpack.c.l.b16 %v150
  %v321 = vunpack.c.h.b16 %v150
  %v322 = vunpack.c.l.b16 %v151
  %v323 = vunpack.c.h.b16 %v151
  %v324 = vunpack.c.l.b16 %v152
  %v325 = vunpack.c.h.b16 %v152
  %v326 = vunpack.c.l.b16 %v153
  %v327 = vunpack.c.h.b16 %v153
  %v328 = vunpack.c.l.b16 %v154
  %v329 = vunpack.c.h.b16 %v154
  %v330 = vunpack.c.l.b16 %v155
  %v331 = vunpack.c.h.b16 %v155
  %v332 = vunpack.c.l.b16 %v156
  %v333 = vunpack.c.h.b16 %v156
  %v334 = vunpack.c.l.b16 %v157
  %v335 = vunpack.c.h.b16 %v157
  %v336 = vunpack.c.l.b16 %v158
  %v337 = vunpack.c.h.b16 %v158
  %v338 = vunpack.c.l.b16 %v159
  %v339 = vunpack.c.h.b16 %v159
  %v340 = vunpack.c.l.b16 %v160
  %v341 = vunpack.c.h.b16 %v160
  %v342 = vunpack.c.l.b16 %v161
  %v343 = vunpack.c.h.b16 %v161
  %v344 = vunpack.c.l.b16 %v162
  %v345 = vunpack.c.h.b16 %v162
  %v346 = vunpack.c.l.b16 %v163
  %v347 = vunpack.c.h.b16 %v163
  %v348 = vunpack.c.l.b16 %v164
  %v349 = vunpack.c.h.b16 %v164
  %v350 = vunpack.c.l.b16 %v165
  %v351 = vunpack.c.h.b16 %v165
  %v352 = vunpack.c.l.b16 %v166
  %v353 = vunpack.c.h.b16 %v166
  %v354 = vunpack.c.l.b16 %v167
  %v355 = vunpack.c.h.b16 %v167
  %v356 = vunpack.c.l.b16 %v168
  %v357 = vunpack.c.h.b16 %v168
  %v358 = vunpack.c.l.b16 %v169
  %v359 = vunpack.c.h.b16 %v169
  %v360 = vunpack.c.l.b16 %v170
  %v361 = vunpack.c.h.b16 %v170
  %v362 = vunpack.c.l.b16 %v171
  %v363 = vunpack.c.h.b16 %v171
  %v364 = vunpack.c.l.b16 %v172
  %v365 = vunpack.c.h.b16 %v172
  %v366 = vunpack.c.l.b16 %v173
  %v367 = vunpack.c.h.b16 %v173
  %v368 = vunpack.c.l.b16 %v174
  %v369 = vunpack.c.h.b16 %v174
  %v370 = vunpack.c.l.b16 %v175
  %v371 = vunpack.c.h.b16 %v175
  %v372 = vunpack.c.l.b16 %v176
  %v373 = vunpack.c.h.b16 %v176
  %v374 = vunpack.c.l.b16 %v177
  %v375 = vunpack.c.h.b16 %v177
  %v376 = vunpack.c.l.b16 %v178
  %v377 = vunpack.c.h.b16 %v178
  %v378 = vunpack.c.l.b16 %v179
  %v379 = vunpack.c.h.b16 %v179
  %v380 = vunpack.c.l.b16 %v180
  %v381 = vunpack.c.h.b16 %v180
  %v382 = vunpack.c.l.b16 %v181
  %v383 = vunpack.c.h.b16 %v181
  %v384 = vunpack.c.l.b16 %v182
  %v385 = vunpack.c.h.b16 %v182
  %v386 = vpack.c.b16 %v260, %v258
  %v387 = vpack.c.b16 %v261, %v259
  %v388 = vpack.c.b16 %v264, %v262
  %v389 = vpack.c.b16 %v265, %v263
  %v390 = vpack.c.b16 %v268, %v266
  %v391 = vpack.c.b16 %v269, %v267
  %v392 = vpack.c.b16 %v272, %v270
  %v393 = vpack.c.b16 %v273, %v271
  %v394 = vpack.c.b16 %v276, %v274
  %v395 = vpack.c.b16 %v277, %v275
  %v396 = vpack.c.b16 %v280, %v278
  %v397 = vpack.c.b16 %v281, %v279
  %v398 = vpack.c.b16 %v284, %v282
  %v399 = vpack.c.b16 %v285, %v283
  %v400 = vpack.c.b16 %v288, %v286
  %v401 = vpack.c.b16 %v289, %v287
  %v402 = vpack.c.b16 %v292, %v290
  %v403 = vpack.c.b16 %v293, %v291
  %v404 = vpack.c.b16 %v296, %v294
  %v405 = vpack.c.b16 %v297, %v295
  %v406 = vpack.c.b16 %v300, %v298
  %v407 = vpack.c.b16 %v301, %v299
  %v408 = vpack.c.b16 %v304, %v302
  %v409 = vpack.c.b16 %v305, %v303
  %v410 = vpack.c.b16 %v308, %v306
  %v411 = vpack.c.b16 %v309, %v307
  %v412 = vpack.c.b16 %v312, %v310
  %v413 = vpack.c.b16 %v313, %v311
  %v414 = vpack.c.b16 %v316, %v314
  %v415 = vpack.c.b16 %v317, %v315
  %v416 = vpack.c.b16 %v320, %v318
  %v417 = vpack.c.b16 %v321, %v319
  %v418 = vpack.c.b16 %v324, %v322
  %v419 = vpack.c.b16 %v325, %v323
  %v420 = vpack.c.b16 %v328, %v326
  %v421 = vpack.c.b16 %v329, %v327
  %v422 = vpack.c.b16 %v332, %v330
  %v423 = vpack.c.b16 %v333, %v331
  %v424 = vpack.c.b16 %v336, %v334
  %v425 = vpack.c.b16 %v337, %v335
  %v426 = vpack.c.b16 %v340, %v338
  %v427 = vpack.c.b16 %v341, %v339
  %v428 = vpack.c.b16 %v344, %v342
  %v429 = vpack.c.b16 %v345, %v343
  %v430 = vpack.c.b16 %v348, %v346
  %v431 = vpack.c.b16 %v349, %v347
  %v432 = vpack.c.b16 %v352, %v350
  %v433 = vpack.c.b16 %v353, %v351
  %v434 = vpack.c.b16 %v356, %v354
  %v435 = vpack.c.b16 %v357, %v355
  %v436 = vpack.c.b16 %v360, %v358
  %v437 = vpack.c.b16 %v361, %v359
  %v438 = vpack.c.b16 %v364, %v362
  %v439 = vpack.c.b16 %v365, %v363
  %v440 = vpack.c.b16 %v368, %v366
  %v441 = vpack.c.b16 %v369, %v367
  %v442 = vpack.c.b16 %v372, %v370
  %v443 = vpack.c.b16 %v373, %v371
  %v444 = vpack.c.b16 %v376, %v374
  %v445 = vpack.c.b16 %v377, %v375
  %v446 = vpack.c.b16 %v380, %v378
  %v447 = vpack.c.b16 %v381, %v379
  %v448 = vpack.c.b16 %v384, %v382
  %v449 = vpack.c.b16 %v385, %v383
  %514 = vmatprep.subr.bf16.mxu0 %v401
  %515 = vmatpush1.bf16.msra.mxu0 %v400
  %516 = vmatprep.subr.bf16.mxu0 %v399
  %517 = vmatpush1.bf16.msra.mxu0 %v398
  %518 = vmatprep.subr.bf16.mxu0 %v397
  %519 = vmatpush1.bf16.msra.mxu0 %v396
  %520 = vmatprep.subr.bf16.mxu0 %v395
  %521 = vmatpush1.bf16.msra.mxu0 %v394
  %522 = vmatprep.subr.bf16.mxu0 %v393
  %523 = vmatpush1.bf16.msra.mxu0 %v392
  %524 = vmatprep.subr.bf16.mxu0 %v391
  %525 = vmatpush1.bf16.msra.mxu0 %v390
  %526 = vmatprep.subr.bf16.mxu0 %v389
  %527 = vmatpush1.bf16.msra.mxu0 %v388
  %528 = vmatprep.subr.bf16.mxu0 %v387
  %529 = vmatpush1.bf16.msra.mxu0 %v386
  %530 = vmatprep.subr.bf16.mxu0 %v417
  %531 = vmatpush2.bf16.msra.mxu0 %v416
  %532 = vmatprep.subr.bf16.mxu0 %v415
  %533 = vmatpush2.bf16.msra.mxu0 %v414
  %534 = vmatprep.subr.bf16.mxu0 %v413
  %535 = vmatpush2.bf16.msra.mxu0 %v412
  %536 = vmatprep.subr.bf16.mxu0 %v411
  %537 = vmatpush2.bf16.msra.mxu0 %v410
  %538 = vmatprep.subr.bf16.mxu0 %v409
  %539 = vmatpush2.bf16.msra.mxu0 %v408
  %540 = vmatprep.subr.bf16.mxu0 %v407
  %541 = vmatpush2.bf16.msra.mxu0 %v406
  %542 = vmatprep.subr.bf16.mxu0 %v405
  %543 = vmatpush2.bf16.msra.mxu0 %v404
  %544 = vmatprep.subr.bf16.mxu0 %v403
  %545 = vmatpush2.bf16.msra.mxu0 %v402
  %546 = vmatprep.mubr.bf16.mxu0 %v116
  %547 = vmatmul.mubr.bf16.gmra.mxu0 %v115
  %v548 = vpop.f32.mrf.mxu0
  %v549 = vadd.f32 %v187, %v548
  %v550 = vpop.f32.mrf.mxu0
  %v551 = vadd.f32 %v191, %v550
  %v552 = vpop.f32.mrf.mxu0
  %v553 = vpop.f32.mrf.mxu0
  %554 = vdwg.mxu0
  %555 = vmatprep.subr.bf16.mxu0 %v433
  %556 = vmatpush1.bf16.msra.mxu0 %v432
  %557 = vmatprep.subr.bf16.mxu0 %v431
  %558 = vmatpush1.bf16.msra.mxu0 %v430
  %559 = vmatprep.subr.bf16.mxu0 %v429
  %560 = vmatpush1.bf16.msra.mxu0 %v428
  %561 = vmatprep.subr.bf16.mxu0 %v427
  %562 = vmatpush1.bf16.msra.mxu0 %v426
  %563 = vmatprep.subr.bf16.mxu0 %v425
  %564 = vmatpush1.bf16.msra.mxu0 %v424
  %565 = vmatprep.subr.bf16.mxu0 %v423
  %566 = vmatpush1.bf16.msra.mxu0 %v422
  %567 = vmatprep.subr.bf16.mxu0 %v421
  %568 = vmatpush1.bf16.msra.mxu0 %v420
  %569 = vmatprep.subr.bf16.mxu0 %v419
  %570 = vmatpush1.bf16.msra.mxu0 %v418
  %571 = vmatprep.subr.bf16.mxu0 %v449
  %572 = vmatpush2.bf16.msra.mxu0 %v448
  %573 = vmatprep.subr.bf16.mxu0 %v447
  %574 = vmatpush2.bf16.msra.mxu0 %v446
  %575 = vmatprep.subr.bf16.mxu0 %v445
  %576 = vmatpush2.bf16.msra.mxu0 %v444
  %577 = vmatprep.subr.bf16.mxu0 %v443
  %578 = vmatpush2.bf16.msra.mxu0 %v442
  %579 = vmatprep.subr.bf16.mxu0 %v441
  %580 = vmatpush2.bf16.msra.mxu0 %v440
  %581 = vmatprep.subr.bf16.mxu0 %v439
  %582 = vmatpush2.bf16.msra.mxu0 %v438
  %583 = vmatprep.subr.bf16.mxu0 %v437
  %584 = vmatpush2.bf16.msra.mxu0 %v436
  %585 = vmatprep.subr.bf16.mxu0 %v435
  %586 = vmatpush2.bf16.msra.mxu0 %v434
  %587 = vmatprep.mubr.bf16.mxu0 %v118
  %588 = vmatmul.mubr.bf16.gmra.mxu0 %v117
  %v589 = vpop.f32.mrf.mxu0
  %v590 = vadd.f32 %v549, %v589
  %v591 = vpop.f32.mrf.mxu0
  %v592 = vadd.f32 %v551, %v591
  %v593 = vpop.f32.mrf.mxu0
  %v594 = vpop.f32.mrf.mxu0
  %595 = vdwg.mxu0
  %596 = vst [vmem:[%s3] sm:$0xff] %v590
  %597 = vst [vmem:[%s3 + $0x8] sm:$0xff] %v592
  %v598 = vrot.slane %v590, 4
  %v599 = vadd.f32 %v590, %v598
  %v600 = vrot.slane %v599, 2
  %v601 = vadd.f32 %v599, %v600
  %v602 = vrot.slane %v601, 1
  %v603 = vadd.f32 %v601, %v602
  %v604 = vrot.slane %v592, 4
  %v605 = vadd.f32 %v592, %v604
  %v606 = vrot.slane %v605, 2
  %v607 = vadd.f32 %v605, %v606
  %v608 = vrot.slane %v607, 1
  %v609 = vadd.f32 %v607, %v608
  %v612 = vcombine.low %v603, %v609
  %v614 = vunpack.c.l.s4 1966171168
  %v615 = vunpack.c.0.s8 %v614
  %v616 = vlaneseq
  %v617 = vshrl.u32 %v616, 7
  %v618 = vsub.s32 %v615, %v617
  %v619 = vrot.slane %v612, %v618
  %v621 = vunpack.c.l.s4 1966171168
  %v622 = vunpack.c.0.s8 %v621
  %v623 = vlaneseq
  %v624 = vshrl.u32 %v623, 7
  %v625 = vsub.s32 %v622, %v624
  %v626 = vrot.slane %v619, %v625
  %v628 = vlaneseq
  %vm629 = vcmp.ge.s32.totalorder %v628, 0
  %vm630 = vcmp.lt.s32.totalorder %v628, 256
  %vm631 = vmand %vm629, %vm630
  %632 = vst.msk [vmem:[%s4] ss:$2 sm:$0x3] %vm631, %v626
  %v633 = vmul.f32 %v590, %v590
  %v634 = vmul.f32 %v592, %v592
  %v635 = vrot.slane %v633, 4
  %v636 = vadd.f32 %v633, %v635
  %v637 = vrot.slane %v636, 2
  %v638 = vadd.f32 %v636, %v637
  %v639 = vrot.slane %v638, 1
  %v640 = vadd.f32 %v638, %v639
  %v641 = vrot.slane %v634, 4
  %v642 = vadd.f32 %v634, %v641
  %v643 = vrot.slane %v642, 2
  %v644 = vadd.f32 %v642, %v643
  %v645 = vrot.slane %v644, 1
  %v646 = vadd.f32 %v644, %v645
  %v649 = vcombine.low %v640, %v646
  %v651 = vunpack.c.l.s4 1966171168
  %v652 = vunpack.c.0.s8 %v651
  %v653 = vlaneseq
  %v654 = vshrl.u32 %v653, 7
  %v655 = vsub.s32 %v652, %v654
  %v656 = vrot.slane %v649, %v655
  %v658 = vunpack.c.l.s4 1966171168
  %v659 = vunpack.c.0.s8 %v658
  %v660 = vlaneseq
  %v661 = vshrl.u32 %v660, 7
  %v662 = vsub.s32 %v659, %v661
  %v663 = vrot.slane %v656, %v662
  %s665 = scalar_lea.vmem %s4, 1
  %666 = vst.msk [vmem:[%s665] ss:$2 sm:$0x3] %vm631, %v663
  // Predicated region
  $region14: #{_lambda_.4} parent=0 // pred_check
    _
  $region15: #{_lambda_.4} parent=0 // pred_check_branch
    %668 = sbr.rel (0) target = $region17
  $region16: #{_lambda_.4} parent=0 // pred_region
    _
  $region17: #{_lambda_.4} parent=0 // pred_fallthru
    _
  // Predicated region
  $region18: #{_lambda_.4} parent=0 // pred_check
    _
  $region19: #{_lambda_.4} parent=0 // pred_check_branch
    %670 = sbr.rel (0) target = $region21
  $region20: #{_lambda_.4} parent=0 // pred_region
    _
  $region21: #{_lambda_.4} parent=0 // pred_fallthru
    _
  // Predicated region
  $region22: #{_lambda_.4} parent=0 // pred_check
    _
  $region23: #{_lambda_.4} parent=0 // pred_check_branch
    %672 = sbr.rel (0) target = $region25
  $region24: #{_lambda_.4} parent=0 // pred_region
    _
  $region25: #{_lambda_.4} parent=0 // pred_fallthru
    _
  // Predicated region
  $region26: #{_lambda_.4} parent=0 // pred_check
    _
  $region27: #{_lambda_.4} parent=0 // pred_check_branch
    %674 = sbr.rel (0) target = $region29
  $region28: #{_lambda_.4} parent=0 // pred_region
    _
  $region29: #{_lambda_.4} parent=0 // pred_fallthru
    _

// kernel: _lambda_.3
$region0: #{_lambda_.3}
  #allocation0 [shape = 'u32[]', space=smem, size = 0x4, offset = 0x4, fixed_abs, tag = 'smem constant byte address 0x4 - core index']
  #allocation1 [shape = 'u32[144,128]{1,0:T(1,128)}', space=vmem, size = 0x12000, scoped, tag = 'internal scratch']
  %s0 = inlined_call_operand.vmem [shape: bf16[8,128], index: 0, kind: input, shape index: {}]
  %s1 = inlined_call_operand.hbm [shape: bf16[128,2048], index: 1, kind: input, shape index: {}]
  %s2 = inlined_call_operand.hbm [shape: bf16[2048,512], index: 2, kind: input, shape index: {}]
  %s3 = inlined_call_operand.vmem [shape: f32[1,2560], index: 3, kind: input, shape index: {}]
  %s4 = inlined_call_operand.vmem [shape: f32[8,512], index: 4, kind: output, shape index: {0}]
  %s5 = inlined_call_operand.vmem [shape: f32[1,2,512], index: 5, kind: output, shape index: {1}]
  %6 = xla_tuple %s4, %s5
  %s7 = sld [smem:[#allocation0]]
  $region42: #{_lambda_.3} parent=0
    _
  %s9 = ssub.s32 1, %s7
  %s10 = scalar_select 0, %s9, %s7
  $region1: #{_lambda_.3} parent=0
    #allocation2 [shape = 'u8[524288]{0}', space=vmem, size = 0x80000, scoped, tag = 'input window, operand 1, single buffered']
    #allocation3 [shape = 's32[1]{0}', space=sflag, size = 0x4, scoped, tag = 'scoped memory for _lambda_.3']
    #allocation4 [shape = 'u8[2097152]{0}', space=vmem, size = 0x200000, scoped, tag = 'input window, operand 2, single buffered']
    #allocation5 [shape = 's32[1]{0}', space=sflag, size = 0x4, scoped, tag = 'scoped memory for _lambda_.3']
    %11 = vsyncpa [#allocation3], 0
    %12 = vsyncpa [#allocation5], 0
    // Predicated region
    $region2: #{_lambda_.3} parent=1 // pred_check
      _
    $region3: #{_lambda_.3} parent=1 // pred_check_branch
      %14 = sbr.rel (0) target = $region5
    $region4: #{_lambda_.3} parent=1 // pred_region
      _
    $region5: #{_lambda_.3} parent=1 // pred_fallthru
      _
    // Predicated region
    $region6: #{_lambda_.3} parent=1 // pred_check
      _
    $region7: #{_lambda_.3} parent=1 // pred_check_branch
      %16 = sbr.rel (0) target = $region9
    $region8: #{_lambda_.3} parent=1 // pred_region
      %s18 = ssub.s32 16384, 16384
      %19 = vsyncadd [#allocation3], %s18
      %s20 = sshll.u32 [#allocation2], 4
      %s21 = int_to_ptr.vmem [resolvable:$true] %s20
      %26 = dma.hbm_to_vmem [thread:$0]  %s1, 16384, %s21, [#allocation3], 1024, 1024, 64
    $region9: #{_lambda_.3} parent=1 // pred_fallthru
      _
    // Predicated region
    $region10: #{_lambda_.3} parent=1 // pred_check
      _
    $region11: #{_lambda_.3} parent=1 // pred_check_branch
      %28 = sbr.rel (0) target = $region13
    $region12: #{_lambda_.3} parent=1 // pred_region
      %s30 = ssub.s32 65536, 65536
      %31 = vsyncadd [#allocation5], %s30
      %s32 = sshll.u32 [#allocation4], 4
      %s33 = int_to_ptr.vmem [resolvable:$true] %s32
      %38 = dma.hbm_to_vmem [thread:$0]  %s2, 65536, %s33, [#allocation5], 256, 256, 16
    $region13: #{_lambda_.3} parent=1 // pred_fallthru
      _
    // Predicated region
    $region14: #{_lambda_.3} parent=1 // pred_check
      _
    $region15: #{_lambda_.3} parent=1 // pred_check_branch
      %40 = sbr.rel (0) target = $region17
    $region16: #{_lambda_.3} parent=1 // pred_region
      _
    $region17: #{_lambda_.3} parent=1 // pred_fallthru
      _
    // Predicated region
    $region18: #{_lambda_.3} parent=1 // pred_check
      _
    $region19: #{_lambda_.3} parent=1 // pred_check_branch
      %42 = sbr.rel (0) target = $region21
    $region20: #{_lambda_.3} parent=1 // pred_region
      %43 = dma.done [#allocation3], 16384
    $region21: #{_lambda_.3} parent=1 // pred_fallthru
      _
    // Predicated region
    $region22: #{_lambda_.3} parent=1 // pred_check
      _
    $region23: #{_lambda_.3} parent=1 // pred_check_branch
      %45 = sbr.rel (0) target = $region25
    $region24: #{_lambda_.3} parent=1 // pred_region
      %46 = dma.done [#allocation5], 65536
    $region25: #{_lambda_.3} parent=1 // pred_fallthru
      _
    %v48 = vld [vmem:[%s0] sm:$0xf]
    %v49 = vld [vmem:[#allocation2] sm:$0xff]
    %v50 = vld [vmem:[#allocation2 + $0x8] sm:$0xff]
    %v51 = vld [vmem:[#allocation2 + $0x10] sm:$0xff]
    %v52 = vld [vmem:[#allocation2 + $0x18] sm:$0xff]
    %v53 = vld [vmem:[#allocation2 + $0x20] sm:$0xff]
    %v54 = vld [vmem:[#allocation2 + $0x28] sm:$0xff]
    %v55 = vld [vmem:[#allocation2 + $0x30] sm:$0xff]
    %v56 = vld [vmem:[#allocation2 + $0x38] sm:$0xff]
    %v57 = vld [vmem:[#allocation2 + $0x40] sm:$0xff]
    %v58 = vld [vmem:[#allocation2 + $0x48] sm:$0xff]
    %v59 = vld [vmem:[#allocation2 + $0x50] sm:$0xff]
    %v60 = vld [vmem:[#allocation2 + $0x58] sm:$0xff]
    %v61 = vld [vmem:[#allocation2 + $0x60] sm:$0xff]
    %v62 = vld [vmem:[#allocation2 + $0x68] sm:$0xff]
    %v63 = vld [vmem:[#allocation2 + $0x70] sm:$0xff]
    %v64 = vld [vmem:[#allocation2 + $0x78] sm:$0xff]
    %v65 = vld [vmem:[#allocation2 + $0x80] sm:$0xff]
    %v66 = vld [vmem:[#allocation2 + $0x88] sm:$0xff]
    %v67 = vld [vmem:[#allocation2 + $0x90] sm:$0xff]
    %v68 = vld [vmem:[#allocation2 + $0x98] sm:$0xff]
    %v69 = vld [vmem:[#allocation2 + $0xa0] sm:$0xff]
    %v70 = vld [vmem:[#allocation2 + $0xa8] sm:$0xff]
    %v71 = vld [vmem:[#allocation2 + $0xb0] sm:$0xff]
    %v72 = vld [vmem:[#allocation2 + $0xb8] sm:$0xff]
    %v73 = vld [vmem:[#allocation2 + $0xc0] sm:$0xff]
    %v74 = vld [vmem:[#allocation2 + $0xc8] sm:$0xff]
    %v75 = vld [vmem:[#allocation2 + $0xd0] sm:$0xff]
    %v76 = vld [vmem:[#allocation2 + $0xd8] sm:$0xff]
    %v77 = vld [vmem:[#allocation2 + $0xe0] sm:$0xff]
    %v78 = vld [vmem:[#allocation2 + $0xe8] sm:$0xff]
    %v79 = vld [vmem:[#allocation2 + $0xf0] sm:$0xff]
    %v80 = vld [vmem:[#allocation2 + $0xf8] sm:$0xff]
    %v81 = vld [vmem:[#allocation2 + $0x100] sm:$0xff]
    %v82 = vld [vmem:[#allocation2 + $0x108] sm:$0xff]
    %v83 = vld [vmem:[#allocation2 + $0x110] sm:$0xff]
    %v84 = vld [vmem:[#allocation2 + $0x118] sm:$0xff]
    %v85 = vld [vmem:[#allocation2 + $0x120] sm:$0xff]
    %v86 = vld [vmem:[#allocation2 + $0x128] sm:$0xff]
    %v87 = vld [vmem:[#allocation2 + $0x130] sm:$0xff]
    %v88 = vld [vmem:[#allocation2 + $0x138] sm:$0xff]
    %v89 = vld [vmem:[#allocation2 + $0x140] sm:$0xff]
    %v90 = vld [vmem:[#allocation2 + $0x148] sm:$0xff]
    %v91 = vld [vmem:[#allocation2 + $0x150] sm:$0xff]
    %v92 = vld [vmem:[#allocation2 + $0x158] sm:$0xff]
    %v93 = vld [vmem:[#allocation2 + $0x160] sm:$0xff]
    %v94 = vld [vmem:[#allocation2 + $0x168] sm:$0xff]
    %v95 = vld [vmem:[#allocation2 + $0x170] sm:$0xff]
    %v96 = vld [vmem:[#allocation2 + $0x178] sm:$0xff]
    %v97 = vld [vmem:[#allocation2 + $0x180] sm:$0xff]
    %v98 = vld [vmem:[#allocation2 + $0x188] sm:$0xff]
    %v99 = vld [vmem:[#allocation2 + $0x190] sm:$0xff]
    %v100 = vld [vmem:[#allocation2 + $0x198] sm:$0xff]
    %v101 = vld [vmem:[#allocation2 + $0x1a0] sm:$0xff]
    %v102 = vld [vmem:[#allocation2 + $0x1a8] sm:$0xff]
    %v103 = vld [vmem:[#allocation2 + $0x1b0] sm:$0xff]
    %v104 = vld [vmem:[#allocation2 + $0x1b8] sm:$0xff]
    %v105 = vld [vmem:[#allocation2 + $0x1c0] sm:$0xff]
    %v106 = vld [vmem:[#allocation2 + $0x1c8] sm:$0xff]
    %v107 = vld [vmem:[#allocation2 + $0x1d0] sm:$0xff]
    %v108 = vld [vmem:[#allocation2 + $0x1d8] sm:$0xff]
    %v109 = vld [vmem:[#allocation2 + $0x1e0] sm:$0xff]
    %v110 = vld [vmem:[#allocation2 + $0x1e8] sm:$0xff]
    %v111 = vld [vmem:[#allocation2 + $0x1f0] sm:$0xff]
    %v112 = vld [vmem:[#allocation2 + $0x1f8] sm:$0xff]
    %v113 = vld [vmem:[#allocation2 + $0x200] sm:$0xff]
    %v114 = vld [vmem:[#allocation2 + $0x208] sm:$0xff]
    %v115 = vld [vmem:[#allocation2 + $0x210] sm:$0xff]
    %v116 = vld [vmem:[#allocation2 + $0x218] sm:$0xff]
    %v117 = vld [vmem:[#allocation2 + $0x220] sm:$0xff]
    %v118 = vld [vmem:[#allocation2 + $0x228] sm:$0xff]
    %v119 = vld [vmem:[#allocation2 + $0x230] sm:$0xff]
    %v120 = vld [vmem:[#allocation2 + $0x238] sm:$0xff]
    %v121 = vld [vmem:[#allocation2 + $0x240] sm:$0xff]
    %v122 = vld [vmem:[#allocation2 + $0x248] sm:$0xff]
    %v123 = vld [vmem:[#allocation2 + $0x250] sm:$0xff]
    %v124 = vld [vmem:[#allocation2 + $0x258] sm:$0xff]
    %v125 = vld [vmem:[#allocation2 + $0x260] sm:$0xff]
    %v126 = vld [vmem:[#allocation2 + $0x268] sm:$0xff]
    %v127 = vld [vmem:[#allocation2 + $0x270] sm:$0xff]
    %v128 = vld [vmem:[#allocation2 + $0x278] sm:$0xff]
    %v129 = vld [vmem:[#allocation2 + $0x280] sm:$0xff]
    %v130 = vld [vmem:[#allocation2 + $0x288] sm:$0xff]
    %v131 = vld [vmem:[#allocation2 + $0x290] sm:$0xff]
    %v132 = vld [vmem:[#allocation2 + $0x298] sm:$0xff]
    %v133 = vld [vmem:[#allocation2 + $0x2a0] sm:$0xff]
    %v134 = vld [vmem:[#allocation2 + $0x2a8] sm:$0xff]
    %v135 = vld [vmem:[#allocation2 + $0x2b0] sm:$0xff]
    %v136 = vld [vmem:[#allocation2 + $0x2b8] sm:$0xff]
    %v137 = vld [vmem:[#allocation2 + $0x2c0] sm:$0xff]
    %v138 = vld [vmem:[#allocation2 + $0x2c8] sm:$0xff]
    %v139 = vld [vmem:[#allocation2 + $0x2d0] sm:$0xff]
    %v140 = vld [vmem:[#allocation2 + $0x2d8] sm:$0xff]
    %v141 = vld [vmem:[#allocation2 + $0x2e0] sm:$0xff]
    %v142 = vld [vmem:[#allocation2 + $0x2e8] sm:$0xff]
    %v143 = vld [vmem:[#allocation2 + $0x2f0] sm:$0xff]
    %v144 = vld [vmem:[#allocation2 + $0x2f8] sm:$0xff]
    %v145 = vld [vmem:[#allocation2 + $0x300] sm:$0xff]
    %v146 = vld [vmem:[#allocation2 + $0x308] sm:$0xff]
    %v147 = vld [vmem:[#allocation2 + $0x310] sm:$0xff]
    %v148 = vld [vmem:[#allocation2 + $0x318] sm:$0xff]
    %v149 = vld [vmem:[#allocation2 + $0x320] sm:$0xff]
    %v150 = vld [vmem:[#allocation2 + $0x328] sm:$0xff]
    %v151 = vld [vmem:[#allocation2 + $0x330] sm:$0xff]
    %v152 = vld [vmem:[#allocation2 + $0x338] sm:$0xff]
    %v153 = vld [vmem:[#allocation2 + $0x340] sm:$0xff]
    %v154 = vld [vmem:[#allocation2 + $0x348] sm:$0xff]
    %v155 = vld [vmem:[#allocation2 + $0x350] sm:$0xff]
    %v156 = vld [vmem:[#allocation2 + $0x358] sm:$0xff]
    %v157 = vld [vmem:[#allocation2 + $0x360] sm:$0xff]
    %v158 = vld [vmem:[#allocation2 + $0x368] sm:$0xff]
    %v159 = vld [vmem:[#allocation2 + $0x370] sm:$0xff]
    %v160 = vld [vmem:[#allocation2 + $0x378] sm:$0xff]
    %v161 = vld [vmem:[#allocation2 + $0x380] sm:$0xff]
    %v162 = vld [vmem:[#allocation2 + $0x388] sm:$0xff]
    %v163 = vld [vmem:[#allocation2 + $0x390] sm:$0xff]
    %v164 = vld [vmem:[#allocation2 + $0x398] sm:$0xff]
    %v165 = vld [vmem:[#allocation2 + $0x3a0] sm:$0xff]
    %v166 = vld [vmem:[#allocation2 + $0x3a8] sm:$0xff]
    %v167 = vld [vmem:[#allocation2 + $0x3b0] sm:$0xff]
    %v168 = vld [vmem:[#allocation2 + $0x3b8] sm:$0xff]
    %v169 = vld [vmem:[#allocation2 + $0x3c0] sm:$0xff]
    %v170 = vld [vmem:[#allocation2 + $0x3c8] sm:$0xff]
    %v171 = vld [vmem:[#allocation2 + $0x3d0] sm:$0xff]
    %v172 = vld [vmem:[#allocation2 + $0x3d8] sm:$0xff]
    %v173 = vld [vmem:[#allocation2 + $0x3e0] sm:$0xff]
    %v174 = vld [vmem:[#allocation2 + $0x3e8] sm:$0xff]
    %v175 = vld [vmem:[#allocation2 + $0x3f0] sm:$0xff]
    %v176 = vld [vmem:[#allocation2 + $0x3f8] sm:$0xff]
    %v177 = vld [vmem:[%s3] sm:$0xff]
    %v178 = vld [vmem:[%s3 + $0x8] sm:$0xff]
    %v181 = vlaneseq
    %v182 = vshrl.u32 %v181, 7
    %v183 = vsub.s32 0, %v182
    %v184 = vrot.slane %v177, %v183
    %v185 = vlaneseq
    %v186 = vshrl.u32 %v185, 7
    %v187 = vsub.s32 1, %v186
    %v188 = vrot.slane %v177, %v187
    %v189 = vlaneseq
    %v190 = vshrl.u32 %v189, 7
    %v191 = vsub.s32 2, %v190
    %v192 = vrot.slane %v177, %v191
    %v193 = vlaneseq
    %v194 = vshrl.u32 %v193, 7
    %v195 = vsub.s32 3, %v194
    %v196 = vrot.slane %v177, %v195
    %v197 = vlaneseq
    %v198 = vshrl.u32 %v197, 7
    %v199 = vsub.s32 4, %v198
    %v200 = vrot.slane %v177, %v199
    %v201 = vlaneseq
    %v202 = vshrl.u32 %v201, 7
    %v203 = vsub.s32 5, %v202
    %v204 = vrot.slane %v177, %v203
    %v205 = vlaneseq
    %v206 = vshrl.u32 %v205, 7
    %v207 = vsub.s32 6, %v206
    %v208 = vrot.slane %v177, %v207
    %v209 = vlaneseq
    %v210 = vshrl.u32 %v209, 7
    %v211 = vsub.s32 7, %v210
    %v212 = vrot.slane %v177, %v211
    %v213 = vlaneseq
    %v214 = vshrl.u32 %v213, 7
    %v215 = vsub.s32 0, %v214
    %v216 = vrot.slane %v178, %v215
    %v217 = vlaneseq
    %v218 = vshrl.u32 %v217, 7
    %v219 = vsub.s32 1, %v218
    %v220 = vrot.slane %v178, %v219
    %v221 = vlaneseq
    %v222 = vshrl.u32 %v221, 7
    %v223 = vsub.s32 2, %v222
    %v224 = vrot.slane %v178, %v223
    %v225 = vlaneseq
    %v226 = vshrl.u32 %v225, 7
    %v227 = vsub.s32 3, %v226
    %v228 = vrot.slane %v178, %v227
    %v229 = vlaneseq
    %v230 = vshrl.u32 %v229, 7
    %v231 = vsub.s32 4, %v230
    %v232 = vrot.slane %v178, %v231
    %v233 = vlaneseq
    %v234 = vshrl.u32 %v233, 7
    %v235 = vsub.s32 5, %v234
    %v236 = vrot.slane %v178, %v235
    %v237 = vlaneseq
    %v238 = vshrl.u32 %v237, 7
    %v239 = vsub.s32 6, %v238
    %v240 = vrot.slane %v178, %v239
    %v241 = vlaneseq
    %v242 = vshrl.u32 %v241, 7
    %v243 = vsub.s32 7, %v242
    %v244 = vrot.slane %v178, %v243
    %v389 = vunpack.c.l.b16 %v49
    %v390 = vunpack.c.h.b16 %v49
    %v391 = vunpack.c.l.b16 %v50
    %v392 = vunpack.c.h.b16 %v50
    %v393 = vunpack.c.l.b16 %v51
    %v394 = vunpack.c.h.b16 %v51
    %v395 = vunpack.c.l.b16 %v52
    %v396 = vunpack.c.h.b16 %v52
    %v397 = vunpack.c.l.b16 %v53
    %v398 = vunpack.c.h.b16 %v53
    %v399 = vunpack.c.l.b16 %v54
    %v400 = vunpack.c.h.b16 %v54
    %v401 = vunpack.c.l.b16 %v55
    %v402 = vunpack.c.h.b16 %v55
    %v403 = vunpack.c.l.b16 %v56
    %v404 = vunpack.c.h.b16 %v56
    %v405 = vunpack.c.l.b16 %v57
    %v406 = vunpack.c.h.b16 %v57
    %v407 = vunpack.c.l.b16 %v58
    %v408 = vunpack.c.h.b16 %v58
    %v409 = vunpack.c.l.b16 %v59
    %v410 = vunpack.c.h.b16 %v59
    %v411 = vunpack.c.l.b16 %v60
    %v412 = vunpack.c.h.b16 %v60
    %v413 = vunpack.c.l.b16 %v61
    %v414 = vunpack.c.h.b16 %v61
    %v415 = vunpack.c.l.b16 %v62
    %v416 = vunpack.c.h.b16 %v62
    %v417 = vunpack.c.l.b16 %v63
    %v418 = vunpack.c.h.b16 %v63
    %v419 = vunpack.c.l.b16 %v64
    %v420 = vunpack.c.h.b16 %v64
    %v421 = vunpack.c.l.b16 %v65
    %v422 = vunpack.c.h.b16 %v65
    %v423 = vunpack.c.l.b16 %v66
    %v424 = vunpack.c.h.b16 %v66
    %v425 = vunpack.c.l.b16 %v67
    %v426 = vunpack.c.h.b16 %v67
    %v427 = vunpack.c.l.b16 %v68
    %v428 = vunpack.c.h.b16 %v68
    %v429 = vunpack.c.l.b16 %v69
    %v430 = vunpack.c.h.b16 %v69
    %v431 = vunpack.c.l.b16 %v70
    %v432 = vunpack.c.h.b16 %v70
    %v433 = vunpack.c.l.b16 %v71
    %v434 = vunpack.c.h.b16 %v71
    %v435 = vunpack.c.l.b16 %v72
    %v436 = vunpack.c.h.b16 %v72
    %v437 = vunpack.c.l.b16 %v73
    %v438 = vunpack.c.h.b16 %v73
    %v439 = vunpack.c.l.b16 %v74
    %v440 = vunpack.c.h.b16 %v74
    %v441 = vunpack.c.l.b16 %v75
    %v442 = vunpack.c.h.b16 %v75
    %v443 = vunpack.c.l.b16 %v76
    %v444 = vunpack.c.h.b16 %v76
    %v445 = vunpack.c.l.b16 %v77
    %v446 = vunpack.c.h.b16 %v77
    %v447 = vunpack.c.l.b16 %v78
    %v448 = vunpack.c.h.b16 %v78
    %v449 = vunpack.c.l.b16 %v79
    %v450 = vunpack.c.h.b16 %v79
    %v451 = vunpack.c.l.b16 %v80
    %v452 = vunpack.c.h.b16 %v80
    %v453 = vunpack.c.l.b16 %v81
    %v454 = vunpack.c.h.b16 %v81
    %v455 = vunpack.c.l.b16 %v82
    %v456 = vunpack.c.h.b16 %v82
    %v457 = vunpack.c.l.b16 %v83
    %v458 = vunpack.c.h.b16 %v83
    %v459 = vunpack.c.l.b16 %v84
    %v460 = vunpack.c.h.b16 %v84
    %v461 = vunpack.c.l.b16 %v85
    %v462 = vunpack.c.h.b16 %v85
    %v463 = vunpack.c.l.b16 %v86
    %v464 = vunpack.c.h.b16 %v86
    %v465 = vunpack.c.l.b16 %v87
    %v466 = vunpack.c.h.b16 %v87
    %v467 = vunpack.c.l.b16 %v88
    %v468 = vunpack.c.h.b16 %v88
    %v469 = vunpack.c.l.b16 %v89
    %v470 = vunpack.c.h.b16 %v89
    %v471 = vunpack.c.l.b16 %v90
    %v472 = vunpack.c.h.b16 %v90
    %v473 = vunpack.c.l.b16 %v91
    %v474 = vunpack.c.h.b16 %v91
    %v475 = vunpack.c.l.b16 %v92
    %v476 = vunpack.c.h.b16 %v92
    %v477 = vunpack.c.l.b16 %v93
    %v478 = vunpack.c.h.b16 %v93
    %v479 = vunpack.c.l.b16 %v94
    %v480 = vunpack.c.h.b16 %v94
    %v481 = vunpack.c.l.b16 %v95
    %v482 = vunpack.c.h.b16 %v95
    %v483 = vunpack.c.l.b16 %v96
    %v484 = vunpack.c.h.b16 %v96
    %v485 = vunpack.c.l.b16 %v97
    %v486 = vunpack.c.h.b16 %v97
    %v487 = vunpack.c.l.b16 %v98
    %v488 = vunpack.c.h.b16 %v98
    %v489 = vunpack.c.l.b16 %v99
    %v490 = vunpack.c.h.b16 %v99
    %v491 = vunpack.c.l.b16 %v100
    %v492 = vunpack.c.h.b16 %v100
    %v493 = vunpack.c.l.b16 %v101
    %v494 = vunpack.c.h.b16 %v101
    %v495 = vunpack.c.l.b16 %v102
    %v496 = vunpack.c.h.b16 %v102
    %v497 = vunpack.c.l.b16 %v103
    %v498 = vunpack.c.h.b16 %v103
    %v499 = vunpack.c.l.b16 %v104
    %v500 = vunpack.c.h.b16 %v104
    %v501 = vunpack.c.l.b16 %v105
    %v502 = vunpack.c.h.b16 %v105
    %v503 = vunpack.c.l.b16 %v106
    %v504 = vunpack.c.h.b16 %v106
    %v505 = vunpack.c.l.b16 %v107
    %v506 = vunpack.c.h.b16 %v107
    %v507 = vunpack.c.l.b16 %v108
    %v508 = vunpack.c.h.b16 %v108
    %v509 = vunpack.c.l.b16 %v109
    %v510 = vunpack.c.h.b16 %v109
    %v511 = vunpack.c.l.b16 %v110
    %v512 = vunpack.c.h.b16 %v110
    %v513 = vunpack.c.l.b16 %v111
    %v514 = vunpack.c.h.b16 %v111
    %v515 = vunpack.c.l.b16 %v112
    %v516 = vunpack.c.h.b16 %v112
    %v517 = vunpack.c.l.b16 %v113
    %v518 = vunpack.c.h.b16 %v113
    %v519 = vunpack.c.l.b16 %v114
    %v520 = vunpack.c.h.b16 %v114
    %v521 = vunpack.c.l.b16 %v115
    %v522 = vunpack.c.h.b16 %v115
    %v523 = vunpack.c.l.b16 %v116
    %v524 = vunpack.c.h.b16 %v116
    %v525 = vunpack.c.l.b16 %v117
    %v526 = vunpack.c.h.b16 %v117
    %v527 = vunpack.c.l.b16 %v118
    %v528 = vunpack.c.h.b16 %v118
    %v529 = vunpack.c.l.b16 %v119
    %v530 = vunpack.c.h.b16 %v119
    %v531 = vunpack.c.l.b16 %v120
    %v532 = vunpack.c.h.b16 %v120
    %v533 = vunpack.c.l.b16 %v121
    %v534 = vunpack.c.h.b16 %v121
    %v535 = vunpack.c.l.b16 %v122
    %v536 = vunpack.c.h.b16 %v122
    %v537 = vunpack.c.l.b16 %v123
    %v538 = vunpack.c.h.b16 %v123
    %v539 = vunpack.c.l.b16 %v124
    %v540 = vunpack.c.h.b16 %v124
    %v541 = vunpack.c.l.b16 %v125
    %v542 = vunpack.c.h.b16 %v125
    %v543 = vunpack.c.l.b16 %v126
    %v544 = vunpack.c.h.b16 %v126
    %v545 = vunpack.c.l.b16 %v127
    %v546 = vunpack.c.h.b16 %v127
    %v547 = vunpack.c.l.b16 %v128
    %v548 = vunpack.c.h.b16 %v128
    %v549 = vunpack.c.l.b16 %v129
    %v550 = vunpack.c.h.b16 %v129
    %v551 = vunpack.c.l.b16 %v130
    %v552 = vunpack.c.h.b16 %v130
    %v553 = vunpack.c.l.b16 %v131
    %v554 = vunpack.c.h.b16 %v131
    %v555 = vunpack.c.l.b16 %v132
    %v556 = vunpack.c.h.b16 %v132
    %v557 = vunpack.c.l.b16 %v133
    %v558 = vunpack.c.h.b16 %v133
    %v559 = vunpack.c.l.b16 %v134
    %v560 = vunpack.c.h.b16 %v134
    %v561 = vunpack.c.l.b16 %v135
    %v562 = vunpack.c.h.b16 %v135
    %v563 = vunpack.c.l.b16 %v136
    %v564 = vunpack.c.h.b16 %v136
    %v565 = vunpack.c.l.b16 %v137
    %v566 = vunpack.c.h.b16 %v137
    %v567 = vunpack.c.l.b16 %v138
    %v568 = vunpack.c.h.b16 %v138
    %v569 = vunpack.c.l.b16 %v139
    %v570 = vunpack.c.h.b16 %v139
    %v571 = vunpack.c.l.b16 %v140
    %v572 = vunpack.c.h.b16 %v140
    %v573 = vunpack.c.l.b16 %v141
    %v574 = vunpack.c.h.b16 %v141
    %v575 = vunpack.c.l.b16 %v142
    %v576 = vunpack.c.h.b16 %v142
    %v577 = vunpack.c.l.b16 %v143
    %v578 = vunpack.c.h.b16 %v143
    %v579 = vunpack.c.l.b16 %v144
    %v580 = vunpack.c.h.b16 %v144
    %v581 = vunpack.c.l.b16 %v145
    %v582 = vunpack.c.h.b16 %v145
    %v583 = vunpack.c.l.b16 %v146
    %v584 = vunpack.c.h.b16 %v146
    %v585 = vunpack.c.l.b16 %v147
    %v586 = vunpack.c.h.b16 %v147
    %v587 = vunpack.c.l.b16 %v148
    %v588 = vunpack.c.h.b16 %v148
    %v589 = vunpack.c.l.b16 %v149
    %v590 = vunpack.c.h.b16 %v149
    %v591 = vunpack.c.l.b16 %v150
    %v592 = vunpack.c.h.b16 %v150
    %v593 = vunpack.c.l.b16 %v151
    %v594 = vunpack.c.h.b16 %v151
    %v595 = vunpack.c.l.b16 %v152
    %v596 = vunpack.c.h.b16 %v152
    %v597 = vunpack.c.l.b16 %v153
    %v598 = vunpack.c.h.b16 %v153
    %v599 = vunpack.c.l.b16 %v154
    %v600 = vunpack.c.h.b16 %v154
    %v601 = vunpack.c.l.b16 %v155
    %v602 = vunpack.c.h.b16 %v155
    %v603 = vunpack.c.l.b16 %v156
    %v604 = vunpack.c.h.b16 %v156
    %v605 = vunpack.c.l.b16 %v157
    %v606 = vunpack.c.h.b16 %v157
    %v607 = vunpack.c.l.b16 %v158
    %v608 = vunpack.c.h.b16 %v158
    %v609 = vunpack.c.l.b16 %v159
    %v610 = vunpack.c.h.b16 %v159
    %v611 = vunpack.c.l.b16 %v160
    %v612 = vunpack.c.h.b16 %v160
    %v613 = vunpack.c.l.b16 %v161
    %v614 = vunpack.c.h.b16 %v161
    %v615 = vunpack.c.l.b16 %v162
    %v616 = vunpack.c.h.b16 %v162
    %v617 = vunpack.c.l.b16 %v163
    %v618 = vunpack.c.h.b16 %v163
    %v619 = vunpack.c.l.b16 %v164
    %v620 = vunpack.c.h.b16 %v164
    %v621 = vunpack.c.l.b16 %v165
    %v622 = vunpack.c.h.b16 %v165
    %v623 = vunpack.c.l.b16 %v166
    %v624 = vunpack.c.h.b16 %v166
    %v625 = vunpack.c.l.b16 %v167
    %v626 = vunpack.c.h.b16 %v167
    %v627 = vunpack.c.l.b16 %v168
    %v628 = vunpack.c.h.b16 %v168
    %v629 = vunpack.c.l.b16 %v169
    %v630 = vunpack.c.h.b16 %v169
    %v631 = vunpack.c.l.b16 %v170
    %v632 = vunpack.c.h.b16 %v170
    %v633 = vunpack.c.l.b16 %v171
    %v634 = vunpack.c.h.b16 %v171
    %v635 = vunpack.c.l.b16 %v172
    %v636 = vunpack.c.h.b16 %v172
    %v637 = vunpack.c.l.b16 %v173
    %v638 = vunpack.c.h.b16 %v173
    %v639 = vunpack.c.l.b16 %v174
    %v640 = vunpack.c.h.b16 %v174
    %v641 = vunpack.c.l.b16 %v175
    %v642 = vunpack.c.h.b16 %v175
    %v643 = vunpack.c.l.b16 %v176
    %v644 = vunpack.c.h.b16 %v176
    %v645 = vpack.c.b16 %v405, %v389
    %v646 = vpack.c.b16 %v406, %v390
    %v647 = vpack.c.b16 %v407, %v391
    %v648 = vpack.c.b16 %v408, %v392
    %v649 = vpack.c.b16 %v409, %v393
    %v650 = vpack.c.b16 %v410, %v394
    %v651 = vpack.c.b16 %v411, %v395
    %v652 = vpack.c.b16 %v412, %v396
    %v653 = vpack.c.b16 %v413, %v397
    %v654 = vpack.c.b16 %v414, %v398
    %v655 = vpack.c.b16 %v415, %v399
    %v656 = vpack.c.b16 %v416, %v400
    %v657 = vpack.c.b16 %v417, %v401
    %v658 = vpack.c.b16 %v418, %v402
    %v659 = vpack.c.b16 %v419, %v403
    %v660 = vpack.c.b16 %v420, %v404
    %v661 = vpack.c.b16 %v437, %v421
    %v662 = vpack.c.b16 %v438, %v422
    %v663 = vpack.c.b16 %v439, %v423
    %v664 = vpack.c.b16 %v440, %v424
    %v665 = vpack.c.b16 %v441, %v425
    %v666 = vpack.c.b16 %v442, %v426
    %v667 = vpack.c.b16 %v443, %v427
    %v668 = vpack.c.b16 %v444, %v428
    %v669 = vpack.c.b16 %v445, %v429
    %v670 = vpack.c.b16 %v446, %v430
    %v671 = vpack.c.b16 %v447, %v431
    %v672 = vpack.c.b16 %v448, %v432
    %v673 = vpack.c.b16 %v449, %v433
    %v674 = vpack.c.b16 %v450, %v434
    %v675 = vpack.c.b16 %v451, %v435
    %v676 = vpack.c.b16 %v452, %v436
    %v677 = vpack.c.b16 %v469, %v453
    %v678 = vpack.c.b16 %v470, %v454
    %v679 = vpack.c.b16 %v471, %v455
    %v680 = vpack.c.b16 %v472, %v456
    %v681 = vpack.c.b16 %v473, %v457
    %v682 = vpack.c.b16 %v474, %v458
    %v683 = vpack.c.b16 %v475, %v459
    %v684 = vpack.c.b16 %v476, %v460
    %v685 = vpack.c.b16 %v477, %v461
    %v686 = vpack.c.b16 %v478, %v462
    %v687 = vpack.c.b16 %v479, %v463
    %v688 = vpack.c.b16 %v480, %v464
    %v689 = vpack.c.b16 %v481, %v465
    %v690 = vpack.c.b16 %v482, %v466
    %v691 = vpack.c.b16 %v483, %v467
    %v692 = vpack.c.b16 %v484, %v468
    %v693 = vpack.c.b16 %v501, %v485
    %v694 = vpack.c.b16 %v502, %v486
    %v695 = vpack.c.b16 %v503, %v487
    %v696 = vpack.c.b16 %v504, %v488
    %v697 = vpack.c.b16 %v505, %v489
    %v698 = vpack.c.b16 %v506, %v490
    %v699 = vpack.c.b16 %v507, %v491
    %v700 = vpack.c.b16 %v508, %v492
    %v701 = vpack.c.b16 %v509, %v493
    %v702 = vpack.c.b16 %v510, %v494
    %v703 = vpack.c.b16 %v511, %v495
    %v704 = vpack.c.b16 %v512, %v496
    %v705 = vpack.c.b16 %v513, %v497
    %v706 = vpack.c.b16 %v514, %v498
    %v707 = vpack.c.b16 %v515, %v499
    %v708 = vpack.c.b16 %v516, %v500
    %v709 = vpack.c.b16 %v533, %v517
    %v710 = vpack.c.b16 %v534, %v518
    %v711 = vpack.c.b16 %v535, %v519
    %v712 = vpack.c.b16 %v536, %v520
    %v713 = vpack.c.b16 %v537, %v521
    %v714 = vpack.c.b16 %v538, %v522
    %v715 = vpack.c.b16 %v539, %v523
    %v716 = vpack.c.b16 %v540, %v524
    %v717 = vpack.c.b16 %v541, %v525
    %v718 = vpack.c.b16 %v542, %v526
    %v719 = vpack.c.b16 %v543, %v527
    %v720 = vpack.c.b16 %v544, %v528
    %v721 = vpack.c.b16 %v545, %v529
    %v722 = vpack.c.b16 %v546, %v530
    %v723 = vpack.c.b16 %v547, %v531
    %v724 = vpack.c.b16 %v548, %v532
    %v725 = vpack.c.b16 %v565, %v549
    %v726 = vpack.c.b16 %v566, %v550
    %v727 = vpack.c.b16 %v567, %v551
    %v728 = vpack.c.b16 %v568, %v552
    %v729 = vpack.c.b16 %v569, %v553
    %v730 = vpack.c.b16 %v570, %v554
    %v731 = vpack.c.b16 %v571, %v555
    %v732 = vpack.c.b16 %v572, %v556
    %v733 = vpack.c.b16 %v573, %v557
    %v734 = vpack.c.b16 %v574, %v558
    %v735 = vpack.c.b16 %v575, %v559
    %v736 = vpack.c.b16 %v576, %v560
    %v737 = vpack.c.b16 %v577, %v561
    %v738 = vpack.c.b16 %v578, %v562
    %v739 = vpack.c.b16 %v579, %v563
    %v740 = vpack.c.b16 %v580, %v564
    %v741 = vpack.c.b16 %v597, %v581
    %v742 = vpack.c.b16 %v598, %v582
    %v743 = vpack.c.b16 %v599, %v583
    %v744 = vpack.c.b16 %v600, %v584
    %v745 = vpack.c.b16 %v601, %v585
    %v746 = vpack.c.b16 %v602, %v586
    %v747 = vpack.c.b16 %v603, %v587
    %v748 = vpack.c.b16 %v604, %v588
    %v749 = vpack.c.b16 %v605, %v589
    %v750 = vpack.c.b16 %v606, %v590
    %v751 = vpack.c.b16 %v607, %v591
    %v752 = vpack.c.b16 %v608, %v592
    %v753 = vpack.c.b16 %v609, %v593
    %v754 = vpack.c.b16 %v610, %v594
    %v755 = vpack.c.b16 %v611, %v595
    %v756 = vpack.c.b16 %v612, %v596
    %v757 = vpack.c.b16 %v629, %v613
    %v758 = vpack.c.b16 %v630, %v614
    %v759 = vpack.c.b16 %v631, %v615
    %v760 = vpack.c.b16 %v632, %v616
    %v761 = vpack.c.b16 %v633, %v617
    %v762 = vpack.c.b16 %v634, %v618
    %v763 = vpack.c.b16 %v635, %v619
    %v764 = vpack.c.b16 %v636, %v620
    %v765 = vpack.c.b16 %v637, %v621
    %v766 = vpack.c.b16 %v638, %v622
    %v767 = vpack.c.b16 %v639, %v623
    %v768 = vpack.c.b16 %v640, %v624
    %v769 = vpack.c.b16 %v641, %v625
    %v770 = vpack.c.b16 %v642, %v626
    %v771 = vpack.c.b16 %v643, %v627
    %v772 = vpack.c.b16 %v644, %v628
    %901 = vmatprep.subr.bf16.mxu0 %v758
    %902 = vmatpush1.bf16.msra.mxu0 %v757
    %903 = vmatprep.subr.bf16.mxu0 %v742
    %904 = vmatpush1.bf16.msra.mxu0 %v741
    %905 = vmatprep.subr.bf16.mxu0 %v726
    %906 = vmatpush1.bf16.msra.mxu0 %v725
    %907 = vmatprep.subr.bf16.mxu0 %v710
    %908 = vmatpush1.bf16.msra.mxu0 %v709
    %909 = vmatprep.subr.bf16.mxu0 %v694
    %910 = vmatpush1.bf16.msra.mxu0 %v693
    %911 = vmatprep.subr.bf16.mxu0 %v678
    %912 = vmatpush1.bf16.msra.mxu0 %v677
    %913 = vmatprep.subr.bf16.mxu0 %v662
    %914 = vmatpush1.bf16.msra.mxu0 %v661
    %915 = vmatprep.subr.bf16.mxu0 %v646
    %916 = vmatpush1.bf16.msra.mxu0 %v645
    %917 = vmatprep.subr.bf16.mxu0 0
    %918 = vmatpush2.bf16.msra.mxu0 0
    %919 = vmatprep.subr.bf16.mxu0 0
    %920 = vmatpush2.bf16.msra.mxu0 0
    %921 = vmatprep.subr.bf16.mxu0 0
    %922 = vmatpush2.bf16.msra.mxu0 0
    %923 = vmatprep.subr.bf16.mxu0 0
    %924 = vmatpush2.bf16.msra.mxu0 0
    %925 = vmatprep.subr.bf16.mxu0 0
    %926 = vmatpush2.bf16.msra.mxu0 0
    %927 = vmatprep.subr.bf16.mxu0 0
    %928 = vmatpush2.bf16.msra.mxu0 0
    %929 = vmatprep.subr.bf16.mxu0 0
    %930 = vmatpush2.bf16.msra.mxu0 0
    %931 = vmatprep.subr.bf16.mxu0 0
    %932 = vmatpush2.bf16.msra.mxu0 0
    %933 = vmatprep.mubr.bf16.mxu0 0
    %934 = vmatmul.mubr.bf16.gmra.mxu0 %v48
    %v935 = vpop.f32.mrf.mxu0
    %v936 = vadd.f32 %v184, %v935
    %v937 = vpop.f32.mrf.mxu0
    %v938 = vadd.f32 %v188, %v937
    %v939 = vpop.f32.mrf.mxu0
    %v940 = vpop.f32.mrf.mxu0
    %941 = vdwg.mxu0
    %942 = vmatprep.subr.bf16.mxu0 %v760
    %943 = vmatpush1.bf16.msra.mxu0 %v759
    %944 = vmatprep.subr.bf16.mxu0 %v744
    %945 = vmatpush1.bf16.msra.mxu0 %v743
    %946 = vmatprep.subr.bf16.mxu0 %v728
    %947 = vmatpush1.bf16.msra.mxu0 %v727
    %948 = vmatprep.subr.bf16.mxu0 %v712
    %949 = vmatpush1.bf16.msra.mxu0 %v711
    %950 = vmatprep.subr.bf16.mxu0 %v696
    %951 = vmatpush1.bf16.msra.mxu0 %v695
    %952 = vmatprep.subr.bf16.mxu0 %v680
    %953 = vmatpush1.bf16.msra.mxu0 %v679
    %954 = vmatprep.subr.bf16.mxu0 %v664
    %955 = vmatpush1.bf16.msra.mxu0 %v663
    %956 = vmatprep.subr.bf16.mxu0 %v648
    %957 = vmatpush1.bf16.msra.mxu0 %v647
    %958 = vmatprep.subr.bf16.mxu0 0
    %959 = vmatpush2.bf16.msra.mxu0 0
    %960 = vmatprep.subr.bf16.mxu0 0
    %961 = vmatpush2.bf16.msra.mxu0 0
    %962 = vmatprep.subr.bf16.mxu0 0
    %963 = vmatpush2.bf16.msra.mxu0 0
    %964 = vmatprep.subr.bf16.mxu0 0
    %965 = vmatpush2.bf16.msra.mxu0 0
    %966 = vmatprep.subr.bf16.mxu0 0
    %967 = vmatpush2.bf16.msra.mxu0 0
    %968 = vmatprep.subr.bf16.mxu0 0
    %969 = vmatpush2.bf16.msra.mxu0 0
    %970 = vmatprep.subr.bf16.mxu0 0
    %971 = vmatpush2.bf16.msra.mxu0 0
    %972 = vmatprep.subr.bf16.mxu0 0
    %973 = vmatpush2.bf16.msra.mxu0 0
    %974 = vmatprep.mubr.bf16.mxu0 0
    %975 = vmatmul.mubr.bf16.gmra.mxu0 %v48
    %v976 = vpop.f32.mrf.mxu0
    %v977 = vadd.f32 %v192, %v976
    %v978 = vpop.f32.mrf.mxu0
    %v979 = vadd.f32 %v196, %v978
    %v980 = vpop.f32.mrf.mxu0
    %v981 = vpop.f32.mrf.mxu0
    %982 = vdwg.mxu0
    %983 = vmatprep.subr.bf16.mxu0 %v762
    %984 = vmatpush1.bf16.msra.mxu0 %v761
    %985 = vmatprep.subr.bf16.mxu0 %v746
    %986 = vmatpush1.bf16.msra.mxu0 %v745
    %987 = vmatprep.subr.bf16.mxu0 %v730
    %988 = vmatpush1.bf16.msra.mxu0 %v729
    %989 = vmatprep.subr.bf16.mxu0 %v714
    %990 = vmatpush1.bf16.msra.mxu0 %v713
    %991 = vmatprep.subr.bf16.mxu0 %v698
    %992 = vmatpush1.bf16.msra.mxu0 %v697
    %993 = vmatprep.subr.bf16.mxu0 %v682
    %994 = vmatpush1.bf16.msra.mxu0 %v681
    %995 = vmatprep.subr.bf16.mxu0 %v666
    %996 = vmatpush1.bf16.msra.mxu0 %v665
    %997 = vmatprep.subr.bf16.mxu0 %v650
    %998 = vmatpush1.bf16.msra.mxu0 %v649
    %999 = vmatprep.subr.bf16.mxu0 0
    %1000 = vmatpush2.bf16.msra.mxu0 0
    %1001 = vmatprep.subr.bf16.mxu0 0
    %1002 = vmatpush2.bf16.msra.mxu0 0
    %1003 = vmatprep.subr.bf16.mxu0 0
    %1004 = vmatpush2.bf16.msra.mxu0 0
    %1005 = vmatprep.subr.bf16.mxu0 0
    %1006 = vmatpush2.bf16.msra.mxu0 0
    %1007 = vmatprep.subr.bf16.mxu0 0
    %1008 = vmatpush2.bf16.msra.mxu0 0
    %1009 = vmatprep.subr.bf16.mxu0 0
    %1010 = vmatpush2.bf16.msra.mxu0 0
    %1011 = vmatprep.subr.bf16.mxu0 0
    %1012 = vmatpush2.bf16.msra.mxu0 0
    %1013 = vmatprep.subr.bf16.mxu0 0
    %1014 = vmatpush2.bf16.msra.mxu0 0
    %1015 = vmatprep.mubr.bf16.mxu0 0
    %1016 = vmatmul.mubr.bf16.gmra.mxu0 %v48
    %v1017 = vpop.f32.mrf.mxu0
    %v1018 = vadd.f32 %v200, %v1017
    %v1019 = vpop.f32.mrf.mxu0
    %v1020 = vadd.f32 %v204, %v1019
    %v1021 = vpop.f32.mrf.mxu0
    %v1022 = vpop.f32.mrf.mxu0
    %1023 = vdwg.mxu0
    %1024 = vmatprep.subr.bf16.mxu0 %v764
    %1025 = vmatpush1.bf16.msra.mxu0 %v763
    %1026 = vmatprep.subr.bf16.mxu0 %v748
    %1027 = vmatpush1.bf16.msra.mxu0 %v747
    %1028 = vmatprep.subr.bf16.mxu0 %v732
    %1029 = vmatpush1.bf16.msra.mxu0 %v731
    %1030 = vmatprep.subr.bf16.mxu0 %v716
    %1031 = vmatpush1.bf16.msra.mxu0 %v715
    %1032 = vmatprep.subr.bf16.mxu0 %v700
    %1033 = vmatpush1.bf16.msra.mxu0 %v699
    %1034 = vmatprep.subr.bf16.mxu0 %v684
    %1035 = vmatpush1.bf16.msra.mxu0 %v683
    %1036 = vmatprep.subr.bf16.mxu0 %v668
    %1037 = vmatpush1.bf16.msra.mxu0 %v667
    %1038 = vmatprep.subr.bf16.mxu0 %v652
    %1039 = vmatpush1.bf16.msra.mxu0 %v651
    %1040 = vmatprep.subr.bf16.mxu0 0
    %1041 = vmatpush2.bf16.msra.mxu0 0
    %1042 = vmatprep.subr.bf16.mxu0 0
    %1043 = vmatpush2.bf16.msra.mxu0 0
    %1044 = vmatprep.subr.bf16.mxu0 0
    %1045 = vmatpush2.bf16.msra.mxu0 0
    %1046 = vmatprep.subr.bf16.mxu0 0
    %1047 = vmatpush2.bf16.msra.mxu0 0
    %1048 = vmatprep.subr.bf16.mxu0 0
    %1049 = vmatpush2.bf16.msra.mxu0 0
    %1050 = vmatprep.subr.bf16.mxu0 0
    %1051 = vmatpush2.bf16.msra.mxu0 0
    %1052 = vmatprep.subr.bf16.mxu0 0
    %1053 = vmatpush2.bf16.msra.mxu0 0
    %1054 = vmatprep.subr.bf16.mxu0 0
    %1055 = vmatpush2.bf16.msra.mxu0 0
    %1056 = vmatprep.mubr.bf16.mxu0 0
    %1057 = vmatmul.mubr.bf16.gmra.mxu0 %v48
    %v1058 = vpop.f32.mrf.mxu0
    %v1059 = vadd.f32 %v208, %v1058
    %v1060 = vpop.f32.mrf.mxu0
    %v1061 = vadd.f32 %v212, %v1060
    %v1062 = vpop.f32.mrf.mxu0
    %v1063 = vpop.f32.mrf.mxu0
    %1064 = vdwg.mxu0
    %1065 = vmatprep.subr.bf16.mxu0 %v766
    %1066 = vmatpush1.bf16.msra.mxu0 %v765
    %1067 = vmatprep.subr.bf16.mxu0 %v750
    %1068 = vmatpush1.bf16.msra.mxu0 %v749
    %1069 = vmatprep.subr.bf16.mxu0 %v734
    %1070 = vmatpush1.bf16.msra.mxu0 %v733
    %1071 = vmatprep.subr.bf16.mxu0 %v718
    %1072 = vmatpush1.bf16.msra.mxu0 %v717
    %1073 = vmatprep.subr.bf16.mxu0 %v702
    %1074 = vmatpush1.bf16.msra.mxu0 %v701
    %1075 = vmatprep.subr.bf16.mxu0 %v686
    %1076 = vmatpush1.bf16.msra.mxu0 %v685
    %1077 = vmatprep.subr.bf16.mxu0 %v670
    %1078 = vmatpush1.bf16.msra.mxu0 %v669
    %1079 = vmatprep.subr.bf16.mxu0 %v654
    %1080 = vmatpush1.bf16.msra.mxu0 %v653
    %1081 = vmatprep.subr.bf16.mxu0 0
    %1082 = vmatpush2.bf16.msra.mxu0 0
    %1083 = vmatprep.subr.bf16.mxu0 0
    %1084 = vmatpush2.bf16.msra.mxu0 0
    %1085 = vmatprep.subr.bf16.mxu0 0
    %1086 = vmatpush2.bf16.msra.mxu0 0
    %1087 = vmatprep.subr.bf16.mxu0 0
    %1088 = vmatpush2.bf16.msra.mxu0 0
    %1089 = vmatprep.subr.bf16.mxu0 0
    %1090 = vmatpush2.bf16.msra.mxu0 0
    %1091 = vmatprep.subr.bf16.mxu0 0
    %1092 = vmatpush2.bf16.msra.mxu0 0
    %1093 = vmatprep.subr.bf16.mxu0 0
    %1094 = vmatpush2.bf16.msra.mxu0 0
    %1095 = vmatprep.subr.bf16.mxu0 0
    %1096 = vmatpush2.bf16.msra.mxu0 0
    %1097 = vmatprep.mubr.bf16.mxu0 0
    %1098 = vmatmul.mubr.bf16.gmra.mxu0 %v48
    %v1099 = vpop.f32.mrf.mxu0
    %v1100 = vadd.f32 %v216, %v1099
    %v1101 = vpop.f32.mrf.mxu0
    %v1102 = vadd.f32 %v220, %v1101
    %v1103 = vpop.f32.mrf.mxu0
    %v1104 = vpop.f32.mrf.mxu0
    %1105 = vdwg.mxu0
    %1106 = vmatprep.subr.bf16.mxu0 %v768
    %1107 = vmatpush1.bf16.msra.mxu0 %v767
    %1108 = vmatprep.subr.bf16.mxu0 %v752
    %1109 = vmatpush1.bf16.msra.mxu0 %v751
    %1110 = vmatprep.subr.bf16.mxu0 %v736
    %1111 = vmatpush1.bf16.msra.mxu0 %v735
    %1112 = vmatprep.subr.bf16.mxu0 %v720
    %1113 = vmatpush1.bf16.msra.mxu0 %v719
    %1114 = vmatprep.subr.bf16.mxu0 %v704
    %1115 = vmatpush1.bf16.msra.mxu0 %v703
    %1116 = vmatprep.subr.bf16.mxu0 %v688
    %1117 = vmatpush1.bf16.msra.mxu0 %v687
    %1118 = vmatprep.subr.bf16.mxu0 %v672
    %1119 = vmatpush1.bf16.msra.mxu0 %v671
    %1120 = vmatprep.subr.bf16.mxu0 %v656
    %1121 = vmatpush1.bf16.msra.mxu0 %v655
    %1122 = vmatprep.subr.bf16.mxu0 0
    %1123 = vmatpush2.bf16.msra.mxu0 0
    %1124 = vmatprep.subr.bf16.mxu0 0
    %1125 = vmatpush2.bf16.msra.mxu0 0
    %1126 = vmatprep.subr.bf16.mxu0 0
    %1127 = vmatpush2.bf16.msra.mxu0 0
    %1128 = vmatprep.subr.bf16.mxu0 0
    %1129 = vmatpush2.bf16.msra.mxu0 0
    %1130 = vmatprep.subr.bf16.mxu0 0
    %1131 = vmatpush2.bf16.msra.mxu0 0
    %1132 = vmatprep.subr.bf16.mxu0 0
    %1133 = vmatpush2.bf16.msra.mxu0 0
    %1134 = vmatprep.subr.bf16.mxu0 0
    %1135 = vmatpush2.bf16.msra.mxu0 0
    %1136 = vmatprep.subr.bf16.mxu0 0
    %1137 = vmatpush2.bf16.msra.mxu0 0
    %1138 = vmatprep.mubr.bf16.mxu0 0
    %1139 = vmatmul.mubr.bf16.gmra.mxu0 %v48
    %v1140 = vpop.f32.mrf.mxu0
    %v1141 = vadd.f32 %v224, %v1140
    %v1142 = vpop.f32.mrf.mxu0
    %v1143 = vadd.f32 %v228, %v1142
    %v1144 = vpop.f32.mrf.mxu0
    %v1145 = vpop.f32.mrf.mxu0
    %1146 = vdwg.mxu0
    %1147 = vmatprep.subr.bf16.mxu0 %v770
    %1148 = vmatpush1.bf16.msra.mxu0 %v769
    %1149 = vmatprep.subr.bf16.mxu0 %v754
    %1150 = vmatpush1.bf16.msra.mxu0 %v753
    %1151 = vmatprep.subr.bf16.mxu0 %v738
    %1152 = vmatpush1.bf16.msra.mxu0 %v737
    %1153 = vmatprep.subr.bf16.mxu0 %v722
    %1154 = vmatpush1.bf16.msra.mxu0 %v721
    %1155 = vmatprep.subr.bf16.mxu0 %v706
    %1156 = vmatpush1.bf16.msra.mxu0 %v705
    %1157 = vmatprep.subr.bf16.mxu0 %v690
    %1158 = vmatpush1.bf16.msra.mxu0 %v689
    %1159 = vmatprep.subr.bf16.mxu0 %v674
    %1160 = vmatpush1.bf16.msra.mxu0 %v673
    %1161 = vmatprep.subr.bf16.mxu0 %v658
    %1162 = vmatpush1.bf16.msra.mxu0 %v657
    %1163 = vmatprep.subr.bf16.mxu0 0
    %1164 = vmatpush2.bf16.msra.mxu0 0
    %1165 = vmatprep.subr.bf16.mxu0 0
    %1166 = vmatpush2.bf16.msra.mxu0 0
    %1167 = vmatprep.subr.bf16.mxu0 0
    %1168 = vmatpush2.bf16.msra.mxu0 0
    %1169 = vmatprep.subr.bf16.mxu0 0
    %1170 = vmatpush2.bf16.msra.mxu0 0
    %1171 = vmatprep.subr.bf16.mxu0 0
    %1172 = vmatpush2.bf16.msra.mxu0 0
    %1173 = vmatprep.subr.bf16.mxu0 0
    %1174 = vmatpush2.bf16.msra.mxu0 0
    %1175 = vmatprep.subr.bf16.mxu0 0
    %1176 = vmatpush2.bf16.msra.mxu0 0
    %1177 = vmatprep.subr.bf16.mxu0 0
    %1178 = vmatpush2.bf16.msra.mxu0 0
    %1179 = vmatprep.mubr.bf16.mxu0 0
    %1180 = vmatmul.mubr.bf16.gmra.mxu0 %v48
    %v1181 = vpop.f32.mrf.mxu0
    %v1182 = vadd.f32 %v232, %v1181
    %v1183 = vpop.f32.mrf.mxu0
    %v1184 = vadd.f32 %v236, %v1183
    %v1185 = vpop.f32.mrf.mxu0
    %v1186 = vpop.f32.mrf.mxu0
    %1187 = vdwg.mxu0
    %1188 = vmatprep.subr.bf16.mxu0 %v772
    %1189 = vmatpush1.bf16.msra.mxu0 %v771
    %1190 = vmatprep.subr.bf16.mxu0 %v756
    %1191 = vmatpush1.bf16.msra.mxu0 %v755
    %1192 = vmatprep.subr.bf16.mxu0 %v740
    %1193 = vmatpush1.bf16.msra.mxu0 %v739
    %1194 = vmatprep.subr.bf16.mxu0 %v724
    %1195 = vmatpush1.bf16.msra.mxu0 %v723
    %1196 = vmatprep.subr.bf16.mxu0 %v708
    %1197 = vmatpush1.bf16.msra.mxu0 %v707
    %1198 = vmatprep.subr.bf16.mxu0 %v692
    %1199 = vmatpush1.bf16.msra.mxu0 %v691
    %1200 = vmatprep.subr.bf16.mxu0 %v676
    %1201 = vmatpush1.bf16.msra.mxu0 %v675
    %1202 = vmatprep.subr.bf16.mxu0 %v660
    %1203 = vmatpush1.bf16.msra.mxu0 %v659
    %1204 = vmatprep.subr.bf16.mxu0 0
    %1205 = vmatpush2.bf16.msra.mxu0 0
    %1206 = vmatprep.subr.bf16.mxu0 0
    %1207 = vmatpush2.bf16.msra.mxu0 0
    %1208 = vmatprep.subr.bf16.mxu0 0
    %1209 = vmatpush2.bf16.msra.mxu0 0
    %1210 = vmatprep.subr.bf16.mxu0 0
    %1211 = vmatpush2.bf16.msra.mxu0 0
    %1212 = vmatprep.subr.bf16.mxu0 0
    %1213 = vmatpush2.bf16.msra.mxu0 0
    %1214 = vmatprep.subr.bf16.mxu0 0
    %1215 = vmatpush2.bf16.msra.mxu0 0
    %1216 = vmatprep.subr.bf16.mxu0 0
    %1217 = vmatpush2.bf16.msra.mxu0 0
    %1218 = vmatprep.subr.bf16.mxu0 0
    %1219 = vmatpush2.bf16.msra.mxu0 0
    %1220 = vmatprep.mubr.bf16.mxu0 0
    %1221 = vmatmul.mubr.bf16.gmra.mxu0 %v48
    %v1222 = vpop.f32.mrf.mxu0
    %v1223 = vadd.f32 %v240, %v1222
    %v1224 = vpop.f32.mrf.mxu0
    %v1225 = vadd.f32 %v244, %v1224
    %v1226 = vpop.f32.mrf.mxu0
    %v1227 = vpop.f32.mrf.mxu0
    %1228 = vdwg.mxu0
    %vm1229 = vcmp.gt.f32.partialorder %v936, 0.0
    %vm1230 = vcmp.gt.f32.partialorder %v938, 0.0
    %vm1231 = vcmp.gt.f32.partialorder %v977, 0.0
    %vm1232 = vcmp.gt.f32.partialorder %v979, 0.0
    %vm1233 = vcmp.gt.f32.partialorder %v1018, 0.0
    %vm1234 = vcmp.gt.f32.partialorder %v1020, 0.0
    %vm1235 = vcmp.gt.f32.partialorder %v1059, 0.0
    %vm1236 = vcmp.gt.f32.partialorder %v1061, 0.0
    %vm1237 = vcmp.gt.f32.partialorder %v1100, 0.0
    %vm1238 = vcmp.gt.f32.partialorder %v1102, 0.0
    %vm1239 = vcmp.gt.f32.partialorder %v1141, 0.0
    %vm1240 = vcmp.gt.f32.partialorder %v1143, 0.0
    %vm1241 = vcmp.gt.f32.partialorder %v1182, 0.0
    %vm1242 = vcmp.gt.f32.partialorder %v1184, 0.0
    %vm1243 = vcmp.gt.f32.partialorder %v1223, 0.0
    %vm1244 = vcmp.gt.f32.partialorder %v1225, 0.0
    %v1245 = vmul.f32 %v936, 0.2
    %v1246 = vmul.f32 %v938, 0.2
    %v1247 = vmul.f32 %v977, 0.2
    %v1248 = vmul.f32 %v979, 0.2
    %v1249 = vmul.f32 %v1018, 0.2
    %v1250 = vmul.f32 %v1020, 0.2
    %v1251 = vmul.f32 %v1059, 0.2
    %v1252 = vmul.f32 %v1061, 0.2
    %v1253 = vmul.f32 %v1100, 0.2
    %v1254 = vmul.f32 %v1102, 0.2
    %v1255 = vmul.f32 %v1141, 0.2
    %v1256 = vmul.f32 %v1143, 0.2
    %v1257 = vmul.f32 %v1182, 0.2
    %v1258 = vmul.f32 %v1184, 0.2
    %v1259 = vmul.f32 %v1223, 0.2
    %v1260 = vmul.f32 %v1225, 0.2
    %v1261 = vsel %vm1229, %v936, %v1245
    %v1262 = vsel %vm1230, %v938, %v1246
    %v1263 = vsel %vm1231, %v977, %v1247
    %v1264 = vsel %vm1232, %v979, %v1248
    %v1265 = vsel %vm1233, %v1018, %v1249
    %v1266 = vsel %vm1234, %v1020, %v1250
    %v1267 = vsel %vm1235, %v1059, %v1251
    %v1268 = vsel %vm1236, %v1061, %v1252
    %v1269 = vsel %vm1237, %v1100, %v1253
    %v1270 = vsel %vm1238, %v1102, %v1254
    %v1271 = vsel %vm1239, %v1141, %v1255
    %v1272 = vsel %vm1240, %v1143, %v1256
    %v1273 = vsel %vm1241, %v1182, %v1257
    %v1274 = vsel %vm1242, %v1184, %v1258
    %v1275 = vsel %vm1243, %v1223, %v1259
    %v1276 = vsel %vm1244, %v1225, %v1260
    %v1277 = vpack.c.bf16 %v1261, %v1261
    %v1278 = vpack.c.bf16 %v1262, %v1262
    %v1279 = vpack.c.bf16 %v1263, %v1263
    %v1280 = vpack.c.bf16 %v1264, %v1264
    %v1281 = vpack.c.bf16 %v1265, %v1265
    %v1282 = vpack.c.bf16 %v1266, %v1266
    %v1283 = vpack.c.bf16 %v1267, %v1267
    %v1284 = vpack.c.bf16 %v1268, %v1268
    %v1285 = vpack.c.bf16 %v1269, %v1269
    %v1286 = vpack.c.bf16 %v1270, %v1270
    %v1287 = vpack.c.bf16 %v1271, %v1271
    %v1288 = vpack.c.bf16 %v1272, %v1272
    %v1289 = vpack.c.bf16 %v1273, %v1273
    %v1290 = vpack.c.bf16 %v1274, %v1274
    %v1291 = vpack.c.bf16 %v1275, %v1275
    %v1292 = vpack.c.bf16 %v1276, %v1276
    %v1293 = vld [vmem:[#allocation4] sm:$0xff]
    %v1294 = vld [vmem:[#allocation4 + $0x8] sm:$0xff]
    %v1295 = vld [vmem:[#allocation4 + $0x10] sm:$0xff]
    %v1296 = vld [vmem:[#allocation4 + $0x18] sm:$0xff]
    %v1297 = vld [vmem:[#allocation4 + $0x20] sm:$0xff]
    %v1298 = vld [vmem:[#allocation4 + $0x28] sm:$0xff]
    %v1299 = vld [vmem:[#allocation4 + $0x30] sm:$0xff]
    %v1300 = vld [vmem:[#allocation4 + $0x38] sm:$0xff]
    %v1301 = vld [vmem:[#allocation4 + $0x40] sm:$0xff]
    %v1302 = vld [vmem:[#allocation4 + $0x48] sm:$0xff]
    %v1303 = vld [vmem:[#allocation4 + $0x50] sm:$0xff]
    %v1304 = vld [vmem:[#allocation4 + $0x58] sm:$0xff]
    %v1305 = vld [vmem:[#allocation4 + $0x60] sm:$0xff]
    %v1306 = vld [vmem:[#allocation4 + $0x68] sm:$0xff]
    %v1307 = vld [vmem:[#allocation4 + $0x70] sm:$0xff]
    %v1308 = vld [vmem:[#allocation4 + $0x78] sm:$0xff]
    %v1309 = vld [vmem:[#allocation4 + $0x80] sm:$0xff]
    %v1310 = vld [vmem:[#allocation4 + $0x88] sm:$0xff]
    %v1311 = vld [vmem:[#allocation4 + $0x90] sm:$0xff]
    %v1312 = vld [vmem:[#allocation4 + $0x98] sm:$0xff]
    %v1313 = vld [vmem:[#allocation4 + $0xa0] sm:$0xff]
    %v1314 = vld [vmem:[#allocation4 + $0xa8] sm:$0xff]
    %v1315 = vld [vmem:[#allocation4 + $0xb0] sm:$0xff]
    %v1316 = vld [vmem:[#allocation4 + $0xb8] sm:$0xff]
    %v1317 = vld [vmem:[#allocation4 + $0xc0] sm:$0xff]
    %v1318 = vld [vmem:[#allocation4 + $0xc8] sm:$0xff]
    %v1319 = vld [vmem:[#allocation4 + $0xd0] sm:$0xff]
    %v1320 = vld [vmem:[#allocation4 + $0xd8] sm:$0xff]
    %v1321 = vld [vmem:[#allocation4 + $0xe0] sm:$0xff]
    %v1322 = vld [vmem:[#allocation4 + $0xe8] sm:$0xff]
    %v1323 = vld [vmem:[#allocation4 + $0xf0] sm:$0xff]
    %v1324 = vld [vmem:[#allocation4 + $0xf8] sm:$0xff]
    %v1325 = vld [vmem:[#allocation4 + $0x100] sm:$0xff]
    %v1326 = vld [vmem:[#allocation4 + $0x108] sm:$0xff]
    %v1327 = vld [vmem:[#allocation4 + $0x110] sm:$0xff]
    %v1328 = vld [vmem:[#allocation4 + $0x118] sm:$0xff]
    %v1329 = vld [vmem:[#allocation4 + $0x120] sm:$0xff]
    %v1330 = vld [vmem:[#allocation4 + $0x128] sm:$0xff]
    %v1331 = vld [vmem:[#allocation4 + $0x130] sm:$0xff]
    %v1332 = vld [vmem:[#allocation4 + $0x138] sm:$0xff]
    %v1333 = vld [vmem:[#allocation4 + $0x140] sm:$0xff]
    %v1334 = vld [vmem:[#allocation4 + $0x148] sm:$0xff]
    %v1335 = vld [vmem:[#allocation4 + $0x150] sm:$0xff]
    %v1336 = vld [vmem:[#allocation4 + $0x158] sm:$0xff]
    %v1337 = vld [vmem:[#allocation4 + $0x160] sm:$0xff]
    %v1338 = vld [vmem:[#allocation4 + $0x168] sm:$0xff]
    %v1339 = vld [vmem:[#allocation4 + $0x170] sm:$0xff]
    %v1340 = vld [vmem:[#allocation4 + $0x178] sm:$0xff]
    %v1341 = vld [vmem:[#allocation4 + $0x180] sm:$0xff]
    %v1342 = vld [vmem:[#allocation4 + $0x188] sm:$0xff]
    %v1343 = vld [vmem:[#allocation4 + $0x190] sm:$0xff]
    %v1344 = vld [vmem:[#allocation4 + $0x198] sm:$0xff]
    %v1345 = vld [vmem:[#allocation4 + $0x1a0] sm:$0xff]
    %v1346 = vld [vmem:[#allocation4 + $0x1a8] sm:$0xff]
    %v1347 = vld [vmem:[#allocation4 + $0x1b0] sm:$0xff]
    %v1348 = vld [vmem:[#allocation4 + $0x1b8] sm:$0xff]
    %v1349 = vld [vmem:[#allocation4 + $0x1c0] sm:$0xff]
    %v1350 = vld [vmem:[#allocation4 + $0x1c8] sm:$0xff]
    %v1351 = vld [vmem:[#allocation4 + $0x1d0] sm:$0xff]
    %v1352 = vld [vmem:[#allocation4 + $0x1d8] sm:$0xff]
    %v1353 = vld [vmem:[#allocation4 + $0x1e0] sm:$0xff]
    %v1354 = vld [vmem:[#allocation4 + $0x1e8] sm:$0xff]
    %v1355 = vld [vmem:[#allocation4 + $0x1f0] sm:$0xff]
    %v1356 = vld [vmem:[#allocation4 + $0x1f8] sm:$0xff]
    %v1357 = vld [vmem:[#allocation4 + $0x200] sm:$0xff]
    %v1358 = vld [vmem:[#allocation4 + $0x208] sm:$0xff]
    %v1359 = vld [vmem:[#allocation4 + $0x210] sm:$0xff]
    %v1360 = vld [vmem:[#allocation4 + $0x218] sm:$0xff]
    %v1361 = vld [vmem:[#allocation4 + $0x220] sm:$0xff]
    %v1362 = vld [vmem:[#allocation4 + $0x228] sm:$0xff]
    %v1363 = vld [vmem:[#allocation4 + $0x230] sm:$0xff]
    %v1364 = vld [vmem:[#allocation4 + $0x238] sm:$0xff]
    %v1365 = vld [vmem:[#allocation4 + $0x240] sm:$0xff]
    %v1366 = vld [vmem:[#allocation4 + $0x248] sm:$0xff]
    %v1367 = vld [vmem:[#allocation4 + $0x250] sm:$0xff]
    %v1368 = vld [vmem:[#allocation4 + $0x258] sm:$0xff]
    %v1369 = vld [vmem:[#allocation4 + $0x260] sm:$0xff]
    %v1370 = vld [vmem:[#allocation4 + $0x268] sm:$0xff]
    %v1371 = vld [vmem:[#allocation4 + $0x270] sm:$0xff]
    %v1372 = vld [vmem:[#allocation4 + $0x278] sm:$0xff]
    %v1373 = vld [vmem:[#allocation4 + $0x280] sm:$0xff]
    %v1374 = vld [vmem:[#allocation4 + $0x288] sm:$0xff]
    %v1375 = vld [vmem:[#allocation4 + $0x290] sm:$0xff]
    %v1376 = vld [vmem:[#allocation4 + $0x298] sm:$0xff]
    %v1377 = vld [vmem:[#allocation4 + $0x2a0] sm:$0xff]
    %v1378 = vld [vmem:[#allocation4 + $0x2a8] sm:$0xff]
    %v1379 = vld [vmem:[#allocation4 + $0x2b0] sm:$0xff]
    %v1380 = vld [vmem:[#allocation4 + $0x2b8] sm:$0xff]
    %v1381 = vld [vmem:[#allocation4 + $0x2c0] sm:$0xff]
    %v1382 = vld [vmem:[#allocation4 + $0x2c8] sm:$0xff]
    %v1383 = vld [vmem:[#allocation4 + $0x2d0] sm:$0xff]
    %v1384 = vld [vmem:[#allocation4 + $0x2d8] sm:$0xff]
    %v1385 = vld [vmem:[#allocation4 + $0x2e0] sm:$0xff]
    %v1386 = vld [vmem:[#allocation4 + $0x2e8] sm:$0xff]
    %v1387 = vld [vmem:[#allocation4 + $0x2f0] sm:$0xff]
    %v1388 = vld [vmem:[#allocation4 + $0x2f8] sm:$0xff]
    %v1389 = vld [vmem:[#allocation4 + $0x300] sm:$0xff]
    %v1390 = vld [vmem:[#allocation4 + $0x308] sm:$0xff]
    %v1391 = vld [vmem:[#allocation4 + $0x310] sm:$0xff]
    %v1392 = vld [vmem:[#allocation4 + $0x318] sm:$0xff]
    %v1393 = vld [vmem:[#allocation4 + $0x320] sm:$0xff]
    %v1394 = vld [vmem:[#allocation4 + $0x328] sm:$0xff]
    %v1395 = vld [vmem:[#allocation4 + $0x330] sm:$0xff]
    %v1396 = vld [vmem:[#allocation4 + $0x338] sm:$0xff]
    %v1397 = vld [vmem:[#allocation4 + $0x340] sm:$0xff]
    %v1398 = vld [vmem:[#allocation4 + $0x348] sm:$0xff]
    %v1399 = vld [vmem:[#allocation4 + $0x350] sm:$0xff]
    %v1400 = vld [vmem:[#allocation4 + $0x358] sm:$0xff]
    %v1401 = vld [vmem:[#allocation4 + $0x360] sm:$0xff]
    %v1402 = vld [vmem:[#allocation4 + $0x368] sm:$0xff]
    %v1403 = vld [vmem:[#allocation4 + $0x370] sm:$0xff]
    %v1404 = vld [vmem:[#allocation4 + $0x378] sm:$0xff]
    %v1405 = vld [vmem:[#allocation4 + $0x380] sm:$0xff]
    %v1406 = vld [vmem:[#allocation4 + $0x388] sm:$0xff]
    %v1407 = vld [vmem:[#allocation4 + $0x390] sm:$0xff]
    %v1408 = vld [vmem:[#allocation4 + $0x398] sm:$0xff]
    %v1409 = vld [vmem:[#allocation4 + $0x3a0] sm:$0xff]
    %v1410 = vld [vmem:[#allocation4 + $0x3a8] sm:$0xff]
    %v1411 = vld [vmem:[#allocation4 + $0x3b0] sm:$0xff]
    %v1412 = vld [vmem:[#allocation4 + $0x3b8] sm:$0xff]
    %v1413 = vld [vmem:[#allocation4 + $0x3c0] sm:$0xff]
    %v1414 = vld [vmem:[#allocation4 + $0x3c8] sm:$0xff]
    %v1415 = vld [vmem:[#allocation4 + $0x3d0] sm:$0xff]
    %v1416 = vld [vmem:[#allocation4 + $0x3d8] sm:$0xff]
    %v1417 = vld [vmem:[#allocation4 + $0x3e0] sm:$0xff]
    %v1418 = vld [vmem:[#allocation4 + $0x3e8] sm:$0xff]
    %v1419 = vld [vmem:[#allocation4 + $0x3f0] sm:$0xff]
    %v1420 = vld [vmem:[#allocation4 + $0x3f8] sm:$0xff]
    %v1421 = vld [vmem:[#allocation4 + $0x400] sm:$0xff]
    %v1422 = vld [vmem:[#allocation4 + $0x408] sm:$0xff]
    %v1423 = vld [vmem:[#allocation4 + $0x410] sm:$0xff]
    %v1424 = vld [vmem:[#allocation4 + $0x418] sm:$0xff]
    %v1425 = vld [vmem:[#allocation4 + $0x420] sm:$0xff]
    %v1426 = vld [vmem:[#allocation4 + $0x428] sm:$0xff]
    %v1427 = vld [vmem:[#allocation4 + $0x430] sm:$0xff]
    %v1428 = vld [vmem:[#allocation4 + $0x438] sm:$0xff]
    %v1429 = vld [vmem:[#allocation4 + $0x440] sm:$0xff]
    %v1430 = vld [vmem:[#allocation4 + $0x448] sm:$0xff]
    %v1431 = vld [vmem:[#allocation4 + $0x450] sm:$0xff]
    %v1432 = vld [vmem:[#allocation4 + $0x458] sm:$0xff]
    %v1433 = vld [vmem:[#allocation4 + $0x460] sm:$0xff]
    %v1434 = vld [vmem:[#allocation4 + $0x468] sm:$0xff]
    %v1435 = vld [vmem:[#allocation4 + $0x470] sm:$0xff]
    %v1436 = vld [vmem:[#allocation4 + $0x478] sm:$0xff]
    %v1437 = vld [vmem:[#allocation4 + $0x480] sm:$0xff]
    %v1438 = vld [vmem:[#allocation4 + $0x488] sm:$0xff]
    %v1439 = vld [vmem:[#allocation4 + $0x490] sm:$0xff]
    %v1440 = vld [vmem:[#allocation4 + $0x498] sm:$0xff]
    %v1441 = vld [vmem:[#allocation4 + $0x4a0] sm:$0xff]
    %v1442 = vld [vmem:[#allocation4 + $0x4a8] sm:$0xff]
    %v1443 = vld [vmem:[#allocation4 + $0x4b0] sm:$0xff]
    %v1444 = vld [vmem:[#allocation4 + $0x4b8] sm:$0xff]
    %v1445 = vld [vmem:[#allocation4 + $0x4c0] sm:$0xff]
    %v1446 = vld [vmem:[#allocation4 + $0x4c8] sm:$0xff]
    %v1447 = vld [vmem:[#allocation4 + $0x4d0] sm:$0xff]
    %v1448 = vld [vmem:[#allocation4 + $0x4d8] sm:$0xff]
    %v1449 = vld [vmem:[#allocation4 + $0x4e0] sm:$0xff]
    %v1450 = vld [vmem:[#allocation4 + $0x4e8] sm:$0xff]
    %v1451 = vld [vmem:[#allocation4 + $0x4f0] sm:$0xff]
    %v1452 = vld [vmem:[#allocation4 + $0x4f8] sm:$0xff]
    %v1453 = vld [vmem:[#allocation4 + $0x500] sm:$0xff]
    %v1454 = vld [vmem:[#allocation4 + $0x508] sm:$0xff]
    %v1455 = vld [vmem:[#allocation4 + $0x510] sm:$0xff]
    %v1456 = vld [vmem:[#allocation4 + $0x518] sm:$0xff]
    %v1457 = vld [vmem:[#allocation4 + $0x520] sm:$0xff]
    %v1458 = vld [vmem:[#allocation4 + $0x528] sm:$0xff]
    %v1459 = vld [vmem:[#allocation4 + $0x530] sm:$0xff]
    %v1460 = vld [vmem:[#allocation4 + $0x538] sm:$0xff]
    %v1461 = vld [vmem:[#allocation4 + $0x540] sm:$0xff]
    %v1462 = vld [vmem:[#allocation4 + $0x548] sm:$0xff]
    %v1463 = vld [vmem:[#allocation4 + $0x550] sm:$0xff]
    %v1464 = vld [vmem:[#allocation4 + $0x558] sm:$0xff]
    %v1465 = vld [vmem:[#allocation4 + $0x560] sm:$0xff]
    %v1466 = vld [vmem:[#allocation4 + $0x568] sm:$0xff]
    %v1467 = vld [vmem:[#allocation4 + $0x570] sm:$0xff]
    %v1468 = vld [vmem:[#allocation4 + $0x578] sm:$0xff]
    %v1469 = vld [vmem:[#allocation4 + $0x580] sm:$0xff]
    %v1470 = vld [vmem:[#allocation4 + $0x588] sm:$0xff]
    %v1471 = vld [vmem:[#allocation4 + $0x590] sm:$0xff]
    %v1472 = vld [vmem:[#allocation4 + $0x598] sm:$0xff]
    %v1473 = vld [vmem:[#allocation4 + $0x5a0] sm:$0xff]
    %v1474 = vld [vmem:[#allocation4 + $0x5a8] sm:$0xff]
    %v1475 = vld [vmem:[#allocation4 + $0x5b0] sm:$0xff]
    %v1476 = vld [vmem:[#allocation4 + $0x5b8] sm:$0xff]
    %v1477 = vld [vmem:[#allocation4 + $0x5c0] sm:$0xff]
    %v1478 = vld [vmem:[#allocation4 + $0x5c8] sm:$0xff]
    %v1479 = vld [vmem:[#allocation4 + $0x5d0] sm:$0xff]
    %v1480 = vld [vmem:[#allocation4 + $0x5d8] sm:$0xff]
    %v1481 = vld [vmem:[#allocation4 + $0x5e0] sm:$0xff]
    %v1482 = vld [vmem:[#allocation4 + $0x5e8] sm:$0xff]
    %v1483 = vld [vmem:[#allocation4 + $0x5f0] sm:$0xff]
    %v1484 = vld [vmem:[#allocation4 + $0x5f8] sm:$0xff]
    %v1485 = vld [vmem:[#allocation4 + $0x600] sm:$0xff]
    %v1486 = vld [vmem:[#allocation4 + $0x608] sm:$0xff]
    %v1487 = vld [vmem:[#allocation4 + $0x610] sm:$0xff]
    %v1488 = vld [vmem:[#allocation4 + $0x618] sm:$0xff]
    %v1489 = vld [vmem:[#allocation4 + $0x620] sm:$0xff]
    %v1490 = vld [vmem:[#allocation4 + $0x628] sm:$0xff]
    %v1491 = vld [vmem:[#allocation4 + $0x630] sm:$0xff]
    %v1492 = vld [vmem:[#allocation4 + $0x638] sm:$0xff]
    %v1493 = vld [vmem:[#allocation4 + $0x640] sm:$0xff]
    %v1494 = vld [vmem:[#allocation4 + $0x648] sm:$0xff]
    %v1495 = vld [vmem:[#allocation4 + $0x650] sm:$0xff]
    %v1496 = vld [vmem:[#allocation4 + $0x658] sm:$0xff]
    %v1497 = vld [vmem:[#allocation4 + $0x660] sm:$0xff]
    %v1498 = vld [vmem:[#allocation4 + $0x668] sm:$0xff]
    %v1499 = vld [vmem:[#allocation4 + $0x670] sm:$0xff]
    %v1500 = vld [vmem:[#allocation4 + $0x678] sm:$0xff]
    %v1501 = vld [vmem:[#allocation4 + $0x680] sm:$0xff]
    %v1502 = vld [vmem:[#allocation4 + $0x688] sm:$0xff]
    %v1503 = vld [vmem:[#allocation4 + $0x690] sm:$0xff]
    %v1504 = vld [vmem:[#allocation4 + $0x698] sm:$0xff]
    %v1505 = vld [vmem:[#allocation4 + $0x6a0] sm:$0xff]
    %v1506 = vld [vmem:[#allocation4 + $0x6a8] sm:$0xff]
    %v1507 = vld [vmem:[#allocation4 + $0x6b0] sm:$0xff]
    %v1508 = vld [vmem:[#allocation4 + $0x6b8] sm:$0xff]
    %v1509 = vld [vmem:[#allocation4 + $0x6c0] sm:$0xff]
    %v1510 = vld [vmem:[#allocation4 + $0x6c8] sm:$0xff]
    %v1511 = vld [vmem:[#allocation4 + $0x6d0] sm:$0xff]
    %v1512 = vld [vmem:[#allocation4 + $0x6d8] sm:$0xff]
    %v1513 = vld [vmem:[#allocation4 + $0x6e0] sm:$0xff]
    %v1514 = vld [vmem:[#allocation4 + $0x6e8] sm:$0xff]
    %v1515 = vld [vmem:[#allocation4 + $0x6f0] sm:$0xff]
    %v1516 = vld [vmem:[#allocation4 + $0x6f8] sm:$0xff]
    %v1517 = vld [vmem:[#allocation4 + $0x700] sm:$0xff]
    %v1518 = vld [vmem:[#allocation4 + $0x708] sm:$0xff]
    %v1519 = vld [vmem:[#allocation4 + $0x710] sm:$0xff]
    %v1520 = vld [vmem:[#allocation4 + $0x718] sm:$0xff]
    %v1521 = vld [vmem:[#allocation4 + $0x720] sm:$0xff]
    %v1522 = vld [vmem:[#allocation4 + $0x728] sm:$0xff]
    %v1523 = vld [vmem:[#allocation4 + $0x730] sm:$0xff]
    %v1524 = vld [vmem:[#allocation4 + $0x738] sm:$0xff]
    %v1525 = vld [vmem:[#allocation4 + $0x740] sm:$0xff]
    %v1526 = vld [vmem:[#allocation4 + $0x748] sm:$0xff]
    %v1527 = vld [vmem:[#allocation4 + $0x750] sm:$0xff]
    %v1528 = vld [vmem:[#allocation4 + $0x758] sm:$0xff]
    %v1529 = vld [vmem:[#allocation4 + $0x760] sm:$0xff]
    %v1530 = vld [vmem:[#allocation4 + $0x768] sm:$0xff]
    %v1531 = vld [vmem:[#allocation4 + $0x770] sm:$0xff]
    %v1532 = vld [vmem:[#allocation4 + $0x778] sm:$0xff]
    %v1533 = vld [vmem:[#allocation4 + $0x780] sm:$0xff]
    %v1534 = vld [vmem:[#allocation4 + $0x788] sm:$0xff]
    %v1535 = vld [vmem:[#allocation4 + $0x790] sm:$0xff]
    %v1536 = vld [vmem:[#allocation4 + $0x798] sm:$0xff]
    %v1537 = vld [vmem:[#allocation4 + $0x7a0] sm:$0xff]
    %v1538 = vld [vmem:[#allocation4 + $0x7a8] sm:$0xff]
    %v1539 = vld [vmem:[#allocation4 + $0x7b0] sm:$0xff]
    %v1540 = vld [vmem:[#allocation4 + $0x7b8] sm:$0xff]
    %v1541 = vld [vmem:[#allocation4 + $0x7c0] sm:$0xff]
    %v1542 = vld [vmem:[#allocation4 + $0x7c8] sm:$0xff]
    %v1543 = vld [vmem:[#allocation4 + $0x7d0] sm:$0xff]
    %v1544 = vld [vmem:[#allocation4 + $0x7d8] sm:$0xff]
    %v1545 = vld [vmem:[#allocation4 + $0x7e0] sm:$0xff]
    %v1546 = vld [vmem:[#allocation4 + $0x7e8] sm:$0xff]
    %v1547 = vld [vmem:[#allocation4 + $0x7f0] sm:$0xff]
    %v1548 = vld [vmem:[#allocation4 + $0x7f8] sm:$0xff]
    %v1549 = vld [vmem:[#allocation4 + $0x800] sm:$0xff]
    %v1550 = vld [vmem:[#allocation4 + $0x808] sm:$0xff]
    %v1551 = vld [vmem:[#allocation4 + $0x810] sm:$0xff]
    %v1552 = vld [vmem:[#allocation4 + $0x818] sm:$0xff]
    %v1553 = vld [vmem:[#allocation4 + $0x820] sm:$0xff]
    %v1554 = vld [vmem:[#allocation4 + $0x828] sm:$0xff]
    %v1555 = vld [vmem:[#allocation4 + $0x830] sm:$0xff]
    %v1556 = vld [vmem:[#allocation4 + $0x838] sm:$0xff]
    %v1557 = vld [vmem:[#allocation4 + $0x840] sm:$0xff]
    %v1558 = vld [vmem:[#allocation4 + $0x848] sm:$0xff]
    %v1559 = vld [vmem:[#allocation4 + $0x850] sm:$0xff]
    %v1560 = vld [vmem:[#allocation4 + $0x858] sm:$0xff]
    %v1561 = vld [vmem:[#allocation4 + $0x860] sm:$0xff]
    %v1562 = vld [vmem:[#allocation4 + $0x868] sm:$0xff]
    %v1563 = vld [vmem:[#allocation4 + $0x870] sm:$0xff]
    %v1564 = vld [vmem:[#allocation4 + $0x878] sm:$0xff]
    %v1565 = vld [vmem:[#allocation4 + $0x880] sm:$0xff]
    %v1566 = vld [vmem:[#allocation4 + $0x888] sm:$0xff]
    %v1567 = vld [vmem:[#allocation4 + $0x890] sm:$0xff]
    %v1568 = vld [vmem:[#allocation4 + $0x898] sm:$0xff]
    %v1569 = vld [vmem:[#allocation4 + $0x8a0] sm:$0xff]
    %v1570 = vld [vmem:[#allocation4 + $0x8a8] sm:$0xff]
    %v1571 = vld [vmem:[#allocation4 + $0x8b0] sm:$0xff]
    %v1572 = vld [vmem:[#allocation4 + $0x8b8] sm:$0xff]
    %v1573 = vld [vmem:[#allocation4 + $0x8c0] sm:$0xff]
    %v1574 = vld [vmem:[#allocation4 + $0x8c8] sm:$0xff]
    %v1575 = vld [vmem:[#allocation4 + $0x8d0] sm:$0xff]
    %v1576 = vld [vmem:[#allocation4 + $0x8d8] sm:$0xff]
    %v1577 = vld [vmem:[#allocation4 + $0x8e0] sm:$0xff]
    %v1578 = vld [vmem:[#allocation4 + $0x8e8] sm:$0xff]
    %v1579 = vld [vmem:[#allocation4 + $0x8f0] sm:$0xff]
    %v1580 = vld [vmem:[#allocation4 + $0x8f8] sm:$0xff]
    %v1581 = vld [vmem:[#allocation4 + $0x900] sm:$0xff]
    %v1582 = vld [vmem:[#allocation4 + $0x908] sm:$0xff]
    %v1583 = vld [vmem:[#allocation4 + $0x910] sm:$0xff]
    %v1584 = vld [vmem:[#allocation4 + $0x918] sm:$0xff]
    %v1585 = vld [vmem:[#allocation4 + $0x920] sm:$0xff]
    %v1586 = vld [vmem:[#allocation4 + $0x928] sm:$0xff]
    %v1587 = vld [vmem:[#allocation4 + $0x930] sm:$0xff]
    %v1588 = vld [vmem:[#allocation4 + $0x938] sm:$0xff]
    %v1589 = vld [vmem:[#allocation4 + $0x940] sm:$0xff]
    %v1590 = vld [vmem:[#allocation4 + $0x948] sm:$0xff]
    %v1591 = vld [vmem:[#allocation4 + $0x950] sm:$0xff]
    %v1592 = vld [vmem:[#allocation4 + $0x958] sm:$0xff]
    %v1593 = vld [vmem:[#allocation4 + $0x960] sm:$0xff]
    %v1594 = vld [vmem:[#allocation4 + $0x968] sm:$0xff]
    %v1595 = vld [vmem:[#allocation4 + $0x970] sm:$0xff]
    %v1596 = vld [vmem:[#allocation4 + $0x978] sm:$0xff]
    %v1597 = vld [vmem:[#allocation4 + $0x980] sm:$0xff]
    %v1598 = vld [vmem:[#allocation4 + $0x988] sm:$0xff]
    %v1599 = vld [vmem:[#allocation4 + $0x990] sm:$0xff]
    %v1600 = vld [vmem:[#allocation4 + $0x998] sm:$0xff]
    %v1601 = vld [vmem:[#allocation4 + $0x9a0] sm:$0xff]
    %v1602 = vld [vmem:[#allocation4 + $0x9a8] sm:$0xff]
    %v1603 = vld [vmem:[#allocation4 + $0x9b0] sm:$0xff]
    %v1604 = vld [vmem:[#allocation4 + $0x9b8] sm:$0xff]
    %v1605 = vld [vmem:[#allocation4 + $0x9c0] sm:$0xff]
    %v1606 = vld [vmem:[#allocation4 + $0x9c8] sm:$0xff]
    %v1607 = vld [vmem:[#allocation4 + $0x9d0] sm:$0xff]
    %v1608 = vld [vmem:[#allocation4 + $0x9d8] sm:$0xff]
    %v1609 = vld [vmem:[#allocation4 + $0x9e0] sm:$0xff]
    %v1610 = vld [vmem:[#allocation4 + $0x9e8] sm:$0xff]
    %v1611 = vld [vmem:[#allocation4 + $0x9f0] sm:$0xff]
    %v1612 = vld [vmem:[#allocation4 + $0x9f8] sm:$0xff]
    %v1613 = vld [vmem:[#allocation4 + $0xa00] sm:$0xff]
    %v1614 = vld [vmem:[#allocation4 + $0xa08] sm:$0xff]
    %v1615 = vld [vmem:[#allocation4 + $0xa10] sm:$0xff]
    %v1616 = vld [vmem:[#allocation4 + $0xa18] sm:$0xff]
    %v1617 = vld [vmem:[#allocation4 + $0xa20] sm:$0xff]
    %v1618 = vld [vmem:[#allocation4 + $0xa28] sm:$0xff]
    %v1619 = vld [vmem:[#allocation4 + $0xa30] sm:$0xff]
    %v1620 = vld [vmem:[#allocation4 + $0xa38] sm:$0xff]
    %v1621 = vld [vmem:[#allocation4 + $0xa40] sm:$0xff]
    %v1622 = vld [vmem:[#allocation4 + $0xa48] sm:$0xff]
    %v1623 = vld [vmem:[#allocation4 + $0xa50] sm:$0xff]
    %v1624 = vld [vmem:[#allocation4 + $0xa58] sm:$0xff]
    %v1625 = vld [vmem:[#allocation4 + $0xa60] sm:$0xff]
    %v1626 = vld [vmem:[#allocation4 + $0xa68] sm:$0xff]
    %v1627 = vld [vmem:[#allocation4 + $0xa70] sm:$0xff]
    %v1628 = vld [vmem:[#allocation4 + $0xa78] sm:$0xff]
    %v1629 = vld [vmem:[#allocation4 + $0xa80] sm:$0xff]
    %v1630 = vld [vmem:[#allocation4 + $0xa88] sm:$0xff]
    %v1631 = vld [vmem:[#allocation4 + $0xa90] sm:$0xff]
    %v1632 = vld [vmem:[#allocation4 + $0xa98] sm:$0xff]
    %v1633 = vld [vmem:[#allocation4 + $0xaa0] sm:$0xff]
    %v1634 = vld [vmem:[#allocation4 + $0xaa8] sm:$0xff]
    %v1635 = vld [vmem:[#allocation4 + $0xab0] sm:$0xff]
    %v1636 = vld [vmem:[#allocation4 + $0xab8] sm:$0xff]
    %v1637 = vld [vmem:[#allocation4 + $0xac0] sm:$0xff]
    %v1638 = vld [vmem:[#allocation4 + $0xac8] sm:$0xff]
    %v1639 = vld [vmem:[#allocation4 + $0xad0] sm:$0xff]
    %v1640 = vld [vmem:[#allocation4 + $0xad8] sm:$0xff]
    %v1641 = vld [vmem:[#allocation4 + $0xae0] sm:$0xff]
    %v1642 = vld [vmem:[#allocation4 + $0xae8] sm:$0xff]
    %v1643 = vld [vmem:[#allocation4 + $0xaf0] sm:$0xff]
    %v1644 = vld [vmem:[#allocation4 + $0xaf8] sm:$0xff]
    %v1645 = vld [vmem:[#allocation4 + $0xb00] sm:$0xff]
    %v1646 = vld [vmem:[#allocation4 + $0xb08] sm:$0xff]
    %v1647 = vld [vmem:[#allocation4 + $0xb10] sm:$0xff]
    %v1648 = vld [vmem:[#allocation4 + $0xb18] sm:$0xff]
    %v1649 = vld [vmem:[#allocation4 + $0xb20] sm:$0xff]
    %v1650 = vld [vmem:[#allocation4 + $0xb28] sm:$0xff]
    %v1651 = vld [vmem:[#allocation4 + $0xb30] sm:$0xff]
    %v1652 = vld [vmem:[#allocation4 + $0xb38] sm:$0xff]
    %v1653 = vld [vmem:[#allocation4 + $0xb40] sm:$0xff]
    %v1654 = vld [vmem:[#allocation4 + $0xb48] sm:$0xff]
    %v1655 = vld [vmem:[#allocation4 + $0xb50] sm:$0xff]
    %v1656 = vld [vmem:[#allocation4 + $0xb58] sm:$0xff]
    %v1657 = vld [vmem:[#allocation4 + $0xb60] sm:$0xff]
    %v1658 = vld [vmem:[#allocation4 + $0xb68] sm:$0xff]
    %v1659 = vld [vmem:[#allocation4 + $0xb70] sm:$0xff]
    %v1660 = vld [vmem:[#allocation4 + $0xb78] sm:$0xff]
    %v1661 = vld [vmem:[#allocation4 + $0xb80] sm:$0xff]
    %v1662 = vld [vmem:[#allocation4 + $0xb88] sm:$0xff]
    %v1663 = vld [vmem:[#allocation4 + $0xb90] sm:$0xff]
    %v1664 = vld [vmem:[#allocation4 + $0xb98] sm:$0xff]
    %v1665 = vld [vmem:[#allocation4 + $0xba0] sm:$0xff]
    %v1666 = vld [vmem:[#allocation4 + $0xba8] sm:$0xff]
    %v1667 = vld [vmem:[#allocation4 + $0xbb0] sm:$0xff]
    %v1668 = vld [vmem:[#allocation4 + $0xbb8] sm:$0xff]
    %v1669 = vld [vmem:[#allocation4 + $0xbc0] sm:$0xff]
    %v1670 = vld [vmem:[#allocation4 + $0xbc8] sm:$0xff]
    %v1671 = vld [vmem:[#allocation4 + $0xbd0] sm:$0xff]
    %v1672 = vld [vmem:[#allocation4 + $0xbd8] sm:$0xff]
    %v1673 = vld [vmem:[#allocation4 + $0xbe0] sm:$0xff]
    %v1674 = vld [vmem:[#allocation4 + $0xbe8] sm:$0xff]
    %v1675 = vld [vmem:[#allocation4 + $0xbf0] sm:$0xff]
    %v1676 = vld [vmem:[#allocation4 + $0xbf8] sm:$0xff]
    %v1677 = vld [vmem:[#allocation4 + $0xc00] sm:$0xff]
    %v1678 = vld [vmem:[#allocation4 + $0xc08] sm:$0xff]
    %v1679 = vld [vmem:[#allocation4 + $0xc10] sm:$0xff]
    %v1680 = vld [vmem:[#allocation4 + $0xc18] sm:$0xff]
    %v1681 = vld [vmem:[#allocation4 + $0xc20] sm:$0xff]
    %v1682 = vld [vmem:[#allocation4 + $0xc28] sm:$0xff]
    %v1683 = vld [vmem:[#allocation4 + $0xc30] sm:$0xff]
    %v1684 = vld [vmem:[#allocation4 + $0xc38] sm:$0xff]
    %v1685 = vld [vmem:[#allocation4 + $0xc40] sm:$0xff]
    %v1686 = vld [vmem:[#allocation4 + $0xc48] sm:$0xff]
    %v1687 = vld [vmem:[#allocation4 + $0xc50] sm:$0xff]
    %v1688 = vld [vmem:[#allocation4 + $0xc58] sm:$0xff]
    %v1689 = vld [vmem:[#allocation4 + $0xc60] sm:$0xff]
    %v1690 = vld [vmem:[#allocation4 + $0xc68] sm:$0xff]
    %v1691 = vld [vmem:[#allocation4 + $0xc70] sm:$0xff]
    %v1692 = vld [vmem:[#allocation4 + $0xc78] sm:$0xff]
    %v1693 = vld [vmem:[#allocation4 + $0xc80] sm:$0xff]
    %v1694 = vld [vmem:[#allocation4 + $0xc88] sm:$0xff]
    %v1695 = vld [vmem:[#allocation4 + $0xc90] sm:$0xff]
    %v1696 = vld [vmem:[#allocation4 + $0xc98] sm:$0xff]
    %v1697 = vld [vmem:[#allocation4 + $0xca0] sm:$0xff]
    %v1698 = vld [vmem:[#allocation4 + $0xca8] sm:$0xff]
    %v1699 = vld [vmem:[#allocation4 + $0xcb0] sm:$0xff]
    %v1700 = vld [vmem:[#allocation4 + $0xcb8] sm:$0xff]
    %v1701 = vld [vmem:[#allocation4 + $0xcc0] sm:$0xff]
    %v1702 = vld [vmem:[#allocation4 + $0xcc8] sm:$0xff]
    %v1703 = vld [vmem:[#allocation4 + $0xcd0] sm:$0xff]
    %v1704 = vld [vmem:[#allocation4 + $0xcd8] sm:$0xff]
    %v1705 = vld [vmem:[#allocation4 + $0xce0] sm:$0xff]
    %v1706 = vld [vmem:[#allocation4 + $0xce8] sm:$0xff]
    %v1707 = vld [vmem:[#allocation4 + $0xcf0] sm:$0xff]
    %v1708 = vld [vmem:[#allocation4 + $0xcf8] sm:$0xff]
    %v1709 = vld [vmem:[#allocation4 + $0xd00] sm:$0xff]
    %v1710 = vld [vmem:[#allocation4 + $0xd08] sm:$0xff]
    %v1711 = vld [vmem:[#allocation4 + $0xd10] sm:$0xff]
    %v1712 = vld [vmem:[#allocation4 + $0xd18] sm:$0xff]
    %v1713 = vld [vmem:[#allocation4 + $0xd20] sm:$0xff]
    %v1714 = vld [vmem:[#allocation4 + $0xd28] sm:$0xff]
    %v1715 = vld [vmem:[#allocation4 + $0xd30] sm:$0xff]
    %v1716 = vld [vmem:[#allocation4 + $0xd38] sm:$0xff]
    %v1717 = vld [vmem:[#allocation4 + $0xd40] sm:$0xff]
    %v1718 = vld [vmem:[#allocation4 + $0xd48] sm:$0xff]
    %v1719 = vld [vmem:[#allocation4 + $0xd50] sm:$0xff]
    %v1720 = vld [vmem:[#allocation4 + $0xd58] sm:$0xff]
    %v1721 = vld [vmem:[#allocation4 + $0xd60] sm:$0xff]
    %v1722 = vld [vmem:[#allocation4 + $0xd68] sm:$0xff]
    %v1723 = vld [vmem:[#allocation4 + $0xd70] sm:$0xff]
    %v1724 = vld [vmem:[#allocation4 + $0xd78] sm:$0xff]
    %v1725 = vld [vmem:[#allocation4 + $0xd80] sm:$0xff]
    %v1726 = vld [vmem:[#allocation4 + $0xd88] sm:$0xff]
    %v1727 = vld [vmem:[#allocation4 + $0xd90] sm:$0xff]
    %v1728 = vld [vmem:[#allocation4 + $0xd98] sm:$0xff]
    %v1729 = vld [vmem:[#allocation4 + $0xda0] sm:$0xff]
    %v1730 = vld [vmem:[#allocation4 + $0xda8] sm:$0xff]
    %v1731 = vld [vmem:[#allocation4 + $0xdb0] sm:$0xff]
    %v1732 = vld [vmem:[#allocation4 + $0xdb8] sm:$0xff]
    %v1733 = vld [vmem:[#allocation4 + $0xdc0] sm:$0xff]
    %v1734 = vld [vmem:[#allocation4 + $0xdc8] sm:$0xff]
    %v1735 = vld [vmem:[#allocation4 + $0xdd0] sm:$0xff]
    %v1736 = vld [vmem:[#allocation4 + $0xdd8] sm:$0xff]
    %v1737 = vld [vmem:[#allocation4 + $0xde0] sm:$0xff]
    %v1738 = vld [vmem:[#allocation4 + $0xde8] sm:$0xff]
    %v1739 = vld [vmem:[#allocation4 + $0xdf0] sm:$0xff]
    %v1740 = vld [vmem:[#allocation4 + $0xdf8] sm:$0xff]
    %v1741 = vld [vmem:[#allocation4 + $0xe00] sm:$0xff]
    %v1742 = vld [vmem:[#allocation4 + $0xe08] sm:$0xff]
    %v1743 = vld [vmem:[#allocation4 + $0xe10] sm:$0xff]
    %v1744 = vld [vmem:[#allocation4 + $0xe18] sm:$0xff]
    %v1745 = vld [vmem:[#allocation4 + $0xe20] sm:$0xff]
    %v1746 = vld [vmem:[#allocation4 + $0xe28] sm:$0xff]
    %v1747 = vld [vmem:[#allocation4 + $0xe30] sm:$0xff]
    %v1748 = vld [vmem:[#allocation4 + $0xe38] sm:$0xff]
    %v1749 = vld [vmem:[#allocation4 + $0xe40] sm:$0xff]
    %v1750 = vld [vmem:[#allocation4 + $0xe48] sm:$0xff]
    %v1751 = vld [vmem:[#allocation4 + $0xe50] sm:$0xff]
    %v1752 = vld [vmem:[#allocation4 + $0xe58] sm:$0xff]
    %v1753 = vld [vmem:[#allocation4 + $0xe60] sm:$0xff]
    %v1754 = vld [vmem:[#allocation4 + $0xe68] sm:$0xff]
    %v1755 = vld [vmem:[#allocation4 + $0xe70] sm:$0xff]
    %v1756 = vld [vmem:[#allocation4 + $0xe78] sm:$0xff]
    %v1757 = vld [vmem:[#allocation4 + $0xe80] sm:$0xff]
    %v1758 = vld [vmem:[#allocation4 + $0xe88] sm:$0xff]
    %v1759 = vld [vmem:[#allocation4 + $0xe90] sm:$0xff]
    %v1760 = vld [vmem:[#allocation4 + $0xe98] sm:$0xff]
    %v1761 = vld [vmem:[#allocation4 + $0xea0] sm:$0xff]
    %v1762 = vld [vmem:[#allocation4 + $0xea8] sm:$0xff]
    %v1763 = vld [vmem:[#allocation4 + $0xeb0] sm:$0xff]
    %v1764 = vld [vmem:[#allocation4 + $0xeb8] sm:$0xff]
    %v1765 = vld [vmem:[#allocation4 + $0xec0] sm:$0xff]
    %v1766 = vld [vmem:[#allocation4 + $0xec8] sm:$0xff]
    %v1767 = vld [vmem:[#allocation4 + $0xed0] sm:$0xff]
    %v1768 = vld [vmem:[#allocation4 + $0xed8] sm:$0xff]
    %v1769 = vld [vmem:[#allocation4 + $0xee0] sm:$0xff]
    %v1770 = vld [vmem:[#allocation4 + $0xee8] sm:$0xff]
    %v1771 = vld [vmem:[#allocation4 + $0xef0] sm:$0xff]
    %v1772 = vld [vmem:[#allocation4 + $0xef8] sm:$0xff]
    %v1773 = vld [vmem:[#allocation4 + $0xf00] sm:$0xff]
    %v1774 = vld [vmem:[#allocation4 + $0xf08] sm:$0xff]
    %v1775 = vld [vmem:[#allocation4 + $0xf10] sm:$0xff]
    %v1776 = vld [vmem:[#allocation4 + $0xf18] sm:$0xff]
    %v1777 = vld [vmem:[#allocation4 + $0xf20] sm:$0xff]
    %v1778 = vld [vmem:[#allocation4 + $0xf28] sm:$0xff]
    %v1779 = vld [vmem:[#allocation4 + $0xf30] sm:$0xff]
    %v1780 = vld [vmem:[#allocation4 + $0xf38] sm:$0xff]
    %v1781 = vld [vmem:[#allocation4 + $0xf40] sm:$0xff]
    %v1782 = vld [vmem:[#allocation4 + $0xf48] sm:$0xff]
    %v1783 = vld [vmem:[#allocation4 + $0xf50] sm:$0xff]
    %v1784 = vld [vmem:[#allocation4 + $0xf58] sm:$0xff]
    %v1785 = vld [vmem:[#allocation4 + $0xf60] sm:$0xff]
    %v1786 = vld [vmem:[#allocation4 + $0xf68] sm:$0xff]
    %v1787 = vld [vmem:[#allocation4 + $0xf70] sm:$0xff]
    %v1788 = vld [vmem:[#allocation4 + $0xf78] sm:$0xff]
    %v1789 = vld [vmem:[#allocation4 + $0xf80] sm:$0xff]
    %v1790 = vld [vmem:[#allocation4 + $0xf88] sm:$0xff]
    %v1791 = vld [vmem:[#allocation4 + $0xf90] sm:$0xff]
    %v1792 = vld [vmem:[#allocation4 + $0xf98] sm:$0xff]
    %v1793 = vld [vmem:[#allocation4 + $0xfa0] sm:$0xff]
    %v1794 = vld [vmem:[#allocation4 + $0xfa8] sm:$0xff]
    %v1795 = vld [vmem:[#allocation4 + $0xfb0] sm:$0xff]
    %v1796 = vld [vmem:[#allocation4 + $0xfb8] sm:$0xff]
    %v1797 = vld [vmem:[#allocation4 + $0xfc0] sm:$0xff]
    %v1798 = vld [vmem:[#allocation4 + $0xfc8] sm:$0xff]
    %v1799 = vld [vmem:[#allocation4 + $0xfd0] sm:$0xff]
    %v1800 = vld [vmem:[#allocation4 + $0xfd8] sm:$0xff]
    %v1801 = vld [vmem:[#allocation4 + $0xfe0] sm:$0xff]
    %v1802 = vld [vmem:[#allocation4 + $0xfe8] sm:$0xff]
    %v1803 = vld [vmem:[#allocation4 + $0xff0] sm:$0xff]
    %v1804 = vld [vmem:[#allocation4 + $0xff8] sm:$0xff]
    %v1805 = vld [vmem:[%s3 + $0x10] sm:$0xf]
    %v1807 = vlaneseq
    %v1808 = vshrl.u32 %v1807, 7
    %v1809 = vsub.s32 0, %v1808
    %v1810 = vrot.slane %v1805, %v1809
    %v1811 = vlaneseq
    %v1812 = vshrl.u32 %v1811, 7
    %v1813 = vsub.s32 1, %v1812
    %v1814 = vrot.slane %v1805, %v1813
    %v1815 = vlaneseq
    %v1816 = vshrl.u32 %v1815, 7
    %v1817 = vsub.s32 2, %v1816
    %v1818 = vrot.slane %v1805, %v1817
    %v1819 = vlaneseq
    %v1820 = vshrl.u32 %v1819, 7
    %v1821 = vsub.s32 3, %v1820
    %v1822 = vrot.slane %v1805, %v1821
    %v2339 = vunpack.c.l.b16 %v1293
    %v2340 = vunpack.c.h.b16 %v1293
    %v2341 = vunpack.c.l.b16 %v1294
    %v2342 = vunpack.c.h.b16 %v1294
    %v2343 = vunpack.c.l.b16 %v1295
    %v2344 = vunpack.c.h.b16 %v1295
    %v2345 = vunpack.c.l.b16 %v1296
    %v2346 = vunpack.c.h.b16 %v1296
    %v2347 = vunpack.c.l.b16 %v1297
    %v2348 = vunpack.c.h.b16 %v1297
    %v2349 = vunpack.c.l.b16 %v1298
    %v2350 = vunpack.c.h.b16 %v1298
    %v2351 = vunpack.c.l.b16 %v1299
    %v2352 = vunpack.c.h.b16 %v1299
    %v2353 = vunpack.c.l.b16 %v1300
    %v2354 = vunpack.c.h.b16 %v1300
    %v2355 = vunpack.c.l.b16 %v1301
    %v2356 = vunpack.c.h.b16 %v1301
    %v2357 = vunpack.c.l.b16 %v1302
    %v2358 = vunpack.c.h.b16 %v1302
    %v2359 = vunpack.c.l.b16 %v1303
    %v2360 = vunpack.c.h.b16 %v1303
    %v2361 = vunpack.c.l.b16 %v1304
    %v2362 = vunpack.c.h.b16 %v1304
    %v2363 = vunpack.c.l.b16 %v1305
    %v2364 = vunpack.c.h.b16 %v1305
    %v2365 = vunpack.c.l.b16 %v1306
    %v2366 = vunpack.c.h.b16 %v1306
    %v2367 = vunpack.c.l.b16 %v1307
    %v2368 = vunpack.c.h.b16 %v1307
    %v2369 = vunpack.c.l.b16 %v1308
    %v2370 = vunpack.c.h.b16 %v1308
    %v2371 = vunpack.c.l.b16 %v1309
    %v2372 = vunpack.c.h.b16 %v1309
    %v2373 = vunpack.c.l.b16 %v1310
    %v2374 = vunpack.c.h.b16 %v1310
    %v2375 = vunpack.c.l.b16 %v1311
    %v2376 = vunpack.c.h.b16 %v1311
    %v2377 = vunpack.c.l.b16 %v1312
    %v2378 = vunpack.c.h.b16 %v1312
    %v2379 = vunpack.c.l.b16 %v1313
    %v2380 = vunpack.c.h.b16 %v1313
    %v2381 = vunpack.c.l.b16 %v1314
    %v2382 = vunpack.c.h.b16 %v1314
    %v2383 = vunpack.c.l.b16 %v1315
    %v2384 = vunpack.c.h.b16 %v1315
    %v2385 = vunpack.c.l.b16 %v1316
    %v2386 = vunpack.c.h.b16 %v1316
    %v2387 = vunpack.c.l.b16 %v1317
    %v2388 = vunpack.c.h.b16 %v1317
    %v2389 = vunpack.c.l.b16 %v1318
    %v2390 = vunpack.c.h.b16 %v1318
    %v2391 = vunpack.c.l.b16 %v1319
    %v2392 = vunpack.c.h.b16 %v1319
    %v2393 = vunpack.c.l.b16 %v1320
    %v2394 = vunpack.c.h.b16 %v1320
    %v2395 = vunpack.c.l.b16 %v1321
    %v2396 = vunpack.c.h.b16 %v1321
    %v2397 = vunpack.c.l.b16 %v1322
    %v2398 = vunpack.c.h.b16 %v1322
    %v2399 = vunpack.c.l.b16 %v1323
    %v2400 = vunpack.c.h.b16 %v1323
    %v2401 = vunpack.c.l.b16 %v1324
    %v2402 = vunpack.c.h.b16 %v1324
    %v2403 = vunpack.c.l.b16 %v1325
    %v2404 = vunpack.c.h.b16 %v1325
    %v2405 = vunpack.c.l.b16 %v1326
    %v2406 = vunpack.c.h.b16 %v1326
    %v2407 = vunpack.c.l.b16 %v1327
    %v2408 = vunpack.c.h.b16 %v1327
    %v2409 = vunpack.c.l.b16 %v1328
    %v2410 = vunpack.c.h.b16 %v1328
    %v2411 = vunpack.c.l.b16 %v1329
    %v2412 = vunpack.c.h.b16 %v1329
    %v2413 = vunpack.c.l.b16 %v1330
    %v2414 = vunpack.c.h.b16 %v1330
    %v2415 = vunpack.c.l.b16 %v1331
    %v2416 = vunpack.c.h.b16 %v1331
    %v2417 = vunpack.c.l.b16 %v1332
    %v2418 = vunpack.c.h.b16 %v1332
    %v2419 = vunpack.c.l.b16 %v1333
    %v2420 = vunpack.c.h.b16 %v1333
    %v2421 = vunpack.c.l.b16 %v1334
    %v2422 = vunpack.c.h.b16 %v1334
    %v2423 = vunpack.c.l.b16 %v1335
    %v2424 = vunpack.c.h.b16 %v1335
    %v2425 = vunpack.c.l.b16 %v1336
    %v2426 = vunpack.c.h.b16 %v1336
    %v2427 = vunpack.c.l.b16 %v1337
    %v2428 = vunpack.c.h.b16 %v1337
    %v2429 = vunpack.c.l.b16 %v1338
    %v2430 = vunpack.c.h.b16 %v1338
    %v2431 = vunpack.c.l.b16 %v1339
    %v2432 = vunpack.c.h.b16 %v1339
    %v2433 = vunpack.c.l.b16 %v1340
    %v2434 = vunpack.c.h.b16 %v1340
    %v2435 = vunpack.c.l.b16 %v1341
    %v2436 = vunpack.c.h.b16 %v1341
    %v2437 = vunpack.c.l.b16 %v1342
    %v2438 = vunpack.c.h.b16 %v1342
    %v2439 = vunpack.c.l.b16 %v1343
    %v2440 = vunpack.c.h.b16 %v1343
    %v2441 = vunpack.c.l.b16 %v1344
    %v2442 = vunpack.c.h.b16 %v1344
    %v2443 = vunpack.c.l.b16 %v1345
    %v2444 = vunpack.c.h.b16 %v1345
    %v2445 = vunpack.c.l.b16 %v1346
    %v2446 = vunpack.c.h.b16 %v1346
    %v2447 = vunpack.c.l.b16 %v1347
    %v2448 = vunpack.c.h.b16 %v1347
    %v2449 = vunpack.c.l.b16 %v1348
    %v2450 = vunpack.c.h.b16 %v1348
    %v2451 = vunpack.c.l.b16 %v1349
    %v2452 = vunpack.c.h.b16 %v1349
    %v2453 = vunpack.c.l.b16 %v1350
    %v2454 = vunpack.c.h.b16 %v1350
    %v2455 = vunpack.c.l.b16 %v1351
    %v2456 = vunpack.c.h.b16 %v1351
    %v2457 = vunpack.c.l.b16 %v1352
    %v2458 = vunpack.c.h.b16 %v1352
    %v2459 = vunpack.c.l.b16 %v1353
    %v2460 = vunpack.c.h.b16 %v1353
    %v2461 = vunpack.c.l.b16 %v1354
    %v2462 = vunpack.c.h.b16 %v1354
    %v2463 = vunpack.c.l.b16 %v1355
    %v2464 = vunpack.c.h.b16 %v1355
    %v2465 = vunpack.c.l.b16 %v1356
    %v2466 = vunpack.c.h.b16 %v1356
    %v2467 = vunpack.c.l.b16 %v1357
    %v2468 = vunpack.c.h.b16 %v1357
    %v2469 = vunpack.c.l.b16 %v1358
    %v2470 = vunpack.c.h.b16 %v1358
    %v2471 = vunpack.c.l.b16 %v1359
    %v2472 = vunpack.c.h.b16 %v1359
    %v2473 = vunpack.c.l.b16 %v1360
    %v2474 = vunpack.c.h.b16 %v1360
    %v2475 = vunpack.c.l.b16 %v1361
    %v2476 = vunpack.c.h.b16 %v1361
    %v2477 = vunpack.c.l.b16 %v1362
    %v2478 = vunpack.c.h.b16 %v1362
    %v2479 = vunpack.c.l.b16 %v1363
    %v2480 = vunpack.c.h.b16 %v1363
    %v2481 = vunpack.c.l.b16 %v1364
    %v2482 = vunpack.c.h.b16 %v1364
    %v2483 = vunpack.c.l.b16 %v1365
    %v2484 = vunpack.c.h.b16 %v1365
    %v2485 = vunpack.c.l.b16 %v1366
    %v2486 = vunpack.c.h.b16 %v1366
    %v2487 = vunpack.c.l.b16 %v1367
    %v2488 = vunpack.c.h.b16 %v1367
    %v2489 = vunpack.c.l.b16 %v1368
    %v2490 = vunpack.c.h.b16 %v1368
    %v2491 = vunpack.c.l.b16 %v1369
    %v2492 = vunpack.c.h.b16 %v1369
    %v2493 = vunpack.c.l.b16 %v1370
    %v2494 = vunpack.c.h.b16 %v1370
    %v2495 = vunpack.c.l.b16 %v1371
    %v2496 = vunpack.c.h.b16 %v1371
    %v2497 = vunpack.c.l.b16 %v1372
    %v2498 = vunpack.c.h.b16 %v1372
    %v2499 = vunpack.c.l.b16 %v1373
    %v2500 = vunpack.c.h.b16 %v1373
    %v2501 = vunpack.c.l.b16 %v1374
    %v2502 = vunpack.c.h.b16 %v1374
    %v2503 = vunpack.c.l.b16 %v1375
    %v2504 = vunpack.c.h.b16 %v1375
    %v2505 = vunpack.c.l.b16 %v1376
    %v2506 = vunpack.c.h.b16 %v1376
    %v2507 = vunpack.c.l.b16 %v1377
    %v2508 = vunpack.c.h.b16 %v1377
    %v2509 = vunpack.c.l.b16 %v1378
    %v2510 = vunpack.c.h.b16 %v1378
    %v2511 = vunpack.c.l.b16 %v1379
    %v2512 = vunpack.c.h.b16 %v1379
    %v2513 = vunpack.c.l.b16 %v1380
    %v2514 = vunpack.c.h.b16 %v1380
    %v2515 = vunpack.c.l.b16 %v1381
    %v2516 = vunpack.c.h.b16 %v1381
    %v2517 = vunpack.c.l.b16 %v1382
    %v2518 = vunpack.c.h.b16 %v1382
    %v2519 = vunpack.c.l.b16 %v1383
    %v2520 = vunpack.c.h.b16 %v1383
    %v2521 = vunpack.c.l.b16 %v1384
    %v2522 = vunpack.c.h.b16 %v1384
    %v2523 = vunpack.c.l.b16 %v1385
    %v2524 = vunpack.c.h.b16 %v1385
    %v2525 = vunpack.c.l.b16 %v1386
    %v2526 = vunpack.c.h.b16 %v1386
    %v2527 = vunpack.c.l.b16 %v1387
    %v2528 = vunpack.c.h.b16 %v1387
    %v2529 = vunpack.c.l.b16 %v1388
    %v2530 = vunpack.c.h.b16 %v1388
    %v2531 = vunpack.c.l.b16 %v1389
    %v2532 = vunpack.c.h.b16 %v1389
    %v2533 = vunpack.c.l.b16 %v1390
    %v2534 = vunpack.c.h.b16 %v1390
    %v2535 = vunpack.c.l.b16 %v1391
    %v2536 = vunpack.c.h.b16 %v1391
    %v2537 = vunpack.c.l.b16 %v1392
    %v2538 = vunpack.c.h.b16 %v1392
    %v2539 = vunpack.c.l.b16 %v1393
    %v2540 = vunpack.c.h.b16 %v1393
    %v2541 = vunpack.c.l.b16 %v1394
    %v2542 = vunpack.c.h.b16 %v1394
    %v2543 = vunpack.c.l.b16 %v1395
    %v2544 = vunpack.c.h.b16 %v1395
    %v2545 = vunpack.c.l.b16 %v1396
    %v2546 = vunpack.c.h.b16 %v1396
    %v2547 = vunpack.c.l.b16 %v1397
    %v2548 = vunpack.c.h.b16 %v1397
    %v2549 = vunpack.c.l.b16 %v1398
    %v2550 = vunpack.c.h.b16 %v1398
    %v2551 = vunpack.c.l.b16 %v1399
    %v2552 = vunpack.c.h.b16 %v1399
    %v2553 = vunpack.c.l.b16 %v1400
    %v2554 = vunpack.c.h.b16 %v1400
    %v2555 = vunpack.c.l.b16 %v1401
    %v2556 = vunpack.c.h.b16 %v1401
    %v2557 = vunpack.c.l.b16 %v1402
    %v2558 = vunpack.c.h.b16 %v1402
    %v2559 = vunpack.c.l.b16 %v1403
    %v2560 = vunpack.c.h.b16 %v1403
    %v2561 = vunpack.c.l.b16 %v1404
    %v2562 = vunpack.c.h.b16 %v1404
    %v2563 = vunpack.c.l.b16 %v1405
    %v2564 = vunpack.c.h.b16 %v1405
    %v2565 = vunpack.c.l.b16 %v1406
    %v2566 = vunpack.c.h.b16 %v1406
    %v2567 = vunpack.c.l.b16 %v1407
    %v2568 = vunpack.c.h.b16 %v1407
    %v2569 = vunpack.c.l.b16 %v1408
    %v2570 = vunpack.c.h.b16 %v1408
    %v2571 = vunpack.c.l.b16 %v1409
    %v2572 = vunpack.c.h.b16 %v1409
    %v2573 = vunpack.c.l.b16 %v1410
    %v2574 = vunpack.c.h.b16 %v1410
    %v2575 = vunpack.c.l.b16 %v1411
    %v2576 = vunpack.c.h.b16 %v1411
    %v2577 = vunpack.c.l.b16 %v1412
    %v2578 = vunpack.c.h.b16 %v1412
    %v2579 = vunpack.c.l.b16 %v1413
    %v2580 = vunpack.c.h.b16 %v1413
    %v2581 = vunpack.c.l.b16 %v1414
    %v2582 = vunpack.c.h.b16 %v1414
    %v2583 = vunpack.c.l.b16 %v1415
    %v2584 = vunpack.c.h.b16 %v1415
    %v2585 = vunpack.c.l.b16 %v1416
    %v2586 = vunpack.c.h.b16 %v1416
    %v2587 = vunpack.c.l.b16 %v1417
    %v2588 = vunpack.c.h.b16 %v1417
    %v2589 = vunpack.c.l.b16 %v1418
    %v2590 = vunpack.c.h.b16 %v1418
    %v2591 = vunpack.c.l.b16 %v1419
    %v2592 = vunpack.c.h.b16 %v1419
    %v2593 = vunpack.c.l.b16 %v1420
    %v2594 = vunpack.c.h.b16 %v1420
    %v2595 = vunpack.c.l.b16 %v1421
    %v2596 = vunpack.c.h.b16 %v1421
    %v2597 = vunpack.c.l.b16 %v1422
    %v2598 = vunpack.c.h.b16 %v1422
    %v2599 = vunpack.c.l.b16 %v1423
    %v2600 = vunpack.c.h.b16 %v1423
    %v2601 = vunpack.c.l.b16 %v1424
    %v2602 = vunpack.c.h.b16 %v1424
    %v2603 = vunpack.c.l.b16 %v1425
    %v2604 = vunpack.c.h.b16 %v1425
    %v2605 = vunpack.c.l.b16 %v1426
    %v2606 = vunpack.c.h.b16 %v1426
    %v2607 = vunpack.c.l.b16 %v1427
    %v2608 = vunpack.c.h.b16 %v1427
    %v2609 = vunpack.c.l.b16 %v1428
    %v2610 = vunpack.c.h.b16 %v1428
    %v2611 = vunpack.c.l.b16 %v1429
    %v2612 = vunpack.c.h.b16 %v1429
    %v2613 = vunpack.c.l.b16 %v1430
    %v2614 = vunpack.c.h.b16 %v1430
    %v2615 = vunpack.c.l.b16 %v1431
    %v2616 = vunpack.c.h.b16 %v1431
    %v2617 = vunpack.c.l.b16 %v1432
    %v2618 = vunpack.c.h.b16 %v1432
    %v2619 = vunpack.c.l.b16 %v1433
    %v2620 = vunpack.c.h.b16 %v1433
    %v2621 = vunpack.c.l.b16 %v1434
    %v2622 = vunpack.c.h.b16 %v1434
    %v2623 = vunpack.c.l.b16 %v1435
    %v2624 = vunpack.c.h.b16 %v1435
    %v2625 = vunpack.c.l.b16 %v1436
    %v2626 = vunpack.c.h.b16 %v1436
    %v2627 = vunpack.c.l.b16 %v1437
    %v2628 = vunpack.c.h.b16 %v1437
    %v2629 = vunpack.c.l.b16 %v1438
    %v2630 = vunpack.c.h.b16 %v1438
    %v2631 = vunpack.c.l.b16 %v1439
    %v2632 = vunpack.c.h.b16 %v1439
    %v2633 = vunpack.c.l.b16 %v1440
    %v2634 = vunpack.c.h.b16 %v1440
    %v2635 = vunpack.c.l.b16 %v1441
    %v2636 = vunpack.c.h.b16 %v1441
    %v2637 = vunpack.c.l.b16 %v1442
    %v2638 = vunpack.c.h.b16 %v1442
    %v2639 = vunpack.c.l.b16 %v1443
    %v2640 = vunpack.c.h.b16 %v1443
    %v2641 = vunpack.c.l.b16 %v1444
    %v2642 = vunpack.c.h.b16 %v1444
    %v2643 = vunpack.c.l.b16 %v1445
    %v2644 = vunpack.c.h.b16 %v1445
    %v2645 = vunpack.c.l.b16 %v1446
    %v2646 = vunpack.c.h.b16 %v1446
    %v2647 = vunpack.c.l.b16 %v1447
    %v2648 = vunpack.c.h.b16 %v1447
    %v2649 = vunpack.c.l.b16 %v1448
    %v2650 = vunpack.c.h.b16 %v1448
    %v2651 = vunpack.c.l.b16 %v1449
    %v2652 = vunpack.c.h.b16 %v1449
    %v2653 = vunpack.c.l.b16 %v1450
    %v2654 = vunpack.c.h.b16 %v1450
    %v2655 = vunpack.c.l.b16 %v1451
    %v2656 = vunpack.c.h.b16 %v1451
    %v2657 = vunpack.c.l.b16 %v1452
    %v2658 = vunpack.c.h.b16 %v1452
    %v2659 = vunpack.c.l.b16 %v1453
    %v2660 = vunpack.c.h.b16 %v1453
    %v2661 = vunpack.c.l.b16 %v1454
    %v2662 = vunpack.c.h.b16 %v1454
    %v2663 = vunpack.c.l.b16 %v1455
    %v2664 = vunpack.c.h.b16 %v1455
    %v2665 = vunpack.c.l.b16 %v1456
    %v2666 = vunpack.c.h.b16 %v1456
    %v2667 = vunpack.c.l.b16 %v1457
    %v2668 = vunpack.c.h.b16 %v1457
    %v2669 = vunpack.c.l.b16 %v1458
    %v2670 = vunpack.c.h.b16 %v1458
    %v2671 = vunpack.c.l.b16 %v1459
    %v2672 = vunpack.c.h.b16 %v1459
    %v2673 = vunpack.c.l.b16 %v1460
    %v2674 = vunpack.c.h.b16 %v1460
    %v2675 = vunpack.c.l.b16 %v1461
    %v2676 = vunpack.c.h.b16 %v1461
    %v2677 = vunpack.c.l.b16 %v1462
    %v2678 = vunpack.c.h.b16 %v1462
    %v2679 = vunpack.c.l.b16 %v1463
    %v2680 = vunpack.c.h.b16 %v1463
    %v2681 = vunpack.c.l.b16 %v1464
    %v2682 = vunpack.c.h.b16 %v1464
    %v2683 = vunpack.c.l.b16 %v1465
    %v2684 = vunpack.c.h.b16 %v1465
    %v2685 = vunpack.c.l.b16 %v1466
    %v2686 = vunpack.c.h.b16 %v1466
    %v2687 = vunpack.c.l.b16 %v1467
    %v2688 = vunpack.c.h.b16 %v1467
    %v2689 = vunpack.c.l.b16 %v1468
    %v2690 = vunpack.c.h.b16 %v1468
    %v2691 = vunpack.c.l.b16 %v1469
    %v2692 = vunpack.c.h.b16 %v1469
    %v2693 = vunpack.c.l.b16 %v1470
    %v2694 = vunpack.c.h.b16 %v1470
    %v2695 = vunpack.c.l.b16 %v1471
    %v2696 = vunpack.c.h.b16 %v1471
    %v2697 = vunpack.c.l.b16 %v1472
    %v2698 = vunpack.c.h.b16 %v1472
    %v2699 = vunpack.c.l.b16 %v1473
    %v2700 = vunpack.c.h.b16 %v1473
    %v2701 = vunpack.c.l.b16 %v1474
    %v2702 = vunpack.c.h.b16 %v1474
    %v2703 = vunpack.c.l.b16 %v1475
    %v2704 = vunpack.c.h.b16 %v1475
    %v2705 = vunpack.c.l.b16 %v1476
    %v2706 = vunpack.c.h.b16 %v1476
    %v2707 = vunpack.c.l.b16 %v1477
    %v2708 = vunpack.c.h.b16 %v1477
    %v2709 = vunpack.c.l.b16 %v1478
    %v2710 = vunpack.c.h.b16 %v1478
    %v2711 = vunpack.c.l.b16 %v1479
    %v2712 = vunpack.c.h.b16 %v1479
    %v2713 = vunpack.c.l.b16 %v1480
    %v2714 = vunpack.c.h.b16 %v1480
    %v2715 = vunpack.c.l.b16 %v1481
    %v2716 = vunpack.c.h.b16 %v1481
    %v2717 = vunpack.c.l.b16 %v1482
    %v2718 = vunpack.c.h.b16 %v1482
    %v2719 = vunpack.c.l.b16 %v1483
    %v2720 = vunpack.c.h.b16 %v1483
    %v2721 = vunpack.c.l.b16 %v1484
    %v2722 = vunpack.c.h.b16 %v1484
    %v2723 = vunpack.c.l.b16 %v1485
    %v2724 = vunpack.c.h.b16 %v1485
    %v2725 = vunpack.c.l.b16 %v1486
    %v2726 = vunpack.c.h.b16 %v1486
    %v2727 = vunpack.c.l.b16 %v1487
    %v2728 = vunpack.c.h.b16 %v1487
    %v2729 = vunpack.c.l.b16 %v1488
    %v2730 = vunpack.c.h.b16 %v1488
    %v2731 = vunpack.c.l.b16 %v1489
    %v2732 = vunpack.c.h.b16 %v1489
    %v2733 = vunpack.c.l.b16 %v1490
    %v2734 = vunpack.c.h.b16 %v1490
    %v2735 = vunpack.c.l.b16 %v1491
    %v2736 = vunpack.c.h.b16 %v1491
    %v2737 = vunpack.c.l.b16 %v1492
    %v2738 = vunpack.c.h.b16 %v1492
    %v2739 = vunpack.c.l.b16 %v1493
    %v2740 = vunpack.c.h.b16 %v1493
    %v2741 = vunpack.c.l.b16 %v1494
    %v2742 = vunpack.c.h.b16 %v1494
    %v2743 = vunpack.c.l.b16 %v1495
    %v2744 = vunpack.c.h.b16 %v1495
    %v2745 = vunpack.c.l.b16 %v1496
    %v2746 = vunpack.c.h.b16 %v1496
    %v2747 = vunpack.c.l.b16 %v1497
    %v2748 = vunpack.c.h.b16 %v1497
    %v2749 = vunpack.c.l.b16 %v1498
    %v2750 = vunpack.c.h.b16 %v1498
    %v2751 = vunpack.c.l.b16 %v1499
    %v2752 = vunpack.c.h.b16 %v1499
    %v2753 = vunpack.c.l.b16 %v1500
    %v2754 = vunpack.c.h.b16 %v1500
    %v2755 = vunpack.c.l.b16 %v1501
    %v2756 = vunpack.c.h.b16 %v1501
    %v2757 = vunpack.c.l.b16 %v1502
    %v2758 = vunpack.c.h.b16 %v1502
    %v2759 = vunpack.c.l.b16 %v1503
    %v2760 = vunpack.c.h.b16 %v1503
    %v2761 = vunpack.c.l.b16 %v1504
    %v2762 = vunpack.c.h.b16 %v1504
    %v2763 = vunpack.c.l.b16 %v1505
    %v2764 = vunpack.c.h.b16 %v1505
    %v2765 = vunpack.c.l.b16 %v1506
    %v2766 = vunpack.c.h.b16 %v1506
    %v2767 = vunpack.c.l.b16 %v1507
    %v2768 = vunpack.c.h.b16 %v1507
    %v2769 = vunpack.c.l.b16 %v1508
    %v2770 = vunpack.c.h.b16 %v1508
    %v2771 = vunpack.c.l.b16 %v1509
    %v2772 = vunpack.c.h.b16 %v1509
    %v2773 = vunpack.c.l.b16 %v1510
    %v2774 = vunpack.c.h.b16 %v1510
    %v2775 = vunpack.c.l.b16 %v1511
    %v2776 = vunpack.c.h.b16 %v1511
    %v2777 = vunpack.c.l.b16 %v1512
    %v2778 = vunpack.c.h.b16 %v1512
    %v2779 = vunpack.c.l.b16 %v1513
    %v2780 = vunpack.c.h.b16 %v1513
    %v2781 = vunpack.c.l.b16 %v1514
    %v2782 = vunpack.c.h.b16 %v1514
    %v2783 = vunpack.c.l.b16 %v1515
    %v2784 = vunpack.c.h.b16 %v1515
    %v2785 = vunpack.c.l.b16 %v1516
    %v2786 = vunpack.c.h.b16 %v1516
    %v2787 = vunpack.c.l.b16 %v1517
    %v2788 = vunpack.c.h.b16 %v1517
    %v2789 = vunpack.c.l.b16 %v1518
    %v2790 = vunpack.c.h.b16 %v1518
    %v2791 = vunpack.c.l.b16 %v1519
    %v2792 = vunpack.c.h.b16 %v1519
    %v2793 = vunpack.c.l.b16 %v1520
    %v2794 = vunpack.c.h.b16 %v1520
    %v2795 = vunpack.c.l.b16 %v1521
    %v2796 = vunpack.c.h.b16 %v1521
    %v2797 = vunpack.c.l.b16 %v1522
    %v2798 = vunpack.c.h.b16 %v1522
    %v2799 = vunpack.c.l.b16 %v1523
    %v2800 = vunpack.c.h.b16 %v1523
    %v2801 = vunpack.c.l.b16 %v1524
    %v2802 = vunpack.c.h.b16 %v1524
    %v2803 = vunpack.c.l.b16 %v1525
    %v2804 = vunpack.c.h.b16 %v1525
    %v2805 = vunpack.c.l.b16 %v1526
    %v2806 = vunpack.c.h.b16 %v1526
    %v2807 = vunpack.c.l.b16 %v1527
    %v2808 = vunpack.c.h.b16 %v1527
    %v2809 = vunpack.c.l.b16 %v1528
    %v2810 = vunpack.c.h.b16 %v1528
    %v2811 = vunpack.c.l.b16 %v1529
    %v2812 = vunpack.c.h.b16 %v1529
    %v2813 = vunpack.c.l.b16 %v1530
    %v2814 = vunpack.c.h.b16 %v1530
    %v2815 = vunpack.c.l.b16 %v1531
    %v2816 = vunpack.c.h.b16 %v1531
    %v2817 = vunpack.c.l.b16 %v1532
    %v2818 = vunpack.c.h.b16 %v1532
    %v2819 = vunpack.c.l.b16 %v1533
    %v2820 = vunpack.c.h.b16 %v1533
    %v2821 = vunpack.c.l.b16 %v1534
    %v2822 = vunpack.c.h.b16 %v1534
    %v2823 = vunpack.c.l.b16 %v1535
    %v2824 = vunpack.c.h.b16 %v1535
    %v2825 = vunpack.c.l.b16 %v1536
    %v2826 = vunpack.c.h.b16 %v1536
    %v2827 = vunpack.c.l.b16 %v1537
    %v2828 = vunpack.c.h.b16 %v1537
    %v2829 = vunpack.c.l.b16 %v1538
    %v2830 = vunpack.c.h.b16 %v1538
    %v2831 = vunpack.c.l.b16 %v1539
    %v2832 = vunpack.c.h.b16 %v1539
    %v2833 = vunpack.c.l.b16 %v1540
    %v2834 = vunpack.c.h.b16 %v1540
    %v2835 = vunpack.c.l.b16 %v1541
    %v2836 = vunpack.c.h.b16 %v1541
    %v2837 = vunpack.c.l.b16 %v1542
    %v2838 = vunpack.c.h.b16 %v1542
    %v2839 = vunpack.c.l.b16 %v1543
    %v2840 = vunpack.c.h.b16 %v1543
    %v2841 = vunpack.c.l.b16 %v1544
    %v2842 = vunpack.c.h.b16 %v1544
    %v2843 = vunpack.c.l.b16 %v1545
    %v2844 = vunpack.c.h.b16 %v1545
    %v2845 = vunpack.c.l.b16 %v1546
    %v2846 = vunpack.c.h.b16 %v1546
    %v2847 = vunpack.c.l.b16 %v1547
    %v2848 = vunpack.c.h.b16 %v1547
    %v2849 = vunpack.c.l.b16 %v1548
    %v2850 = vunpack.c.h.b16 %v1548
    %v2851 = vunpack.c.l.b16 %v1549
    %v2852 = vunpack.c.h.b16 %v1549
    %v2853 = vunpack.c.l.b16 %v1550
    %v2854 = vunpack.c.h.b16 %v1550
    %v2855 = vunpack.c.l.b16 %v1551
    %v2856 = vunpack.c.h.b16 %v1551
    %v2857 = vunpack.c.l.b16 %v1552
    %v2858 = vunpack.c.h.b16 %v1552
    %v2859 = vunpack.c.l.b16 %v1553
    %v2860 = vunpack.c.h.b16 %v1553
    %v2861 = vunpack.c.l.b16 %v1554
    %v2862 = vunpack.c.h.b16 %v1554
    %v2863 = vunpack.c.l.b16 %v1555
    %v2864 = vunpack.c.h.b16 %v1555
    %v2865 = vunpack.c.l.b16 %v1556
    %v2866 = vunpack.c.h.b16 %v1556
    %v2867 = vunpack.c.l.b16 %v1557
    %v2868 = vunpack.c.h.b16 %v1557
    %v2869 = vunpack.c.l.b16 %v1558
    %v2870 = vunpack.c.h.b16 %v1558
    %v2871 = vunpack.c.l.b16 %v1559
    %v2872 = vunpack.c.h.b16 %v1559
    %v2873 = vunpack.c.l.b16 %v1560
    %v2874 = vunpack.c.h.b16 %v1560
    %v2875 = vunpack.c.l.b16 %v1561
    %v2876 = vunpack.c.h.b16 %v1561
    %v2877 = vunpack.c.l.b16 %v1562
    %v2878 = vunpack.c.h.b16 %v1562
    %v2879 = vunpack.c.l.b16 %v1563
    %v2880 = vunpack.c.h.b16 %v1563
    %v2881 = vunpack.c.l.b16 %v1564
    %v2882 = vunpack.c.h.b16 %v1564
    %v2883 = vunpack.c.l.b16 %v1565
    %v2884 = vunpack.c.h.b16 %v1565
    %v2885 = vunpack.c.l.b16 %v1566
    %v2886 = vunpack.c.h.b16 %v1566
    %v2887 = vunpack.c.l.b16 %v1567
    %v2888 = vunpack.c.h.b16 %v1567
    %v2889 = vunpack.c.l.b16 %v1568
    %v2890 = vunpack.c.h.b16 %v1568
    %v2891 = vunpack.c.l.b16 %v1569
    %v2892 = vunpack.c.h.b16 %v1569
    %v2893 = vunpack.c.l.b16 %v1570
    %v2894 = vunpack.c.h.b16 %v1570
    %v2895 = vunpack.c.l.b16 %v1571
    %v2896 = vunpack.c.h.b16 %v1571
    %v2897 = vunpack.c.l.b16 %v1572
    %v2898 = vunpack.c.h.b16 %v1572
    %v2899 = vunpack.c.l.b16 %v1573
    %v2900 = vunpack.c.h.b16 %v1573
    %v2901 = vunpack.c.l.b16 %v1574
    %v2902 = vunpack.c.h.b16 %v1574
    %v2903 = vunpack.c.l.b16 %v1575
    %v2904 = vunpack.c.h.b16 %v1575
    %v2905 = vunpack.c.l.b16 %v1576
    %v2906 = vunpack.c.h.b16 %v1576
    %v2907 = vunpack.c.l.b16 %v1577
    %v2908 = vunpack.c.h.b16 %v1577
    %v2909 = vunpack.c.l.b16 %v1578
    %v2910 = vunpack.c.h.b16 %v1578
    %v2911 = vunpack.c.l.b16 %v1579
    %v2912 = vunpack.c.h.b16 %v1579
    %v2913 = vunpack.c.l.b16 %v1580
    %v2914 = vunpack.c.h.b16 %v1580
    %v2915 = vunpack.c.l.b16 %v1581
    %v2916 = vunpack.c.h.b16 %v1581
    %v2917 = vunpack.c.l.b16 %v1582
    %v2918 = vunpack.c.h.b16 %v1582
    %v2919 = vunpack.c.l.b16 %v1583
    %v2920 = vunpack.c.h.b16 %v1583
    %v2921 = vunpack.c.l.b16 %v1584
    %v2922 = vunpack.c.h.b16 %v1584
    %v2923 = vunpack.c.l.b16 %v1585
    %v2924 = vunpack.c.h.b16 %v1585
    %v2925 = vunpack.c.l.b16 %v1586
    %v2926 = vunpack.c.h.b16 %v1586
    %v2927 = vunpack.c.l.b16 %v1587
    %v2928 = vunpack.c.h.b16 %v1587
    %v2929 = vunpack.c.l.b16 %v1588
    %v2930 = vunpack.c.h.b16 %v1588
    %v2931 = vunpack.c.l.b16 %v1589
    %v2932 = vunpack.c.h.b16 %v1589
    %v2933 = vunpack.c.l.b16 %v1590
    %v2934 = vunpack.c.h.b16 %v1590
    %v2935 = vunpack.c.l.b16 %v1591
    %v2936 = vunpack.c.h.b16 %v1591
    %v2937 = vunpack.c.l.b16 %v1592
    %v2938 = vunpack.c.h.b16 %v1592
    %v2939 = vunpack.c.l.b16 %v1593
    %v2940 = vunpack.c.h.b16 %v1593
    %v2941 = vunpack.c.l.b16 %v1594
    %v2942 = vunpack.c.h.b16 %v1594
    %v2943 = vunpack.c.l.b16 %v1595
    %v2944 = vunpack.c.h.b16 %v1595
    %v2945 = vunpack.c.l.b16 %v1596
    %v2946 = vunpack.c.h.b16 %v1596
    %v2947 = vunpack.c.l.b16 %v1597
    %v2948 = vunpack.c.h.b16 %v1597
    %v2949 = vunpack.c.l.b16 %v1598
    %v2950 = vunpack.c.h.b16 %v1598
    %v2951 = vunpack.c.l.b16 %v1599
    %v2952 = vunpack.c.h.b16 %v1599
    %v2953 = vunpack.c.l.b16 %v1600
    %v2954 = vunpack.c.h.b16 %v1600
    %v2955 = vunpack.c.l.b16 %v1601
    %v2956 = vunpack.c.h.b16 %v1601
    %v2957 = vunpack.c.l.b16 %v1602
    %v2958 = vunpack.c.h.b16 %v1602
    %v2959 = vunpack.c.l.b16 %v1603
    %v2960 = vunpack.c.h.b16 %v1603
    %v2961 = vunpack.c.l.b16 %v1604
    %v2962 = vunpack.c.h.b16 %v1604
    %v2963 = vunpack.c.l.b16 %v1605
    %v2964 = vunpack.c.h.b16 %v1605
    %v2965 = vunpack.c.l.b16 %v1606
    %v2966 = vunpack.c.h.b16 %v1606
    %v2967 = vunpack.c.l.b16 %v1607
    %v2968 = vunpack.c.h.b16 %v1607
    %v2969 = vunpack.c.l.b16 %v1608
    %v2970 = vunpack.c.h.b16 %v1608
    %v2971 = vunpack.c.l.b16 %v1609
    %v2972 = vunpack.c.h.b16 %v1609
    %v2973 = vunpack.c.l.b16 %v1610
    %v2974 = vunpack.c.h.b16 %v1610
    %v2975 = vunpack.c.l.b16 %v1611
    %v2976 = vunpack.c.h.b16 %v1611
    %v2977 = vunpack.c.l.b16 %v1612
    %v2978 = vunpack.c.h.b16 %v1612
    %v2979 = vunpack.c.l.b16 %v1613
    %v2980 = vunpack.c.h.b16 %v1613
    %v2981 = vunpack.c.l.b16 %v1614
    %v2982 = vunpack.c.h.b16 %v1614
    %v2983 = vunpack.c.l.b16 %v1615
    %v2984 = vunpack.c.h.b16 %v1615
    %v2985 = vunpack.c.l.b16 %v1616
    %v2986 = vunpack.c.h.b16 %v1616
    %v2987 = vunpack.c.l.b16 %v1617
    %v2988 = vunpack.c.h.b16 %v1617
    %v2989 = vunpack.c.l.b16 %v1618
    %v2990 = vunpack.c.h.b16 %v1618
    %v2991 = vunpack.c.l.b16 %v1619
    %v2992 = vunpack.c.h.b16 %v1619
    %v2993 = vunpack.c.l.b16 %v1620
    %v2994 = vunpack.c.h.b16 %v1620
    %v2995 = vunpack.c.l.b16 %v1621
    %v2996 = vunpack.c.h.b16 %v1621
    %v2997 = vunpack.c.l.b16 %v1622
    %v2998 = vunpack.c.h.b16 %v1622
    %v2999 = vunpack.c.l.b16 %v1623
    %v3000 = vunpack.c.h.b16 %v1623
    %v3001 = vunpack.c.l.b16 %v1624
    %v3002 = vunpack.c.h.b16 %v1624
    %v3003 = vunpack.c.l.b16 %v1625
    %v3004 = vunpack.c.h.b16 %v1625
    %v3005 = vunpack.c.l.b16 %v1626
    %v3006 = vunpack.c.h.b16 %v1626
    %v3007 = vunpack.c.l.b16 %v1627
    %v3008 = vunpack.c.h.b16 %v1627
    %v3009 = vunpack.c.l.b16 %v1628
    %v3010 = vunpack.c.h.b16 %v1628
    %v3011 = vunpack.c.l.b16 %v1629
    %v3012 = vunpack.c.h.b16 %v1629
    %v3013 = vunpack.c.l.b16 %v1630
    %v3014 = vunpack.c.h.b16 %v1630
    %v3015 = vunpack.c.l.b16 %v1631
    %v3016 = vunpack.c.h.b16 %v1631
    %v3017 = vunpack.c.l.b16 %v1632
    %v3018 = vunpack.c.h.b16 %v1632
    %v3019 = vunpack.c.l.b16 %v1633
    %v3020 = vunpack.c.h.b16 %v1633
    %v3021 = vunpack.c.l.b16 %v1634
    %v3022 = vunpack.c.h.b16 %v1634
    %v3023 = vunpack.c.l.b16 %v1635
    %v3024 = vunpack.c.h.b16 %v1635
    %v3025 = vunpack.c.l.b16 %v1636
    %v3026 = vunpack.c.h.b16 %v1636
    %v3027 = vunpack.c.l.b16 %v1637
    %v3028 = vunpack.c.h.b16 %v1637
    %v3029 = vunpack.c.l.b16 %v1638
    %v3030 = vunpack.c.h.b16 %v1638
    %v3031 = vunpack.c.l.b16 %v1639
    %v3032 = vunpack.c.h.b16 %v1639
    %v3033 = vunpack.c.l.b16 %v1640
    %v3034 = vunpack.c.h.b16 %v1640
    %v3035 = vunpack.c.l.b16 %v1641
    %v3036 = vunpack.c.h.b16 %v1641
    %v3037 = vunpack.c.l.b16 %v1642
    %v3038 = vunpack.c.h.b16 %v1642
    %v3039 = vunpack.c.l.b16 %v1643
    %v3040 = vunpack.c.h.b16 %v1643
    %v3041 = vunpack.c.l.b16 %v1644
    %v3042 = vunpack.c.h.b16 %v1644
    %v3043 = vunpack.c.l.b16 %v1645
    %v3044 = vunpack.c.h.b16 %v1645
    %v3045 = vunpack.c.l.b16 %v1646
    %v3046 = vunpack.c.h.b16 %v1646
    %v3047 = vunpack.c.l.b16 %v1647
    %v3048 = vunpack.c.h.b16 %v1647
    %v3049 = vunpack.c.l.b16 %v1648
    %v3050 = vunpack.c.h.b16 %v1648
    %v3051 = vunpack.c.l.b16 %v1649
    %v3052 = vunpack.c.h.b16 %v1649
    %v3053 = vunpack.c.l.b16 %v1650
    %v3054 = vunpack.c.h.b16 %v1650
    %v3055 = vunpack.c.l.b16 %v1651
    %v3056 = vunpack.c.h.b16 %v1651
    %v3057 = vunpack.c.l.b16 %v1652
    %v3058 = vunpack.c.h.b16 %v1652
    %v3059 = vunpack.c.l.b16 %v1653
    %v3060 = vunpack.c.h.b16 %v1653
    %v3061 = vunpack.c.l.b16 %v1654
    %v3062 = vunpack.c.h.b16 %v1654
    %v3063 = vunpack.c.l.b16 %v1655
    %v3064 = vunpack.c.h.b16 %v1655
    %v3065 = vunpack.c.l.b16 %v1656
    %v3066 = vunpack.c.h.b16 %v1656
    %v3067 = vunpack.c.l.b16 %v1657
    %v3068 = vunpack.c.h.b16 %v1657
    %v3069 = vunpack.c.l.b16 %v1658
    %v3070 = vunpack.c.h.b16 %v1658
    %v3071 = vunpack.c.l.b16 %v1659
    %v3072 = vunpack.c.h.b16 %v1659
    %v3073 = vunpack.c.l.b16 %v1660
    %v3074 = vunpack.c.h.b16 %v1660
    %v3075 = vunpack.c.l.b16 %v1661
    %v3076 = vunpack.c.h.b16 %v1661
    %v3077 = vunpack.c.l.b16 %v1662
    %v3078 = vunpack.c.h.b16 %v1662
    %v3079 = vunpack.c.l.b16 %v1663
    %v3080 = vunpack.c.h.b16 %v1663
    %v3081 = vunpack.c.l.b16 %v1664
    %v3082 = vunpack.c.h.b16 %v1664
    %v3083 = vunpack.c.l.b16 %v1665
    %v3084 = vunpack.c.h.b16 %v1665
    %v3085 = vunpack.c.l.b16 %v1666
    %v3086 = vunpack.c.h.b16 %v1666
    %v3087 = vunpack.c.l.b16 %v1667
    %v3088 = vunpack.c.h.b16 %v1667
    %v3089 = vunpack.c.l.b16 %v1668
    %v3090 = vunpack.c.h.b16 %v1668
    %v3091 = vunpack.c.l.b16 %v1669
    %v3092 = vunpack.c.h.b16 %v1669
    %v3093 = vunpack.c.l.b16 %v1670
    %v3094 = vunpack.c.h.b16 %v1670
    %v3095 = vunpack.c.l.b16 %v1671
    %v3096 = vunpack.c.h.b16 %v1671
    %v3097 = vunpack.c.l.b16 %v1672
    %v3098 = vunpack.c.h.b16 %v1672
    %v3099 = vunpack.c.l.b16 %v1673
    %v3100 = vunpack.c.h.b16 %v1673
    %v3101 = vunpack.c.l.b16 %v1674
    %v3102 = vunpack.c.h.b16 %v1674
    %v3103 = vunpack.c.l.b16 %v1675
    %v3104 = vunpack.c.h.b16 %v1675
    %v3105 = vunpack.c.l.b16 %v1676
    %v3106 = vunpack.c.h.b16 %v1676
    %v3107 = vunpack.c.l.b16 %v1677
    %v3108 = vunpack.c.h.b16 %v1677
    %v3109 = vunpack.c.l.b16 %v1678
    %v3110 = vunpack.c.h.b16 %v1678
    %v3111 = vunpack.c.l.b16 %v1679
    %v3112 = vunpack.c.h.b16 %v1679
    %v3113 = vunpack.c.l.b16 %v1680
    %v3114 = vunpack.c.h.b16 %v1680
    %v3115 = vunpack.c.l.b16 %v1681
    %v3116 = vunpack.c.h.b16 %v1681
    %v3117 = vunpack.c.l.b16 %v1682
    %v3118 = vunpack.c.h.b16 %v1682
    %v3119 = vunpack.c.l.b16 %v1683
    %v3120 = vunpack.c.h.b16 %v1683
    %v3121 = vunpack.c.l.b16 %v1684
    %v3122 = vunpack.c.h.b16 %v1684
    %v3123 = vunpack.c.l.b16 %v1685
    %v3124 = vunpack.c.h.b16 %v1685
    %v3125 = vunpack.c.l.b16 %v1686
    %v3126 = vunpack.c.h.b16 %v1686
    %v3127 = vunpack.c.l.b16 %v1687
    %v3128 = vunpack.c.h.b16 %v1687
    %v3129 = vunpack.c.l.b16 %v1688
    %v3130 = vunpack.c.h.b16 %v1688
    %v3131 = vunpack.c.l.b16 %v1689
    %v3132 = vunpack.c.h.b16 %v1689
    %v3133 = vunpack.c.l.b16 %v1690
    %v3134 = vunpack.c.h.b16 %v1690
    %v3135 = vunpack.c.l.b16 %v1691
    %v3136 = vunpack.c.h.b16 %v1691
    %v3137 = vunpack.c.l.b16 %v1692
    %v3138 = vunpack.c.h.b16 %v1692
    %v3139 = vunpack.c.l.b16 %v1693
    %v3140 = vunpack.c.h.b16 %v1693
    %v3141 = vunpack.c.l.b16 %v1694
    %v3142 = vunpack.c.h.b16 %v1694
    %v3143 = vunpack.c.l.b16 %v1695
    %v3144 = vunpack.c.h.b16 %v1695
    %v3145 = vunpack.c.l.b16 %v1696
    %v3146 = vunpack.c.h.b16 %v1696
    %v3147 = vunpack.c.l.b16 %v1697
    %v3148 = vunpack.c.h.b16 %v1697
    %v3149 = vunpack.c.l.b16 %v1698
    %v3150 = vunpack.c.h.b16 %v1698
    %v3151 = vunpack.c.l.b16 %v1699
    %v3152 = vunpack.c.h.b16 %v1699
    %v3153 = vunpack.c.l.b16 %v1700
    %v3154 = vunpack.c.h.b16 %v1700
    %v3155 = vunpack.c.l.b16 %v1701
    %v3156 = vunpack.c.h.b16 %v1701
    %v3157 = vunpack.c.l.b16 %v1702
    %v3158 = vunpack.c.h.b16 %v1702
    %v3159 = vunpack.c.l.b16 %v1703
    %v3160 = vunpack.c.h.b16 %v1703
    %v3161 = vunpack.c.l.b16 %v1704
    %v3162 = vunpack.c.h.b16 %v1704
    %v3163 = vunpack.c.l.b16 %v1705
    %v3164 = vunpack.c.h.b16 %v1705
    %v3165 = vunpack.c.l.b16 %v1706
    %v3166 = vunpack.c.h.b16 %v1706
    %v3167 = vunpack.c.l.b16 %v1707
    %v3168 = vunpack.c.h.b16 %v1707
    %v3169 = vunpack.c.l.b16 %v1708
    %v3170 = vunpack.c.h.b16 %v1708
    %v3171 = vunpack.c.l.b16 %v1709
    %v3172 = vunpack.c.h.b16 %v1709
    %v3173 = vunpack.c.l.b16 %v1710
    %v3174 = vunpack.c.h.b16 %v1710
    %v3175 = vunpack.c.l.b16 %v1711
    %v3176 = vunpack.c.h.b16 %v1711
    %v3177 = vunpack.c.l.b16 %v1712
    %v3178 = vunpack.c.h.b16 %v1712
    %v3179 = vunpack.c.l.b16 %v1713
    %v3180 = vunpack.c.h.b16 %v1713
    %v3181 = vunpack.c.l.b16 %v1714
    %v3182 = vunpack.c.h.b16 %v1714
    %v3183 = vunpack.c.l.b16 %v1715
    %v3184 = vunpack.c.h.b16 %v1715
    %v3185 = vunpack.c.l.b16 %v1716
    %v3186 = vunpack.c.h.b16 %v1716
    %v3187 = vunpack.c.l.b16 %v1717
    %v3188 = vunpack.c.h.b16 %v1717
    %v3189 = vunpack.c.l.b16 %v1718
    %v3190 = vunpack.c.h.b16 %v1718
    %v3191 = vunpack.c.l.b16 %v1719
    %v3192 = vunpack.c.h.b16 %v1719
    %v3193 = vunpack.c.l.b16 %v1720
    %v3194 = vunpack.c.h.b16 %v1720
    %v3195 = vunpack.c.l.b16 %v1721
    %v3196 = vunpack.c.h.b16 %v1721
    %v3197 = vunpack.c.l.b16 %v1722
    %v3198 = vunpack.c.h.b16 %v1722
    %v3199 = vunpack.c.l.b16 %v1723
    %v3200 = vunpack.c.h.b16 %v1723
    %v3201 = vunpack.c.l.b16 %v1724
    %v3202 = vunpack.c.h.b16 %v1724
    %v3203 = vunpack.c.l.b16 %v1725
    %v3204 = vunpack.c.h.b16 %v1725
    %v3205 = vunpack.c.l.b16 %v1726
    %v3206 = vunpack.c.h.b16 %v1726
    %v3207 = vunpack.c.l.b16 %v1727
    %v3208 = vunpack.c.h.b16 %v1727
    %v3209 = vunpack.c.l.b16 %v1728
    %v3210 = vunpack.c.h.b16 %v1728
    %v3211 = vunpack.c.l.b16 %v1729
    %v3212 = vunpack.c.h.b16 %v1729
    %v3213 = vunpack.c.l.b16 %v1730
    %v3214 = vunpack.c.h.b16 %v1730
    %v3215 = vunpack.c.l.b16 %v1731
    %v3216 = vunpack.c.h.b16 %v1731
    %v3217 = vunpack.c.l.b16 %v1732
    %v3218 = vunpack.c.h.b16 %v1732
    %v3219 = vunpack.c.l.b16 %v1733
    %v3220 = vunpack.c.h.b16 %v1733
    %v3221 = vunpack.c.l.b16 %v1734
    %v3222 = vunpack.c.h.b16 %v1734
    %v3223 = vunpack.c.l.b16 %v1735
    %v3224 = vunpack.c.h.b16 %v1735
    %v3225 = vunpack.c.l.b16 %v1736
    %v3226 = vunpack.c.h.b16 %v1736
    %v3227 = vunpack.c.l.b16 %v1737
    %v3228 = vunpack.c.h.b16 %v1737
    %v3229 = vunpack.c.l.b16 %v1738
    %v3230 = vunpack.c.h.b16 %v1738
    %v3231 = vunpack.c.l.b16 %v1739
    %v3232 = vunpack.c.h.b16 %v1739
    %v3233 = vunpack.c.l.b16 %v1740
    %v3234 = vunpack.c.h.b16 %v1740
    %v3235 = vunpack.c.l.b16 %v1741
    %v3236 = vunpack.c.h.b16 %v1741
    %v3237 = vunpack.c.l.b16 %v1742
    %v3238 = vunpack.c.h.b16 %v1742
    %v3239 = vunpack.c.l.b16 %v1743
    %v3240 = vunpack.c.h.b16 %v1743
    %v3241 = vunpack.c.l.b16 %v1744
    %v3242 = vunpack.c.h.b16 %v1744
    %v3243 = vunpack.c.l.b16 %v1745
    %v3244 = vunpack.c.h.b16 %v1745
    %v3245 = vunpack.c.l.b16 %v1746
    %v3246 = vunpack.c.h.b16 %v1746
    %v3247 = vunpack.c.l.b16 %v1747
    %v3248 = vunpack.c.h.b16 %v1747
    %v3249 = vunpack.c.l.b16 %v1748
    %v3250 = vunpack.c.h.b16 %v1748
    %v3251 = vunpack.c.l.b16 %v1749
    %v3252 = vunpack.c.h.b16 %v1749
    %v3253 = vunpack.c.l.b16 %v1750
    %v3254 = vunpack.c.h.b16 %v1750
    %v3255 = vunpack.c.l.b16 %v1751
    %v3256 = vunpack.c.h.b16 %v1751
    %v3257 = vunpack.c.l.b16 %v1752
    %v3258 = vunpack.c.h.b16 %v1752
    %v3259 = vunpack.c.l.b16 %v1753
    %v3260 = vunpack.c.h.b16 %v1753
    %v3261 = vunpack.c.l.b16 %v1754
    %v3262 = vunpack.c.h.b16 %v1754
    %v3263 = vunpack.c.l.b16 %v1755
    %v3264 = vunpack.c.h.b16 %v1755
    %v3265 = vunpack.c.l.b16 %v1756
    %v3266 = vunpack.c.h.b16 %v1756
    %v3267 = vunpack.c.l.b16 %v1757
    %v3268 = vunpack.c.h.b16 %v1757
    %v3269 = vunpack.c.l.b16 %v1758
    %v3270 = vunpack.c.h.b16 %v1758
    %v3271 = vunpack.c.l.b16 %v1759
    %v3272 = vunpack.c.h.b16 %v1759
    %v3273 = vunpack.c.l.b16 %v1760
    %v3274 = vunpack.c.h.b16 %v1760
    %v3275 = vunpack.c.l.b16 %v1761
    %v3276 = vunpack.c.h.b16 %v1761
    %v3277 = vunpack.c.l.b16 %v1762
    %v3278 = vunpack.c.h.b16 %v1762
    %v3279 = vunpack.c.l.b16 %v1763
    %v3280 = vunpack.c.h.b16 %v1763
    %v3281 = vunpack.c.l.b16 %v1764
    %v3282 = vunpack.c.h.b16 %v1764
    %v3283 = vunpack.c.l.b16 %v1765
    %v3284 = vunpack.c.h.b16 %v1765
    %v3285 = vunpack.c.l.b16 %v1766
    %v3286 = vunpack.c.h.b16 %v1766
    %v3287 = vunpack.c.l.b16 %v1767
    %v3288 = vunpack.c.h.b16 %v1767
    %v3289 = vunpack.c.l.b16 %v1768
    %v3290 = vunpack.c.h.b16 %v1768
    %v3291 = vunpack.c.l.b16 %v1769
    %v3292 = vunpack.c.h.b16 %v1769
    %v3293 = vunpack.c.l.b16 %v1770
    %v3294 = vunpack.c.h.b16 %v1770
    %v3295 = vunpack.c.l.b16 %v1771
    %v3296 = vunpack.c.h.b16 %v1771
    %v3297 = vunpack.c.l.b16 %v1772
    %v3298 = vunpack.c.h.b16 %v1772
    %v3299 = vunpack.c.l.b16 %v1773
    %v3300 = vunpack.c.h.b16 %v1773
    %v3301 = vunpack.c.l.b16 %v1774
    %v3302 = vunpack.c.h.b16 %v1774
    %v3303 = vunpack.c.l.b16 %v1775
    %v3304 = vunpack.c.h.b16 %v1775
    %v3305 = vunpack.c.l.b16 %v1776
    %v3306 = vunpack.c.h.b16 %v1776
    %v3307 = vunpack.c.l.b16 %v1777
    %v3308 = vunpack.c.h.b16 %v1777
    %v3309 = vunpack.c.l.b16 %v1778
    %v3310 = vunpack.c.h.b16 %v1778
    %v3311 = vunpack.c.l.b16 %v1779
    %v3312 = vunpack.c.h.b16 %v1779
    %v3313 = vunpack.c.l.b16 %v1780
    %v3314 = vunpack.c.h.b16 %v1780
    %v3315 = vunpack.c.l.b16 %v1781
    %v3316 = vunpack.c.h.b16 %v1781
    %v3317 = vunpack.c.l.b16 %v1782
    %v3318 = vunpack.c.h.b16 %v1782
    %v3319 = vunpack.c.l.b16 %v1783
    %v3320 = vunpack.c.h.b16 %v1783
    %v3321 = vunpack.c.l.b16 %v1784
    %v3322 = vunpack.c.h.b16 %v1784
    %v3323 = vunpack.c.l.b16 %v1785
    %v3324 = vunpack.c.h.b16 %v1785
    %v3325 = vunpack.c.l.b16 %v1786
    %v3326 = vunpack.c.h.b16 %v1786
    %v3327 = vunpack.c.l.b16 %v1787
    %v3328 = vunpack.c.h.b16 %v1787
    %v3329 = vunpack.c.l.b16 %v1788
    %v3330 = vunpack.c.h.b16 %v1788
    %v3331 = vunpack.c.l.b16 %v1789
    %v3332 = vunpack.c.h.b16 %v1789
    %v3333 = vunpack.c.l.b16 %v1790
    %v3334 = vunpack.c.h.b16 %v1790
    %v3335 = vunpack.c.l.b16 %v1791
    %v3336 = vunpack.c.h.b16 %v1791
    %v3337 = vunpack.c.l.b16 %v1792
    %v3338 = vunpack.c.h.b16 %v1792
    %v3339 = vunpack.c.l.b16 %v1793
    %v3340 = vunpack.c.h.b16 %v1793
    %v3341 = vunpack.c.l.b16 %v1794
    %v3342 = vunpack.c.h.b16 %v1794
    %v3343 = vunpack.c.l.b16 %v1795
    %v3344 = vunpack.c.h.b16 %v1795
    %v3345 = vunpack.c.l.b16 %v1796
    %v3346 = vunpack.c.h.b16 %v1796
    %v3347 = vunpack.c.l.b16 %v1797
    %v3348 = vunpack.c.h.b16 %v1797
    %v3349 = vunpack.c.l.b16 %v1798
    %v3350 = vunpack.c.h.b16 %v1798
    %v3351 = vunpack.c.l.b16 %v1799
    %v3352 = vunpack.c.h.b16 %v1799
    %v3353 = vunpack.c.l.b16 %v1800
    %v3354 = vunpack.c.h.b16 %v1800
    %v3355 = vunpack.c.l.b16 %v1801
    %v3356 = vunpack.c.h.b16 %v1801
    %v3357 = vunpack.c.l.b16 %v1802
    %v3358 = vunpack.c.h.b16 %v1802
    %v3359 = vunpack.c.l.b16 %v1803
    %v3360 = vunpack.c.h.b16 %v1803
    %v3361 = vunpack.c.l.b16 %v1804
    %v3362 = vunpack.c.h.b16 %v1804
    %v3363 = vpack.c.b16 %v2343, %v2339
    %v3364 = vpack.c.b16 %v2344, %v2340
    %v3365 = vpack.c.b16 %v2345, %v2341
    %v3366 = vpack.c.b16 %v2346, %v2342
    %v3367 = vpack.c.b16 %v2351, %v2347
    %v3368 = vpack.c.b16 %v2352, %v2348
    %v3369 = vpack.c.b16 %v2353, %v2349
    %v3370 = vpack.c.b16 %v2354, %v2350
    %v3371 = vpack.c.b16 %v2359, %v2355
    %v3372 = vpack.c.b16 %v2360, %v2356
    %v3373 = vpack.c.b16 %v2361, %v2357
    %v3374 = vpack.c.b16 %v2362, %v2358
    %v3375 = vpack.c.b16 %v2367, %v2363
    %v3376 = vpack.c.b16 %v2368, %v2364
    %v3377 = vpack.c.b16 %v2369, %v2365
    %v3378 = vpack.c.b16 %v2370, %v2366
    %v3379 = vpack.c.b16 %v2375, %v2371
    %v3380 = vpack.c.b16 %v2376, %v2372
    %v3381 = vpack.c.b16 %v2377, %v2373
    %v3382 = vpack.c.b16 %v2378, %v2374
    %v3383 = vpack.c.b16 %v2383, %v2379
    %v3384 = vpack.c.b16 %v2384, %v2380
    %v3385 = vpack.c.b16 %v2385, %v2381
    %v3386 = vpack.c.b16 %v2386, %v2382
    %v3387 = vpack.c.b16 %v2391, %v2387
    %v3388 = vpack.c.b16 %v2392, %v2388
    %v3389 = vpack.c.b16 %v2393, %v2389
    %v3390 = vpack.c.b16 %v2394, %v2390
    %v3391 = vpack.c.b16 %v2399, %v2395
    %v3392 = vpack.c.b16 %v2400, %v2396
    %v3393 = vpack.c.b16 %v2401, %v2397
    %v3394 = vpack.c.b16 %v2402, %v2398
    %v3395 = vpack.c.b16 %v2407, %v2403
    %v3396 = vpack.c.b16 %v2408, %v2404
    %v3397 = vpack.c.b16 %v2409, %v2405
    %v3398 = vpack.c.b16 %v2410, %v2406
    %v3399 = vpack.c.b16 %v2415, %v2411
    %v3400 = vpack.c.b16 %v2416, %v2412
    %v3401 = vpack.c.b16 %v2417, %v2413
    %v3402 = vpack.c.b16 %v2418, %v2414
    %v3403 = vpack.c.b16 %v2423, %v2419
    %v3404 = vpack.c.b16 %v2424, %v2420
    %v3405 = vpack.c.b16 %v2425, %v2421
    %v3406 = vpack.c.b16 %v2426, %v2422
    %v3407 = vpack.c.b16 %v2431, %v2427
    %v3408 = vpack.c.b16 %v2432, %v2428
    %v3409 = vpack.c.b16 %v2433, %v2429
    %v3410 = vpack.c.b16 %v2434, %v2430
    %v3411 = vpack.c.b16 %v2439, %v2435
    %v3412 = vpack.c.b16 %v2440, %v2436
    %v3413 = vpack.c.b16 %v2441, %v2437
    %v3414 = vpack.c.b16 %v2442, %v2438
    %v3415 = vpack.c.b16 %v2447, %v2443
    %v3416 = vpack.c.b16 %v2448, %v2444
    %v3417 = vpack.c.b16 %v2449, %v2445
    %v3418 = vpack.c.b16 %v2450, %v2446
    %v3419 = vpack.c.b16 %v2455, %v2451
    %v3420 = vpack.c.b16 %v2456, %v2452
    %v3421 = vpack.c.b16 %v2457, %v2453
    %v3422 = vpack.c.b16 %v2458, %v2454
    %v3423 = vpack.c.b16 %v2463, %v2459
    %v3424 = vpack.c.b16 %v2464, %v2460
    %v3425 = vpack.c.b16 %v2465, %v2461
    %v3426 = vpack.c.b16 %v2466, %v2462
    %v3427 = vpack.c.b16 %v2471, %v2467
    %v3428 = vpack.c.b16 %v2472, %v2468
    %v3429 = vpack.c.b16 %v2473, %v2469
    %v3430 = vpack.c.b16 %v2474, %v2470
    %v3431 = vpack.c.b16 %v2479, %v2475
    %v3432 = vpack.c.b16 %v2480, %v2476
    %v3433 = vpack.c.b16 %v2481, %v2477
    %v3434 = vpack.c.b16 %v2482, %v2478
    %v3435 = vpack.c.b16 %v2487, %v2483
    %v3436 = vpack.c.b16 %v2488, %v2484
    %v3437 = vpack.c.b16 %v2489, %v2485
    %v3438 = vpack.c.b16 %v2490, %v2486
    %v3439 = vpack.c.b16 %v2495, %v2491
    %v3440 = vpack.c.b16 %v2496, %v2492
    %v3441 = vpack.c.b16 %v2497, %v2493
    %v3442 = vpack.c.b16 %v2498, %v2494
    %v3443 = vpack.c.b16 %v2503, %v2499
    %v3444 = vpack.c.b16 %v2504, %v2500
    %v3445 = vpack.c.b16 %v2505, %v2501
    %v3446 = vpack.c.b16 %v2506, %v2502
    %v3447 = vpack.c.b16 %v2511, %v2507
    %v3448 = vpack.c.b16 %v2512, %v2508
    %v3449 = vpack.c.b16 %v2513, %v2509
    %v3450 = vpack.c.b16 %v2514, %v2510
    %v3451 = vpack.c.b16 %v2519, %v2515
    %v3452 = vpack.c.b16 %v2520, %v2516
    %v3453 = vpack.c.b16 %v2521, %v2517
    %v3454 = vpack.c.b16 %v2522, %v2518
    %v3455 = vpack.c.b16 %v2527, %v2523
    %v3456 = vpack.c.b16 %v2528, %v2524
    %v3457 = vpack.c.b16 %v2529, %v2525
    %v3458 = vpack.c.b16 %v2530, %v2526
    %v3459 = vpack.c.b16 %v2535, %v2531
    %v3460 = vpack.c.b16 %v2536, %v2532
    %v3461 = vpack.c.b16 %v2537, %v2533
    %v3462 = vpack.c.b16 %v2538, %v2534
    %v3463 = vpack.c.b16 %v2543, %v2539
    %v3464 = vpack.c.b16 %v2544, %v2540
    %v3465 = vpack.c.b16 %v2545, %v2541
    %v3466 = vpack.c.b16 %v2546, %v2542
    %v3467 = vpack.c.b16 %v2551, %v2547
    %v3468 = vpack.c.b16 %v2552, %v2548
    %v3469 = vpack.c.b16 %v2553, %v2549
    %v3470 = vpack.c.b16 %v2554, %v2550
    %v3471 = vpack.c.b16 %v2559, %v2555
    %v3472 = vpack.c.b16 %v2560, %v2556
    %v3473 = vpack.c.b16 %v2561, %v2557
    %v3474 = vpack.c.b16 %v2562, %v2558
    %v3475 = vpack.c.b16 %v2567, %v2563
    %v3476 = vpack.c.b16 %v2568, %v2564
    %v3477 = vpack.c.b16 %v2569, %v2565
    %v3478 = vpack.c.b16 %v2570, %v2566
    %v3479 = vpack.c.b16 %v2575, %v2571
    %v3480 = vpack.c.b16 %v2576, %v2572
    %v3481 = vpack.c.b16 %v2577, %v2573
    %v3482 = vpack.c.b16 %v2578, %v2574
    %v3483 = vpack.c.b16 %v2583, %v2579
    %v3484 = vpack.c.b16 %v2584, %v2580
    %v3485 = vpack.c.b16 %v2585, %v2581
    %v3486 = vpack.c.b16 %v2586, %v2582
    %v3487 = vpack.c.b16 %v2591, %v2587
    %v3488 = vpack.c.b16 %v2592, %v2588
    %v3489 = vpack.c.b16 %v2593, %v2589
    %v3490 = vpack.c.b16 %v2594, %v2590
    %v3491 = vpack.c.b16 %v2599, %v2595
    %v3492 = vpack.c.b16 %v2600, %v2596
    %v3493 = vpack.c.b16 %v2601, %v2597
    %v3494 = vpack.c.b16 %v2602, %v2598
    %v3495 = vpack.c.b16 %v2607, %v2603
    %v3496 = vpack.c.b16 %v2608, %v2604
    %v3497 = vpack.c.b16 %v2609, %v2605
    %v3498 = vpack.c.b16 %v2610, %v2606
    %v3499 = vpack.c.b16 %v2615, %v2611
    %v3500 = vpack.c.b16 %v2616, %v2612
    %v3501 = vpack.c.b16 %v2617, %v2613
    %v3502 = vpack.c.b16 %v2618, %v2614
    %v3503 = vpack.c.b16 %v2623, %v2619
    %v3504 = vpack.c.b16 %v2624, %v2620
    %v3505 = vpack.c.b16 %v2625, %v2621
    %v3506 = vpack.c.b16 %v2626, %v2622
    %v3507 = vpack.c.b16 %v2631, %v2627
    %v3508 = vpack.c.b16 %v2632, %v2628
    %v3509 = vpack.c.b16 %v2633, %v2629
    %v3510 = vpack.c.b16 %v2634, %v2630
    %v3511 = vpack.c.b16 %v2639, %v2635
    %v3512 = vpack.c.b16 %v2640, %v2636
    %v3513 = vpack.c.b16 %v2641, %v2637
    %v3514 = vpack.c.b16 %v2642, %v2638
    %v3515 = vpack.c.b16 %v2647, %v2643
    %v3516 = vpack.c.b16 %v2648, %v2644
    %v3517 = vpack.c.b16 %v2649, %v2645
    %v3518 = vpack.c.b16 %v2650, %v2646
    %v3519 = vpack.c.b16 %v2655, %v2651
    %v3520 = vpack.c.b16 %v2656, %v2652
    %v3521 = vpack.c.b16 %v2657, %v2653
    %v3522 = vpack.c.b16 %v2658, %v2654
    %v3523 = vpack.c.b16 %v2663, %v2659
    %v3524 = vpack.c.b16 %v2664, %v2660
    %v3525 = vpack.c.b16 %v2665, %v2661
    %v3526 = vpack.c.b16 %v2666, %v2662
    %v3527 = vpack.c.b16 %v2671, %v2667
    %v3528 = vpack.c.b16 %v2672, %v2668
    %v3529 = vpack.c.b16 %v2673, %v2669
    %v3530 = vpack.c.b16 %v2674, %v2670
    %v3531 = vpack.c.b16 %v2679, %v2675
    %v3532 = vpack.c.b16 %v2680, %v2676
    %v3533 = vpack.c.b16 %v2681, %v2677
    %v3534 = vpack.c.b16 %v2682, %v2678
    %v3535 = vpack.c.b16 %v2687, %v2683
    %v3536 = vpack.c.b16 %v2688, %v2684
    %v3537 = vpack.c.b16 %v2689, %v2685
    %v3538 = vpack.c.b16 %v2690, %v2686
    %v3539 = vpack.c.b16 %v2695, %v2691
    %v3540 = vpack.c.b16 %v2696, %v2692
    %v3541 = vpack.c.b16 %v2697, %v2693
    %v3542 = vpack.c.b16 %v2698, %v2694
    %v3543 = vpack.c.b16 %v2703, %v2699
    %v3544 = vpack.c.b16 %v2704, %v2700
    %v3545 = vpack.c.b16 %v2705, %v2701
    %v3546 = vpack.c.b16 %v2706, %v2702
    %v3547 = vpack.c.b16 %v2711, %v2707
    %v3548 = vpack.c.b16 %v2712, %v2708
    %v3549 = vpack.c.b16 %v2713, %v2709
    %v3550 = vpack.c.b16 %v2714, %v2710
    %v3551 = vpack.c.b16 %v2719, %v2715
    %v3552 = vpack.c.b16 %v2720, %v2716
    %v3553 = vpack.c.b16 %v2721, %v2717
    %v3554 = vpack.c.b16 %v2722, %v2718
    %v3555 = vpack.c.b16 %v2727, %v2723
    %v3556 = vpack.c.b16 %v2728, %v2724
    %v3557 = vpack.c.b16 %v2729, %v2725
    %v3558 = vpack.c.b16 %v2730, %v2726
    %v3559 = vpack.c.b16 %v2735, %v2731
    %v3560 = vpack.c.b16 %v2736, %v2732
    %v3561 = vpack.c.b16 %v2737, %v2733
    %v3562 = vpack.c.b16 %v2738, %v2734
    %v3563 = vpack.c.b16 %v2743, %v2739
    %v3564 = vpack.c.b16 %v2744, %v2740
    %v3565 = vpack.c.b16 %v2745, %v2741
    %v3566 = vpack.c.b16 %v2746, %v2742
    %v3567 = vpack.c.b16 %v2751, %v2747
    %v3568 = vpack.c.b16 %v2752, %v2748
    %v3569 = vpack.c.b16 %v2753, %v2749
    %v3570 = vpack.c.b16 %v2754, %v2750
    %v3571 = vpack.c.b16 %v2759, %v2755
    %v3572 = vpack.c.b16 %v2760, %v2756
    %v3573 = vpack.c.b16 %v2761, %v2757
    %v3574 = vpack.c.b16 %v2762, %v2758
    %v3575 = vpack.c.b16 %v2767, %v2763
    %v3576 = vpack.c.b16 %v2768, %v2764
    %v3577 = vpack.c.b16 %v2769, %v2765
    %v3578 = vpack.c.b16 %v2770, %v2766
    %v3579 = vpack.c.b16 %v2775, %v2771
    %v3580 = vpack.c.b16 %v2776, %v2772
    %v3581 = vpack.c.b16 %v2777, %v2773
    %v3582 = vpack.c.b16 %v2778, %v2774
    %v3583 = vpack.c.b16 %v2783, %v2779
    %v3584 = vpack.c.b16 %v2784, %v2780
    %v3585 = vpack.c.b16 %v2785, %v2781
    %v3586 = vpack.c.b16 %v2786, %v2782
    %v3587 = vpack.c.b16 %v2791, %v2787
    %v3588 = vpack.c.b16 %v2792, %v2788
    %v3589 = vpack.c.b16 %v2793, %v2789
    %v3590 = vpack.c.b16 %v2794, %v2790
    %v3591 = vpack.c.b16 %v2799, %v2795
    %v3592 = vpack.c.b16 %v2800, %v2796
    %v3593 = vpack.c.b16 %v2801, %v2797
    %v3594 = vpack.c.b16 %v2802, %v2798
    %v3595 = vpack.c.b16 %v2807, %v2803
    %v3596 = vpack.c.b16 %v2808, %v2804
    %v3597 = vpack.c.b16 %v2809, %v2805
    %v3598 = vpack.c.b16 %v2810, %v2806
    %v3599 = vpack.c.b16 %v2815, %v2811
    %v3600 = vpack.c.b16 %v2816, %v2812
    %v3601 = vpack.c.b16 %v2817, %v2813
    %v3602 = vpack.c.b16 %v2818, %v2814
    %v3603 = vpack.c.b16 %v2823, %v2819
    %v3604 = vpack.c.b16 %v2824, %v2820
    %v3605 = vpack.c.b16 %v2825, %v2821
    %v3606 = vpack.c.b16 %v2826, %v2822
    %v3607 = vpack.c.b16 %v2831, %v2827
    %v3608 = vpack.c.b16 %v2832, %v2828
    %v3609 = vpack.c.b16 %v2833, %v2829
    %v3610 = vpack.c.b16 %v2834, %v2830
    %v3611 = vpack.c.b16 %v2839, %v2835
    %v3612 = vpack.c.b16 %v2840, %v2836
    %v3613 = vpack.c.b16 %v2841, %v2837
    %v3614 = vpack.c.b16 %v2842, %v2838
    %v3615 = vpack.c.b16 %v2847, %v2843
    %v3616 = vpack.c.b16 %v2848, %v2844
    %v3617 = vpack.c.b16 %v2849, %v2845
    %v3618 = vpack.c.b16 %v2850, %v2846
    %v3619 = vpack.c.b16 %v2855, %v2851
    %v3620 = vpack.c.b16 %v2856, %v2852
    %v3621 = vpack.c.b16 %v2857, %v2853
    %v3622 = vpack.c.b16 %v2858, %v2854
    %v3623 = vpack.c.b16 %v2863, %v2859
    %v3624 = vpack.c.b16 %v2864, %v2860
    %v3625 = vpack.c.b16 %v2865, %v2861
    %v3626 = vpack.c.b16 %v2866, %v2862
    %v3627 = vpack.c.b16 %v2871, %v2867
    %v3628 = vpack.c.b16 %v2872, %v2868
    %v3629 = vpack.c.b16 %v2873, %v2869
    %v3630 = vpack.c.b16 %v2874, %v2870
    %v3631 = vpack.c.b16 %v2879, %v2875
    %v3632 = vpack.c.b16 %v2880, %v2876
    %v3633 = vpack.c.b16 %v2881, %v2877
    %v3634 = vpack.c.b16 %v2882, %v2878
    %v3635 = vpack.c.b16 %v2887, %v2883
    %v3636 = vpack.c.b16 %v2888, %v2884
    %v3637 = vpack.c.b16 %v2889, %v2885
    %v3638 = vpack.c.b16 %v2890, %v2886
    %v3639 = vpack.c.b16 %v2895, %v2891
    %v3640 = vpack.c.b16 %v2896, %v2892
    %v3641 = vpack.c.b16 %v2897, %v2893
    %v3642 = vpack.c.b16 %v2898, %v2894
    %v3643 = vpack.c.b16 %v2903, %v2899
    %v3644 = vpack.c.b16 %v2904, %v2900
    %v3645 = vpack.c.b16 %v2905, %v2901
    %v3646 = vpack.c.b16 %v2906, %v2902
    %v3647 = vpack.c.b16 %v2911, %v2907
    %v3648 = vpack.c.b16 %v2912, %v2908
    %v3649 = vpack.c.b16 %v2913, %v2909
    %v3650 = vpack.c.b16 %v2914, %v2910
    %v3651 = vpack.c.b16 %v2919, %v2915
    %v3652 = vpack.c.b16 %v2920, %v2916
    %v3653 = vpack.c.b16 %v2921, %v2917
    %v3654 = vpack.c.b16 %v2922, %v2918
    %v3655 = vpack.c.b16 %v2927, %v2923
    %v3656 = vpack.c.b16 %v2928, %v2924
    %v3657 = vpack.c.b16 %v2929, %v2925
    %v3658 = vpack.c.b16 %v2930, %v2926
    %v3659 = vpack.c.b16 %v2935, %v2931
    %v3660 = vpack.c.b16 %v2936, %v2932
    %v3661 = vpack.c.b16 %v2937, %v2933
    %v3662 = vpack.c.b16 %v2938, %v2934
    %v3663 = vpack.c.b16 %v2943, %v2939
    %v3664 = vpack.c.b16 %v2944, %v2940
    %v3665 = vpack.c.b16 %v2945, %v2941
    %v3666 = vpack.c.b16 %v2946, %v2942
    %v3667 = vpack.c.b16 %v2951, %v2947
    %v3668 = vpack.c.b16 %v2952, %v2948
    %v3669 = vpack.c.b16 %v2953, %v2949
    %v3670 = vpack.c.b16 %v2954, %v2950
    %v3671 = vpack.c.b16 %v2959, %v2955
    %v3672 = vpack.c.b16 %v2960, %v2956
    %v3673 = vpack.c.b16 %v2961, %v2957
    %v3674 = vpack.c.b16 %v2962, %v2958
    %v3675 = vpack.c.b16 %v2967, %v2963
    %v3676 = vpack.c.b16 %v2968, %v2964
    %v3677 = vpack.c.b16 %v2969, %v2965
    %v3678 = vpack.c.b16 %v2970, %v2966
    %v3679 = vpack.c.b16 %v2975, %v2971
    %v3680 = vpack.c.b16 %v2976, %v2972
    %v3681 = vpack.c.b16 %v2977, %v2973
    %v3682 = vpack.c.b16 %v2978, %v2974
    %v3683 = vpack.c.b16 %v2983, %v2979
    %v3684 = vpack.c.b16 %v2984, %v2980
    %v3685 = vpack.c.b16 %v2985, %v2981
    %v3686 = vpack.c.b16 %v2986, %v2982
    %v3687 = vpack.c.b16 %v2991, %v2987
    %v3688 = vpack.c.b16 %v2992, %v2988
    %v3689 = vpack.c.b16 %v2993, %v2989
    %v3690 = vpack.c.b16 %v2994, %v2990
    %v3691 = vpack.c.b16 %v2999, %v2995
    %v3692 = vpack.c.b16 %v3000, %v2996
    %v3693 = vpack.c.b16 %v3001, %v2997
    %v3694 = vpack.c.b16 %v3002, %v2998
    %v3695 = vpack.c.b16 %v3007, %v3003
    %v3696 = vpack.c.b16 %v3008, %v3004
    %v3697 = vpack.c.b16 %v3009, %v3005
    %v3698 = vpack.c.b16 %v3010, %v3006
    %v3699 = vpack.c.b16 %v3015, %v3011
    %v3700 = vpack.c.b16 %v3016, %v3012
    %v3701 = vpack.c.b16 %v3017, %v3013
    %v3702 = vpack.c.b16 %v3018, %v3014
    %v3703 = vpack.c.b16 %v3023, %v3019
    %v3704 = vpack.c.b16 %v3024, %v3020
    %v3705 = vpack.c.b16 %v3025, %v3021
    %v3706 = vpack.c.b16 %v3026, %v3022
    %v3707 = vpack.c.b16 %v3031, %v3027
    %v3708 = vpack.c.b16 %v3032, %v3028
    %v3709 = vpack.c.b16 %v3033, %v3029
    %v3710 = vpack.c.b16 %v3034, %v3030
    %v3711 = vpack.c.b16 %v3039, %v3035
    %v3712 = vpack.c.b16 %v3040, %v3036
    %v3713 = vpack.c.b16 %v3041, %v3037
    %v3714 = vpack.c.b16 %v3042, %v3038
    %v3715 = vpack.c.b16 %v3047, %v3043
    %v3716 = vpack.c.b16 %v3048, %v3044
    %v3717 = vpack.c.b16 %v3049, %v3045
    %v3718 = vpack.c.b16 %v3050, %v3046
    %v3719 = vpack.c.b16 %v3055, %v3051
    %v3720 = vpack.c.b16 %v3056, %v3052
    %v3721 = vpack.c.b16 %v3057, %v3053
    %v3722 = vpack.c.b16 %v3058, %v3054
    %v3723 = vpack.c.b16 %v3063, %v3059
    %v3724 = vpack.c.b16 %v3064, %v3060
    %v3725 = vpack.c.b16 %v3065, %v3061
    %v3726 = vpack.c.b16 %v3066, %v3062
    %v3727 = vpack.c.b16 %v3071, %v3067
    %v3728 = vpack.c.b16 %v3072, %v3068
    %v3729 = vpack.c.b16 %v3073, %v3069
    %v3730 = vpack.c.b16 %v3074, %v3070
    %v3731 = vpack.c.b16 %v3079, %v3075
    %v3732 = vpack.c.b16 %v3080, %v3076
    %v3733 = vpack.c.b16 %v3081, %v3077
    %v3734 = vpack.c.b16 %v3082, %v3078
    %v3735 = vpack.c.b16 %v3087, %v3083
    %v3736 = vpack.c.b16 %v3088, %v3084
    %v3737 = vpack.c.b16 %v3089, %v3085
    %v3738 = vpack.c.b16 %v3090, %v3086
    %v3739 = vpack.c.b16 %v3095, %v3091
    %v3740 = vpack.c.b16 %v3096, %v3092
    %v3741 = vpack.c.b16 %v3097, %v3093
    %v3742 = vpack.c.b16 %v3098, %v3094
    %v3743 = vpack.c.b16 %v3103, %v3099
    %v3744 = vpack.c.b16 %v3104, %v3100
    %v3745 = vpack.c.b16 %v3105, %v3101
    %v3746 = vpack.c.b16 %v3106, %v3102
    %v3747 = vpack.c.b16 %v3111, %v3107
    %v3748 = vpack.c.b16 %v3112, %v3108
    %v3749 = vpack.c.b16 %v3113, %v3109
    %v3750 = vpack.c.b16 %v3114, %v3110
    %v3751 = vpack.c.b16 %v3119, %v3115
    %v3752 = vpack.c.b16 %v3120, %v3116
    %v3753 = vpack.c.b16 %v3121, %v3117
    %v3754 = vpack.c.b16 %v3122, %v3118
    %v3755 = vpack.c.b16 %v3127, %v3123
    %v3756 = vpack.c.b16 %v3128, %v3124
    %v3757 = vpack.c.b16 %v3129, %v3125
    %v3758 = vpack.c.b16 %v3130, %v3126
    %v3759 = vpack.c.b16 %v3135, %v3131
    %v3760 = vpack.c.b16 %v3136, %v3132
    %v3761 = vpack.c.b16 %v3137, %v3133
    %v3762 = vpack.c.b16 %v3138, %v3134
    %v3763 = vpack.c.b16 %v3143, %v3139
    %v3764 = vpack.c.b16 %v3144, %v3140
    %v3765 = vpack.c.b16 %v3145, %v3141
    %v3766 = vpack.c.b16 %v3146, %v3142
    %v3767 = vpack.c.b16 %v3151, %v3147
    %v3768 = vpack.c.b16 %v3152, %v3148
    %v3769 = vpack.c.b16 %v3153, %v3149
    %v3770 = vpack.c.b16 %v3154, %v3150
    %v3771 = vpack.c.b16 %v3159, %v3155
    %v3772 = vpack.c.b16 %v3160, %v3156
    %v3773 = vpack.c.b16 %v3161, %v3157
    %v3774 = vpack.c.b16 %v3162, %v3158
    %v3775 = vpack.c.b16 %v3167, %v3163
    %v3776 = vpack.c.b16 %v3168, %v3164
    %v3777 = vpack.c.b16 %v3169, %v3165
    %v3778 = vpack.c.b16 %v3170, %v3166
    %v3779 = vpack.c.b16 %v3175, %v3171
    %v3780 = vpack.c.b16 %v3176, %v3172
    %v3781 = vpack.c.b16 %v3177, %v3173
    %v3782 = vpack.c.b16 %v3178, %v3174
    %v3783 = vpack.c.b16 %v3183, %v3179
    %v3784 = vpack.c.b16 %v3184, %v3180
    %v3785 = vpack.c.b16 %v3185, %v3181
    %v3786 = vpack.c.b16 %v3186, %v3182
    %v3787 = vpack.c.b16 %v3191, %v3187
    %v3788 = vpack.c.b16 %v3192, %v3188
    %v3789 = vpack.c.b16 %v3193, %v3189
    %v3790 = vpack.c.b16 %v3194, %v3190
    %v3791 = vpack.c.b16 %v3199, %v3195
    %v3792 = vpack.c.b16 %v3200, %v3196
    %v3793 = vpack.c.b16 %v3201, %v3197
    %v3794 = vpack.c.b16 %v3202, %v3198
    %v3795 = vpack.c.b16 %v3207, %v3203
    %v3796 = vpack.c.b16 %v3208, %v3204
    %v3797 = vpack.c.b16 %v3209, %v3205
    %v3798 = vpack.c.b16 %v3210, %v3206
    %v3799 = vpack.c.b16 %v3215, %v3211
    %v3800 = vpack.c.b16 %v3216, %v3212
    %v3801 = vpack.c.b16 %v3217, %v3213
    %v3802 = vpack.c.b16 %v3218, %v3214
    %v3803 = vpack.c.b16 %v3223, %v3219
    %v3804 = vpack.c.b16 %v3224, %v3220
    %v3805 = vpack.c.b16 %v3225, %v3221
    %v3806 = vpack.c.b16 %v3226, %v3222
    %v3807 = vpack.c.b16 %v3231, %v3227
    %v3808 = vpack.c.b16 %v3232, %v3228
    %v3809 = vpack.c.b16 %v3233, %v3229
    %v3810 = vpack.c.b16 %v3234, %v3230
    %v3811 = vpack.c.b16 %v3239, %v3235
    %v3812 = vpack.c.b16 %v3240, %v3236
    %v3813 = vpack.c.b16 %v3241, %v3237
    %v3814 = vpack.c.b16 %v3242, %v3238
    %v3815 = vpack.c.b16 %v3247, %v3243
    %v3816 = vpack.c.b16 %v3248, %v3244
    %v3817 = vpack.c.b16 %v3249, %v3245
    %v3818 = vpack.c.b16 %v3250, %v3246
    %v3819 = vpack.c.b16 %v3255, %v3251
    %v3820 = vpack.c.b16 %v3256, %v3252
    %v3821 = vpack.c.b16 %v3257, %v3253
    %v3822 = vpack.c.b16 %v3258, %v3254
    %v3823 = vpack.c.b16 %v3263, %v3259
    %v3824 = vpack.c.b16 %v3264, %v3260
    %v3825 = vpack.c.b16 %v3265, %v3261
    %v3826 = vpack.c.b16 %v3266, %v3262
    %v3827 = vpack.c.b16 %v3271, %v3267
    %v3828 = vpack.c.b16 %v3272, %v3268
    %v3829 = vpack.c.b16 %v3273, %v3269
    %v3830 = vpack.c.b16 %v3274, %v3270
    %v3831 = vpack.c.b16 %v3279, %v3275
    %v3832 = vpack.c.b16 %v3280, %v3276
    %v3833 = vpack.c.b16 %v3281, %v3277
    %v3834 = vpack.c.b16 %v3282, %v3278
    %v3835 = vpack.c.b16 %v3287, %v3283
    %v3836 = vpack.c.b16 %v3288, %v3284
    %v3837 = vpack.c.b16 %v3289, %v3285
    %v3838 = vpack.c.b16 %v3290, %v3286
    %v3839 = vpack.c.b16 %v3295, %v3291
    %v3840 = vpack.c.b16 %v3296, %v3292
    %v3841 = vpack.c.b16 %v3297, %v3293
    %v3842 = vpack.c.b16 %v3298, %v3294
    %v3843 = vpack.c.b16 %v3303, %v3299
    %v3844 = vpack.c.b16 %v3304, %v3300
    %v3845 = vpack.c.b16 %v3305, %v3301
    %v3846 = vpack.c.b16 %v3306, %v3302
    %v3847 = vpack.c.b16 %v3311, %v3307
    %v3848 = vpack.c.b16 %v3312, %v3308
    %v3849 = vpack.c.b16 %v3313, %v3309
    %v3850 = vpack.c.b16 %v3314, %v3310
    %v3851 = vpack.c.b16 %v3319, %v3315
    %v3852 = vpack.c.b16 %v3320, %v3316
    %v3853 = vpack.c.b16 %v3321, %v3317
    %v3854 = vpack.c.b16 %v3322, %v3318
    %v3855 = vpack.c.b16 %v3327, %v3323
    %v3856 = vpack.c.b16 %v3328, %v3324
    %v3857 = vpack.c.b16 %v3329, %v3325
    %v3858 = vpack.c.b16 %v3330, %v3326
    %v3859 = vpack.c.b16 %v3335, %v3331
    %v3860 = vpack.c.b16 %v3336, %v3332
    %v3861 = vpack.c.b16 %v3337, %v3333
    %v3862 = vpack.c.b16 %v3338, %v3334
    %v3863 = vpack.c.b16 %v3343, %v3339
    %v3864 = vpack.c.b16 %v3344, %v3340
    %v3865 = vpack.c.b16 %v3345, %v3341
    %v3866 = vpack.c.b16 %v3346, %v3342
    %v3867 = vpack.c.b16 %v3351, %v3347
    %v3868 = vpack.c.b16 %v3352, %v3348
    %v3869 = vpack.c.b16 %v3353, %v3349
    %v3870 = vpack.c.b16 %v3354, %v3350
    %v3871 = vpack.c.b16 %v3359, %v3355
    %v3872 = vpack.c.b16 %v3360, %v3356
    %v3873 = vpack.c.b16 %v3361, %v3357
    %v3874 = vpack.c.b16 %v3362, %v3358
    %4387 = vmatprep.subr.bf16.mxu0 %v3392
    %4388 = vmatpush1.bf16.msra.mxu0 %v3391
    %4389 = vmatprep.subr.bf16.mxu0 %v3388
    %4390 = vmatpush1.bf16.msra.mxu0 %v3387
    %4391 = vmatprep.subr.bf16.mxu0 %v3384
    %4392 = vmatpush1.bf16.msra.mxu0 %v3383
    %4393 = vmatprep.subr.bf16.mxu0 %v3380
    %4394 = vmatpush1.bf16.msra.mxu0 %v3379
    %4395 = vmatprep.subr.bf16.mxu0 %v3376
    %4396 = vmatpush1.bf16.msra.mxu0 %v3375
    %4397 = vmatprep.subr.bf16.mxu0 %v3372
    %4398 = vmatpush1.bf16.msra.mxu0 %v3371
    %4399 = vmatprep.subr.bf16.mxu0 %v3368
    %4400 = vmatpush1.bf16.msra.mxu0 %v3367
    %4401 = vmatprep.subr.bf16.mxu0 %v3364
    %4402 = vmatpush1.bf16.msra.mxu0 %v3363
    %4403 = vmatprep.subr.bf16.mxu0 %v3424
    %4404 = vmatpush2.bf16.msra.mxu0 %v3423
    %4405 = vmatprep.subr.bf16.mxu0 %v3420
    %4406 = vmatpush2.bf16.msra.mxu0 %v3419
    %4407 = vmatprep.subr.bf16.mxu0 %v3416
    %4408 = vmatpush2.bf16.msra.mxu0 %v3415
    %4409 = vmatprep.subr.bf16.mxu0 %v3412
    %4410 = vmatpush2.bf16.msra.mxu0 %v3411
    %4411 = vmatprep.subr.bf16.mxu0 %v3408
    %4412 = vmatpush2.bf16.msra.mxu0 %v3407
    %4413 = vmatprep.subr.bf16.mxu0 %v3404
    %4414 = vmatpush2.bf16.msra.mxu0 %v3403
    %4415 = vmatprep.subr.bf16.mxu0 %v3400
    %4416 = vmatpush2.bf16.msra.mxu0 %v3399
    %4417 = vmatprep.subr.bf16.mxu0 %v3396
    %4418 = vmatpush2.bf16.msra.mxu0 %v3395
    %4419 = vmatprep.mubr.bf16.mxu0 %v1278
    %4420 = vmatmul.mubr.bf16.gmra.mxu0 %v1277
    %v4421 = vpop.f32.mrf.mxu0
    %v4422 = vadd.f32 %v1810, %v4421
    %v4423 = vpop.f32.mrf.mxu0
    %v4424 = vadd.f32 %v1814, %v4423
    %v4425 = vpop.f32.mrf.mxu0
    %v4426 = vpop.f32.mrf.mxu0
    %4427 = vdwg.mxu0
    %4428 = vmatprep.subr.bf16.mxu0 %v3456
    %4429 = vmatpush1.bf16.msra.mxu0 %v3455
    %4430 = vmatprep.subr.bf16.mxu0 %v3452
    %4431 = vmatpush1.bf16.msra.mxu0 %v3451
    %4432 = vmatprep.subr.bf16.mxu0 %v3448
    %4433 = vmatpush1.bf16.msra.mxu0 %v3447
    %4434 = vmatprep.subr.bf16.mxu0 %v3444
    %4435 = vmatpush1.bf16.msra.mxu0 %v3443
    %4436 = vmatprep.subr.bf16.mxu0 %v3440
    %4437 = vmatpush1.bf16.msra.mxu0 %v3439
    %4438 = vmatprep.subr.bf16.mxu0 %v3436
    %4439 = vmatpush1.bf16.msra.mxu0 %v3435
    %4440 = vmatprep.subr.bf16.mxu0 %v3432
    %4441 = vmatpush1.bf16.msra.mxu0 %v3431
    %4442 = vmatprep.subr.bf16.mxu0 %v3428
    %4443 = vmatpush1.bf16.msra.mxu0 %v3427
    %4444 = vmatprep.subr.bf16.mxu0 %v3488
    %4445 = vmatpush2.bf16.msra.mxu0 %v3487
    %4446 = vmatprep.subr.bf16.mxu0 %v3484
    %4447 = vmatpush2.bf16.msra.mxu0 %v3483
    %4448 = vmatprep.subr.bf16.mxu0 %v3480
    %4449 = vmatpush2.bf16.msra.mxu0 %v3479
    %4450 = vmatprep.subr.bf16.mxu0 %v3476
    %4451 = vmatpush2.bf16.msra.mxu0 %v3475
    %4452 = vmatprep.subr.bf16.mxu0 %v3472
    %4453 = vmatpush2.bf16.msra.mxu0 %v3471
    %4454 = vmatprep.subr.bf16.mxu0 %v3468
    %4455 = vmatpush2.bf16.msra.mxu0 %v3467
    %4456 = vmatprep.subr.bf16.mxu0 %v3464
    %4457 = vmatpush2.bf16.msra.mxu0 %v3463
    %4458 = vmatprep.subr.bf16.mxu0 %v3460
    %4459 = vmatpush2.bf16.msra.mxu0 %v3459
    %4460 = vmatprep.mubr.bf16.mxu0 %v1280
    %4461 = vmatmul.mubr.bf16.gmra.mxu0 %v1279
    %v4462 = vpop.f32.mrf.mxu0
    %v4463 = vadd.f32 %v4422, %v4462
    %v4464 = vpop.f32.mrf.mxu0
    %v4465 = vadd.f32 %v4424, %v4464
    %v4466 = vpop.f32.mrf.mxu0
    %v4467 = vpop.f32.mrf.mxu0
    %4468 = vdwg.mxu0
    %4469 = vmatprep.subr.bf16.mxu0 %v3520
    %4470 = vmatpush1.bf16.msra.mxu0 %v3519
    %4471 = vmatprep.subr.bf16.mxu0 %v3516
    %4472 = vmatpush1.bf16.msra.mxu0 %v3515
    %4473 = vmatprep.subr.bf16.mxu0 %v3512
    %4474 = vmatpush1.bf16.msra.mxu0 %v3511
    %4475 = vmatprep.subr.bf16.mxu0 %v3508
    %4476 = vmatpush1.bf16.msra.mxu0 %v3507
    %4477 = vmatprep.subr.bf16.mxu0 %v3504
    %4478 = vmatpush1.bf16.msra.mxu0 %v3503
    %4479 = vmatprep.subr.bf16.mxu0 %v3500
    %4480 = vmatpush1.bf16.msra.mxu0 %v3499
    %4481 = vmatprep.subr.bf16.mxu0 %v3496
    %4482 = vmatpush1.bf16.msra.mxu0 %v3495
    %4483 = vmatprep.subr.bf16.mxu0 %v3492
    %4484 = vmatpush1.bf16.msra.mxu0 %v3491
    %4485 = vmatprep.subr.bf16.mxu0 %v3552
    %4486 = vmatpush2.bf16.msra.mxu0 %v3551
    %4487 = vmatprep.subr.bf16.mxu0 %v3548
    %4488 = vmatpush2.bf16.msra.mxu0 %v3547
    %4489 = vmatprep.subr.bf16.mxu0 %v3544
    %4490 = vmatpush2.bf16.msra.mxu0 %v3543
    %4491 = vmatprep.subr.bf16.mxu0 %v3540
    %4492 = vmatpush2.bf16.msra.mxu0 %v3539
    %4493 = vmatprep.subr.bf16.mxu0 %v3536
    %4494 = vmatpush2.bf16.msra.mxu0 %v3535
    %4495 = vmatprep.subr.bf16.mxu0 %v3532
    %4496 = vmatpush2.bf16.msra.mxu0 %v3531
    %4497 = vmatprep.subr.bf16.mxu0 %v3528
    %4498 = vmatpush2.bf16.msra.mxu0 %v3527
    %4499 = vmatprep.subr.bf16.mxu0 %v3524
    %4500 = vmatpush2.bf16.msra.mxu0 %v3523
    %4501 = vmatprep.mubr.bf16.mxu0 %v1282
    %4502 = vmatmul.mubr.bf16.gmra.mxu0 %v1281
    %v4503 = vpop.f32.mrf.mxu0
    %v4504 = vadd.f32 %v4463, %v4503
    %v4505 = vpop.f32.mrf.mxu0
    %v4506 = vadd.f32 %v4465, %v4505
    %v4507 = vpop.f32.mrf.mxu0
    %v4508 = vpop.f32.mrf.mxu0
    %4509 = vdwg.mxu0
    %4510 = vmatprep.subr.bf16.mxu0 %v3584
    %4511 = vmatpush1.bf16.msra.mxu0 %v3583
    %4512 = vmatprep.subr.bf16.mxu0 %v3580
    %4513 = vmatpush1.bf16.msra.mxu0 %v3579
    %4514 = vmatprep.subr.bf16.mxu0 %v3576
    %4515 = vmatpush1.bf16.msra.mxu0 %v3575
    %4516 = vmatprep.subr.bf16.mxu0 %v3572
    %4517 = vmatpush1.bf16.msra.mxu0 %v3571
    %4518 = vmatprep.subr.bf16.mxu0 %v3568
    %4519 = vmatpush1.bf16.msra.mxu0 %v3567
    %4520 = vmatprep.subr.bf16.mxu0 %v3564
    %4521 = vmatpush1.bf16.msra.mxu0 %v3563
    %4522 = vmatprep.subr.bf16.mxu0 %v3560
    %4523 = vmatpush1.bf16.msra.mxu0 %v3559
    %4524 = vmatprep.subr.bf16.mxu0 %v3556
    %4525 = vmatpush1.bf16.msra.mxu0 %v3555
    %4526 = vmatprep.subr.bf16.mxu0 %v3616
    %4527 = vmatpush2.bf16.msra.mxu0 %v3615
    %4528 = vmatprep.subr.bf16.mxu0 %v3612
    %4529 = vmatpush2.bf16.msra.mxu0 %v3611
    %4530 = vmatprep.subr.bf16.mxu0 %v3608
    %4531 = vmatpush2.bf16.msra.mxu0 %v3607
    %4532 = vmatprep.subr.bf16.mxu0 %v3604
    %4533 = vmatpush2.bf16.msra.mxu0 %v3603
    %4534 = vmatprep.subr.bf16.mxu0 %v3600
    %4535 = vmatpush2.bf16.msra.mxu0 %v3599
    %4536 = vmatprep.subr.bf16.mxu0 %v3596
    %4537 = vmatpush2.bf16.msra.mxu0 %v3595
    %4538 = vmatprep.subr.bf16.mxu0 %v3592
    %4539 = vmatpush2.bf16.msra.mxu0 %v3591
    %4540 = vmatprep.subr.bf16.mxu0 %v3588
    %4541 = vmatpush2.bf16.msra.mxu0 %v3587
    %4542 = vmatprep.mubr.bf16.mxu0 %v1284
    %4543 = vmatmul.mubr.bf16.gmra.mxu0 %v1283
    %v4544 = vpop.f32.mrf.mxu0
    %v4545 = vadd.f32 %v4504, %v4544
    %v4546 = vpop.f32.mrf.mxu0
    %v4547 = vadd.f32 %v4506, %v4546
    %v4548 = vpop.f32.mrf.mxu0
    %v4549 = vpop.f32.mrf.mxu0
    %4550 = vdwg.mxu0
    %4551 = vmatprep.subr.bf16.mxu0 %v3648
    %4552 = vmatpush1.bf16.msra.mxu0 %v3647
    %4553 = vmatprep.subr.bf16.mxu0 %v3644
    %4554 = vmatpush1.bf16.msra.mxu0 %v3643
    %4555 = vmatprep.subr.bf16.mxu0 %v3640
    %4556 = vmatpush1.bf16.msra.mxu0 %v3639
    %4557 = vmatprep.subr.bf16.mxu0 %v3636
    %4558 = vmatpush1.bf16.msra.mxu0 %v3635
    %4559 = vmatprep.subr.bf16.mxu0 %v3632
    %4560 = vmatpush1.bf16.msra.mxu0 %v3631
    %4561 = vmatprep.subr.bf16.mxu0 %v3628
    %4562 = vmatpush1.bf16.msra.mxu0 %v3627
    %4563 = vmatprep.subr.bf16.mxu0 %v3624
    %4564 = vmatpush1.bf16.msra.mxu0 %v3623
    %4565 = vmatprep.subr.bf16.mxu0 %v3620
    %4566 = vmatpush1.bf16.msra.mxu0 %v3619
    %4567 = vmatprep.subr.bf16.mxu0 %v3680
    %4568 = vmatpush2.bf16.msra.mxu0 %v3679
    %4569 = vmatprep.subr.bf16.mxu0 %v3676
    %4570 = vmatpush2.bf16.msra.mxu0 %v3675
    %4571 = vmatprep.subr.bf16.mxu0 %v3672
    %4572 = vmatpush2.bf16.msra.mxu0 %v3671
    %4573 = vmatprep.subr.bf16.mxu0 %v3668
    %4574 = vmatpush2.bf16.msra.mxu0 %v3667
    %4575 = vmatprep.subr.bf16.mxu0 %v3664
    %4576 = vmatpush2.bf16.msra.mxu0 %v3663
    %4577 = vmatprep.subr.bf16.mxu0 %v3660
    %4578 = vmatpush2.bf16.msra.mxu0 %v3659
    %4579 = vmatprep.subr.bf16.mxu0 %v3656
    %4580 = vmatpush2.bf16.msra.mxu0 %v3655
    %4581 = vmatprep.subr.bf16.mxu0 %v3652
    %4582 = vmatpush2.bf16.msra.mxu0 %v3651
    %4583 = vmatprep.mubr.bf16.mxu0 %v1286
    %4584 = vmatmul.mubr.bf16.gmra.mxu0 %v1285
    %v4585 = vpop.f32.mrf.mxu0
    %v4586 = vadd.f32 %v4545, %v4585
    %v4587 = vpop.f32.mrf.mxu0
    %v4588 = vadd.f32 %v4547, %v4587
    %v4589 = vpop.f32.mrf.mxu0
    %v4590 = vpop.f32.mrf.mxu0
    %4591 = vdwg.mxu0
    %4592 = vmatprep.subr.bf16.mxu0 %v3712
    %4593 = vmatpush1.bf16.msra.mxu0 %v3711
    %4594 = vmatprep.subr.bf16.mxu0 %v3708
    %4595 = vmatpush1.bf16.msra.mxu0 %v3707
    %4596 = vmatprep.subr.bf16.mxu0 %v3704
    %4597 = vmatpush1.bf16.msra.mxu0 %v3703
    %4598 = vmatprep.subr.bf16.mxu0 %v3700
    %4599 = vmatpush1.bf16.msra.mxu0 %v3699
    %4600 = vmatprep.subr.bf16.mxu0 %v3696
    %4601 = vmatpush1.bf16.msra.mxu0 %v3695
    %4602 = vmatprep.subr.bf16.mxu0 %v3692
    %4603 = vmatpush1.bf16.msra.mxu0 %v3691
    %4604 = vmatprep.subr.bf16.mxu0 %v3688
    %4605 = vmatpush1.bf16.msra.mxu0 %v3687
    %4606 = vmatprep.subr.bf16.mxu0 %v3684
    %4607 = vmatpush1.bf16.msra.mxu0 %v3683
    %4608 = vmatprep.subr.bf16.mxu0 %v3744
    %4609 = vmatpush2.bf16.msra.mxu0 %v3743
    %4610 = vmatprep.subr.bf16.mxu0 %v3740
    %4611 = vmatpush2.bf16.msra.mxu0 %v3739
    %4612 = vmatprep.subr.bf16.mxu0 %v3736
    %4613 = vmatpush2.bf16.msra.mxu0 %v3735
    %4614 = vmatprep.subr.bf16.mxu0 %v3732
    %4615 = vmatpush2.bf16.msra.mxu0 %v3731
    %4616 = vmatprep.subr.bf16.mxu0 %v3728
    %4617 = vmatpush2.bf16.msra.mxu0 %v3727
    %4618 = vmatprep.subr.bf16.mxu0 %v3724
    %4619 = vmatpush2.bf16.msra.mxu0 %v3723
    %4620 = vmatprep.subr.bf16.mxu0 %v3720
    %4621 = vmatpush2.bf16.msra.mxu0 %v3719
    %4622 = vmatprep.subr.bf16.mxu0 %v3716
    %4623 = vmatpush2.bf16.msra.mxu0 %v3715
    %4624 = vmatprep.mubr.bf16.mxu0 %v1288
    %4625 = vmatmul.mubr.bf16.gmra.mxu0 %v1287
    %v4626 = vpop.f32.mrf.mxu0
    %v4627 = vadd.f32 %v4586, %v4626
    %v4628 = vpop.f32.mrf.mxu0
    %v4629 = vadd.f32 %v4588, %v4628
    %v4630 = vpop.f32.mrf.mxu0
    %v4631 = vpop.f32.mrf.mxu0
    %4632 = vdwg.mxu0
    %4633 = vmatprep.subr.bf16.mxu0 %v3776
    %4634 = vmatpush1.bf16.msra.mxu0 %v3775
    %4635 = vmatprep.subr.bf16.mxu0 %v3772
    %4636 = vmatpush1.bf16.msra.mxu0 %v3771
    %4637 = vmatprep.subr.bf16.mxu0 %v3768
    %4638 = vmatpush1.bf16.msra.mxu0 %v3767
    %4639 = vmatprep.subr.bf16.mxu0 %v3764
    %4640 = vmatpush1.bf16.msra.mxu0 %v3763
    %4641 = vmatprep.subr.bf16.mxu0 %v3760
    %4642 = vmatpush1.bf16.msra.mxu0 %v3759
    %4643 = vmatprep.subr.bf16.mxu0 %v3756
    %4644 = vmatpush1.bf16.msra.mxu0 %v3755
    %4645 = vmatprep.subr.bf16.mxu0 %v3752
    %4646 = vmatpush1.bf16.msra.mxu0 %v3751
    %4647 = vmatprep.subr.bf16.mxu0 %v3748
    %4648 = vmatpush1.bf16.msra.mxu0 %v3747
    %4649 = vmatprep.subr.bf16.mxu0 %v3808
    %4650 = vmatpush2.bf16.msra.mxu0 %v3807
    %4651 = vmatprep.subr.bf16.mxu0 %v3804
    %4652 = vmatpush2.bf16.msra.mxu0 %v3803
    %4653 = vmatprep.subr.bf16.mxu0 %v3800
    %4654 = vmatpush2.bf16.msra.mxu0 %v3799
    %4655 = vmatprep.subr.bf16.mxu0 %v3796
    %4656 = vmatpush2.bf16.msra.mxu0 %v3795
    %4657 = vmatprep.subr.bf16.mxu0 %v3792
    %4658 = vmatpush2.bf16.msra.mxu0 %v3791
    %4659 = vmatprep.subr.bf16.mxu0 %v3788
    %4660 = vmatpush2.bf16.msra.mxu0 %v3787
    %4661 = vmatprep.subr.bf16.mxu0 %v3784
    %4662 = vmatpush2.bf16.msra.mxu0 %v3783
    %4663 = vmatprep.subr.bf16.mxu0 %v3780
    %4664 = vmatpush2.bf16.msra.mxu0 %v3779
    %4665 = vmatprep.mubr.bf16.mxu0 %v1290
    %4666 = vmatmul.mubr.bf16.gmra.mxu0 %v1289
    %v4667 = vpop.f32.mrf.mxu0
    %v4668 = vadd.f32 %v4627, %v4667
    %v4669 = vpop.f32.mrf.mxu0
    %v4670 = vadd.f32 %v4629, %v4669
    %v4671 = vpop.f32.mrf.mxu0
    %v4672 = vpop.f32.mrf.mxu0
    %4673 = vdwg.mxu0
    %4674 = vmatprep.subr.bf16.mxu0 %v3840
    %4675 = vmatpush1.bf16.msra.mxu0 %v3839
    %4676 = vmatprep.subr.bf16.mxu0 %v3836
    %4677 = vmatpush1.bf16.msra.mxu0 %v3835
    %4678 = vmatprep.subr.bf16.mxu0 %v3832
    %4679 = vmatpush1.bf16.msra.mxu0 %v3831
    %4680 = vmatprep.subr.bf16.mxu0 %v3828
    %4681 = vmatpush1.bf16.msra.mxu0 %v3827
    %4682 = vmatprep.subr.bf16.mxu0 %v3824
    %4683 = vmatpush1.bf16.msra.mxu0 %v3823
    %4684 = vmatprep.subr.bf16.mxu0 %v3820
    %4685 = vmatpush1.bf16.msra.mxu0 %v3819
    %4686 = vmatprep.subr.bf16.mxu0 %v3816
    %4687 = vmatpush1.bf16.msra.mxu0 %v3815
    %4688 = vmatprep.subr.bf16.mxu0 %v3812
    %4689 = vmatpush1.bf16.msra.mxu0 %v3811
    %4690 = vmatprep.subr.bf16.mxu0 %v3872
    %4691 = vmatpush2.bf16.msra.mxu0 %v3871
    %4692 = vmatprep.subr.bf16.mxu0 %v3868
    %4693 = vmatpush2.bf16.msra.mxu0 %v3867
    %4694 = vmatprep.subr.bf16.mxu0 %v3864
    %4695 = vmatpush2.bf16.msra.mxu0 %v3863
    %4696 = vmatprep.subr.bf16.mxu0 %v3860
    %4697 = vmatpush2.bf16.msra.mxu0 %v3859
    %4698 = vmatprep.subr.bf16.mxu0 %v3856
    %4699 = vmatpush2.bf16.msra.mxu0 %v3855
    %4700 = vmatprep.subr.bf16.mxu0 %v3852
    %4701 = vmatpush2.bf16.msra.mxu0 %v3851
    %4702 = vmatprep.subr.bf16.mxu0 %v3848
    %4703 = vmatpush2.bf16.msra.mxu0 %v3847
    %4704 = vmatprep.subr.bf16.mxu0 %v3844
    %4705 = vmatpush2.bf16.msra.mxu0 %v3843
    %4706 = vmatprep.mubr.bf16.mxu0 %v1292
    %4707 = vmatmul.mubr.bf16.gmra.mxu0 %v1291
    %v4708 = vpop.f32.mrf.mxu0
    %v4709 = vadd.f32 %v4668, %v4708
    %v4710 = vpop.f32.mrf.mxu0
    %v4711 = vadd.f32 %v4670, %v4710
    %v4712 = vpop.f32.mrf.mxu0
    %v4713 = vpop.f32.mrf.mxu0
    %4714 = vdwg.mxu0
    %4715 = vmatprep.subr.bf16.mxu0 %v3394
    %4716 = vmatpush1.bf16.msra.mxu0 %v3393
    %4717 = vmatprep.subr.bf16.mxu0 %v3390
    %4718 = vmatpush1.bf16.msra.mxu0 %v3389
    %4719 = vmatprep.subr.bf16.mxu0 %v3386
    %4720 = vmatpush1.bf16.msra.mxu0 %v3385
    %4721 = vmatprep.subr.bf16.mxu0 %v3382
    %4722 = vmatpush1.bf16.msra.mxu0 %v3381
    %4723 = vmatprep.subr.bf16.mxu0 %v3378
    %4724 = vmatpush1.bf16.msra.mxu0 %v3377
    %4725 = vmatprep.subr.bf16.mxu0 %v3374
    %4726 = vmatpush1.bf16.msra.mxu0 %v3373
    %4727 = vmatprep.subr.bf16.mxu0 %v3370
    %4728 = vmatpush1.bf16.msra.mxu0 %v3369
    %4729 = vmatprep.subr.bf16.mxu0 %v3366
    %4730 = vmatpush1.bf16.msra.mxu0 %v3365
    %4731 = vmatprep.subr.bf16.mxu0 %v3426
    %4732 = vmatpush2.bf16.msra.mxu0 %v3425
    %4733 = vmatprep.subr.bf16.mxu0 %v3422
    %4734 = vmatpush2.bf16.msra.mxu0 %v3421
    %4735 = vmatprep.subr.bf16.mxu0 %v3418
    %4736 = vmatpush2.bf16.msra.mxu0 %v3417
    %4737 = vmatprep.subr.bf16.mxu0 %v3414
    %4738 = vmatpush2.bf16.msra.mxu0 %v3413
    %4739 = vmatprep.subr.bf16.mxu0 %v3410
    %4740 = vmatpush2.bf16.msra.mxu0 %v3409
    %4741 = vmatprep.subr.bf16.mxu0 %v3406
    %4742 = vmatpush2.bf16.msra.mxu0 %v3405
    %4743 = vmatprep.subr.bf16.mxu0 %v3402
    %4744 = vmatpush2.bf16.msra.mxu0 %v3401
    %4745 = vmatprep.subr.bf16.mxu0 %v3398
    %4746 = vmatpush2.bf16.msra.mxu0 %v3397
    %4747 = vmatprep.mubr.bf16.mxu0 %v1278
    %4748 = vmatmul.mubr.bf16.gmra.mxu0 %v1277
    %v4749 = vpop.f32.mrf.mxu0
    %v4750 = vadd.f32 %v1818, %v4749
    %v4751 = vpop.f32.mrf.mxu0
    %v4752 = vadd.f32 %v1822, %v4751
    %v4753 = vpop.f32.mrf.mxu0
    %v4754 = vpop.f32.mrf.mxu0
    %4755 = vdwg.mxu0
    %4756 = vmatprep.subr.bf16.mxu0 %v3458
    %4757 = vmatpush1.bf16.msra.mxu0 %v3457
    %4758 = vmatprep.subr.bf16.mxu0 %v3454
    %4759 = vmatpush1.bf16.msra.mxu0 %v3453
    %4760 = vmatprep.subr.bf16.mxu0 %v3450
    %4761 = vmatpush1.bf16.msra.mxu0 %v3449
    %4762 = vmatprep.subr.bf16.mxu0 %v3446
    %4763 = vmatpush1.bf16.msra.mxu0 %v3445
    %4764 = vmatprep.subr.bf16.mxu0 %v3442
    %4765 = vmatpush1.bf16.msra.mxu0 %v3441
    %4766 = vmatprep.subr.bf16.mxu0 %v3438
    %4767 = vmatpush1.bf16.msra.mxu0 %v3437
    %4768 = vmatprep.subr.bf16.mxu0 %v3434
    %4769 = vmatpush1.bf16.msra.mxu0 %v3433
    %4770 = vmatprep.subr.bf16.mxu0 %v3430
    %4771 = vmatpush1.bf16.msra.mxu0 %v3429
    %4772 = vmatprep.subr.bf16.mxu0 %v3490
    %4773 = vmatpush2.bf16.msra.mxu0 %v3489
    %4774 = vmatprep.subr.bf16.mxu0 %v3486
    %4775 = vmatpush2.bf16.msra.mxu0 %v3485
    %4776 = vmatprep.subr.bf16.mxu0 %v3482
    %4777 = vmatpush2.bf16.msra.mxu0 %v3481
    %4778 = vmatprep.subr.bf16.mxu0 %v3478
    %4779 = vmatpush2.bf16.msra.mxu0 %v3477
    %4780 = vmatprep.subr.bf16.mxu0 %v3474
    %4781 = vmatpush2.bf16.msra.mxu0 %v3473
    %4782 = vmatprep.subr.bf16.mxu0 %v3470
    %4783 = vmatpush2.bf16.msra.mxu0 %v3469
    %4784 = vmatprep.subr.bf16.mxu0 %v3466
    %4785 = vmatpush2.bf16.msra.mxu0 %v3465
    %4786 = vmatprep.subr.bf16.mxu0 %v3462
    %4787 = vmatpush2.bf16.msra.mxu0 %v3461
    %4788 = vmatprep.mubr.bf16.mxu0 %v1280
    %4789 = vmatmul.mubr.bf16.gmra.mxu0 %v1279
    %v4790 = vpop.f32.mrf.mxu0
    %v4791 = vadd.f32 %v4750, %v4790
    %v4792 = vpop.f32.mrf.mxu0
    %v4793 = vadd.f32 %v4752, %v4792
    %v4794 = vpop.f32.mrf.mxu0
    %v4795 = vpop.f32.mrf.mxu0
    %4796 = vdwg.mxu0
    %4797 = vmatprep.subr.bf16.mxu0 %v3522
    %4798 = vmatpush1.bf16.msra.mxu0 %v3521
    %4799 = vmatprep.subr.bf16.mxu0 %v3518
    %4800 = vmatpush1.bf16.msra.mxu0 %v3517
    %4801 = vmatprep.subr.bf16.mxu0 %v3514
    %4802 = vmatpush1.bf16.msra.mxu0 %v3513
    %4803 = vmatprep.subr.bf16.mxu0 %v3510
    %4804 = vmatpush1.bf16.msra.mxu0 %v3509
    %4805 = vmatprep.subr.bf16.mxu0 %v3506
    %4806 = vmatpush1.bf16.msra.mxu0 %v3505
    %4807 = vmatprep.subr.bf16.mxu0 %v3502
    %4808 = vmatpush1.bf16.msra.mxu0 %v3501
    %4809 = vmatprep.subr.bf16.mxu0 %v3498
    %4810 = vmatpush1.bf16.msra.mxu0 %v3497
    %4811 = vmatprep.subr.bf16.mxu0 %v3494
    %4812 = vmatpush1.bf16.msra.mxu0 %v3493
    %4813 = vmatprep.subr.bf16.mxu0 %v3554
    %4814 = vmatpush2.bf16.msra.mxu0 %v3553
    %4815 = vmatprep.subr.bf16.mxu0 %v3550
    %4816 = vmatpush2.bf16.msra.mxu0 %v3549
    %4817 = vmatprep.subr.bf16.mxu0 %v3546
    %4818 = vmatpush2.bf16.msra.mxu0 %v3545
    %4819 = vmatprep.subr.bf16.mxu0 %v3542
    %4820 = vmatpush2.bf16.msra.mxu0 %v3541
    %4821 = vmatprep.subr.bf16.mxu0 %v3538
    %4822 = vmatpush2.bf16.msra.mxu0 %v3537
    %4823 = vmatprep.subr.bf16.mxu0 %v3534
    %4824 = vmatpush2.bf16.msra.mxu0 %v3533
    %4825 = vmatprep.subr.bf16.mxu0 %v3530
    %4826 = vmatpush2.bf16.msra.mxu0 %v3529
    %4827 = vmatprep.subr.bf16.mxu0 %v3526
    %4828 = vmatpush2.bf16.msra.mxu0 %v3525
    %4829 = vmatprep.mubr.bf16.mxu0 %v1282
    %4830 = vmatmul.mubr.bf16.gmra.mxu0 %v1281
    %v4831 = vpop.f32.mrf.mxu0
    %v4832 = vadd.f32 %v4791, %v4831
    %v4833 = vpop.f32.mrf.mxu0
    %v4834 = vadd.f32 %v4793, %v4833
    %v4835 = vpop.f32.mrf.mxu0
    %v4836 = vpop.f32.mrf.mxu0
    %4837 = vdwg.mxu0
    %4838 = vmatprep.subr.bf16.mxu0 %v3586
    %4839 = vmatpush1.bf16.msra.mxu0 %v3585
    %4840 = vmatprep.subr.bf16.mxu0 %v3582
    %4841 = vmatpush1.bf16.msra.mxu0 %v3581
    %4842 = vmatprep.subr.bf16.mxu0 %v3578
    %4843 = vmatpush1.bf16.msra.mxu0 %v3577
    %4844 = vmatprep.subr.bf16.mxu0 %v3574
    %4845 = vmatpush1.bf16.msra.mxu0 %v3573
    %4846 = vmatprep.subr.bf16.mxu0 %v3570
    %4847 = vmatpush1.bf16.msra.mxu0 %v3569
    %4848 = vmatprep.subr.bf16.mxu0 %v3566
    %4849 = vmatpush1.bf16.msra.mxu0 %v3565
    %4850 = vmatprep.subr.bf16.mxu0 %v3562
    %4851 = vmatpush1.bf16.msra.mxu0 %v3561
    %4852 = vmatprep.subr.bf16.mxu0 %v3558
    %4853 = vmatpush1.bf16.msra.mxu0 %v3557
    %4854 = vmatprep.subr.bf16.mxu0 %v3618
    %4855 = vmatpush2.bf16.msra.mxu0 %v3617
    %4856 = vmatprep.subr.bf16.mxu0 %v3614
    %4857 = vmatpush2.bf16.msra.mxu0 %v3613
    %4858 = vmatprep.subr.bf16.mxu0 %v3610
    %4859 = vmatpush2.bf16.msra.mxu0 %v3609
    %4860 = vmatprep.subr.bf16.mxu0 %v3606
    %4861 = vmatpush2.bf16.msra.mxu0 %v3605
    %4862 = vmatprep.subr.bf16.mxu0 %v3602
    %4863 = vmatpush2.bf16.msra.mxu0 %v3601
    %4864 = vmatprep.subr.bf16.mxu0 %v3598
    %4865 = vmatpush2.bf16.msra.mxu0 %v3597
    %4866 = vmatprep.subr.bf16.mxu0 %v3594
    %4867 = vmatpush2.bf16.msra.mxu0 %v3593
    %4868 = vmatprep.subr.bf16.mxu0 %v3590
    %4869 = vmatpush2.bf16.msra.mxu0 %v3589
    %4870 = vmatprep.mubr.bf16.mxu0 %v1284
    %4871 = vmatmul.mubr.bf16.gmra.mxu0 %v1283
    %v4872 = vpop.f32.mrf.mxu0
    %v4873 = vadd.f32 %v4832, %v4872
    %v4874 = vpop.f32.mrf.mxu0
    %v4875 = vadd.f32 %v4834, %v4874
    %v4876 = vpop.f32.mrf.mxu0
    %v4877 = vpop.f32.mrf.mxu0
    %4878 = vdwg.mxu0
    %4879 = vmatprep.subr.bf16.mxu0 %v3650
    %4880 = vmatpush1.bf16.msra.mxu0 %v3649
    %4881 = vmatprep.subr.bf16.mxu0 %v3646
    %4882 = vmatpush1.bf16.msra.mxu0 %v3645
    %4883 = vmatprep.subr.bf16.mxu0 %v3642
    %4884 = vmatpush1.bf16.msra.mxu0 %v3641
    %4885 = vmatprep.subr.bf16.mxu0 %v3638
    %4886 = vmatpush1.bf16.msra.mxu0 %v3637
    %4887 = vmatprep.subr.bf16.mxu0 %v3634
    %4888 = vmatpush1.bf16.msra.mxu0 %v3633
    %4889 = vmatprep.subr.bf16.mxu0 %v3630
    %4890 = vmatpush1.bf16.msra.mxu0 %v3629
    %4891 = vmatprep.subr.bf16.mxu0 %v3626
    %4892 = vmatpush1.bf16.msra.mxu0 %v3625
    %4893 = vmatprep.subr.bf16.mxu0 %v3622
    %4894 = vmatpush1.bf16.msra.mxu0 %v3621
    %4895 = vmatprep.subr.bf16.mxu0 %v3682
    %4896 = vmatpush2.bf16.msra.mxu0 %v3681
    %4897 = vmatprep.subr.bf16.mxu0 %v3678
    %4898 = vmatpush2.bf16.msra.mxu0 %v3677
    %4899 = vmatprep.subr.bf16.mxu0 %v3674
    %4900 = vmatpush2.bf16.msra.mxu0 %v3673
    %4901 = vmatprep.subr.bf16.mxu0 %v3670
    %4902 = vmatpush2.bf16.msra.mxu0 %v3669
    %4903 = vmatprep.subr.bf16.mxu0 %v3666
    %4904 = vmatpush2.bf16.msra.mxu0 %v3665
    %4905 = vmatprep.subr.bf16.mxu0 %v3662
    %4906 = vmatpush2.bf16.msra.mxu0 %v3661
    %4907 = vmatprep.subr.bf16.mxu0 %v3658
    %4908 = vmatpush2.bf16.msra.mxu0 %v3657
    %4909 = vmatprep.subr.bf16.mxu0 %v3654
    %4910 = vmatpush2.bf16.msra.mxu0 %v3653
    %4911 = vmatprep.mubr.bf16.mxu0 %v1286
    %4912 = vmatmul.mubr.bf16.gmra.mxu0 %v1285
    %v4913 = vpop.f32.mrf.mxu0
    %v4914 = vadd.f32 %v4873, %v4913
    %v4915 = vpop.f32.mrf.mxu0
    %v4916 = vadd.f32 %v4875, %v4915
    %v4917 = vpop.f32.mrf.mxu0
    %v4918 = vpop.f32.mrf.mxu0
    %4919 = vdwg.mxu0
    %4920 = vmatprep.subr.bf16.mxu0 %v3714
    %4921 = vmatpush1.bf16.msra.mxu0 %v3713
    %4922 = vmatprep.subr.bf16.mxu0 %v3710
    %4923 = vmatpush1.bf16.msra.mxu0 %v3709
    %4924 = vmatprep.subr.bf16.mxu0 %v3706
    %4925 = vmatpush1.bf16.msra.mxu0 %v3705
    %4926 = vmatprep.subr.bf16.mxu0 %v3702
    %4927 = vmatpush1.bf16.msra.mxu0 %v3701
    %4928 = vmatprep.subr.bf16.mxu0 %v3698
    %4929 = vmatpush1.bf16.msra.mxu0 %v3697
    %4930 = vmatprep.subr.bf16.mxu0 %v3694
    %4931 = vmatpush1.bf16.msra.mxu0 %v3693
    %4932 = vmatprep.subr.bf16.mxu0 %v3690
    %4933 = vmatpush1.bf16.msra.mxu0 %v3689
    %4934 = vmatprep.subr.bf16.mxu0 %v3686
    %4935 = vmatpush1.bf16.msra.mxu0 %v3685
    %4936 = vmatprep.subr.bf16.mxu0 %v3746
    %4937 = vmatpush2.bf16.msra.mxu0 %v3745
    %4938 = vmatprep.subr.bf16.mxu0 %v3742
    %4939 = vmatpush2.bf16.msra.mxu0 %v3741
    %4940 = vmatprep.subr.bf16.mxu0 %v3738
    %4941 = vmatpush2.bf16.msra.mxu0 %v3737
    %4942 = vmatprep.subr.bf16.mxu0 %v3734
    %4943 = vmatpush2.bf16.msra.mxu0 %v3733
    %4944 = vmatprep.subr.bf16.mxu0 %v3730
    %4945 = vmatpush2.bf16.msra.mxu0 %v3729
    %4946 = vmatprep.subr.bf16.mxu0 %v3726
    %4947 = vmatpush2.bf16.msra.mxu0 %v3725
    %4948 = vmatprep.subr.bf16.mxu0 %v3722
    %4949 = vmatpush2.bf16.msra.mxu0 %v3721
    %4950 = vmatprep.subr.bf16.mxu0 %v3718
    %4951 = vmatpush2.bf16.msra.mxu0 %v3717
    %4952 = vmatprep.mubr.bf16.mxu0 %v1288
    %4953 = vmatmul.mubr.bf16.gmra.mxu0 %v1287
    %v4954 = vpop.f32.mrf.mxu0
    %v4955 = vadd.f32 %v4914, %v4954
    %v4956 = vpop.f32.mrf.mxu0
    %v4957 = vadd.f32 %v4916, %v4956
    %v4958 = vpop.f32.mrf.mxu0
    %v4959 = vpop.f32.mrf.mxu0
    %4960 = vdwg.mxu0
    %4961 = vmatprep.subr.bf16.mxu0 %v3778
    %4962 = vmatpush1.bf16.msra.mxu0 %v3777
    %4963 = vmatprep.subr.bf16.mxu0 %v3774
    %4964 = vmatpush1.bf16.msra.mxu0 %v3773
    %4965 = vmatprep.subr.bf16.mxu0 %v3770
    %4966 = vmatpush1.bf16.msra.mxu0 %v3769
    %4967 = vmatprep.subr.bf16.mxu0 %v3766
    %4968 = vmatpush1.bf16.msra.mxu0 %v3765
    %4969 = vmatprep.subr.bf16.mxu0 %v3762
    %4970 = vmatpush1.bf16.msra.mxu0 %v3761
    %4971 = vmatprep.subr.bf16.mxu0 %v3758
    %4972 = vmatpush1.bf16.msra.mxu0 %v3757
    %4973 = vmatprep.subr.bf16.mxu0 %v3754
    %4974 = vmatpush1.bf16.msra.mxu0 %v3753
    %4975 = vmatprep.subr.bf16.mxu0 %v3750
    %4976 = vmatpush1.bf16.msra.mxu0 %v3749
    %4977 = vmatprep.subr.bf16.mxu0 %v3810
    %4978 = vmatpush2.bf16.msra.mxu0 %v3809
    %4979 = vmatprep.subr.bf16.mxu0 %v3806
    %4980 = vmatpush2.bf16.msra.mxu0 %v3805
    %4981 = vmatprep.subr.bf16.mxu0 %v3802
    %4982 = vmatpush2.bf16.msra.mxu0 %v3801
    %4983 = vmatprep.subr.bf16.mxu0 %v3798
    %4984 = vmatpush2.bf16.msra.mxu0 %v3797
    %4985 = vmatprep.subr.bf16.mxu0 %v3794
    %4986 = vmatpush2.bf16.msra.mxu0 %v3793
    %4987 = vmatprep.subr.bf16.mxu0 %v3790
    %4988 = vmatpush2.bf16.msra.mxu0 %v3789
    %4989 = vmatprep.subr.bf16.mxu0 %v3786
    %4990 = vmatpush2.bf16.msra.mxu0 %v3785
    %4991 = vmatprep.subr.bf16.mxu0 %v3782
    %4992 = vmatpush2.bf16.msra.mxu0 %v3781
    %4993 = vmatprep.mubr.bf16.mxu0 %v1290
    %4994 = vmatmul.mubr.bf16.gmra.mxu0 %v1289
    %v4995 = vpop.f32.mrf.mxu0
    %v4996 = vadd.f32 %v4955, %v4995
    %v4997 = vpop.f32.mrf.mxu0
    %v4998 = vadd.f32 %v4957, %v4997
    %v4999 = vpop.f32.mrf.mxu0
    %v5000 = vpop.f32.mrf.mxu0
    %5001 = vdwg.mxu0
    %5002 = vmatprep.subr.bf16.mxu0 %v3842
    %5003 = vmatpush1.bf16.msra.mxu0 %v3841
    %5004 = vmatprep.subr.bf16.mxu0 %v3838
    %5005 = vmatpush1.bf16.msra.mxu0 %v3837
    %5006 = vmatprep.subr.bf16.mxu0 %v3834
    %5007 = vmatpush1.bf16.msra.mxu0 %v3833
    %5008 = vmatprep.subr.bf16.mxu0 %v3830
    %5009 = vmatpush1.bf16.msra.mxu0 %v3829
    %5010 = vmatprep.subr.bf16.mxu0 %v3826
    %5011 = vmatpush1.bf16.msra.mxu0 %v3825
    %5012 = vmatprep.subr.bf16.mxu0 %v3822
    %5013 = vmatpush1.bf16.msra.mxu0 %v3821
    %5014 = vmatprep.subr.bf16.mxu0 %v3818
    %5015 = vmatpush1.bf16.msra.mxu0 %v3817
    %5016 = vmatprep.subr.bf16.mxu0 %v3814
    %5017 = vmatpush1.bf16.msra.mxu0 %v3813
    %5018 = vmatprep.subr.bf16.mxu0 %v3874
    %5019 = vmatpush2.bf16.msra.mxu0 %v3873
    %5020 = vmatprep.subr.bf16.mxu0 %v3870
    %5021 = vmatpush2.bf16.msra.mxu0 %v3869
    %5022 = vmatprep.subr.bf16.mxu0 %v3866
    %5023 = vmatpush2.bf16.msra.mxu0 %v3865
    %5024 = vmatprep.subr.bf16.mxu0 %v3862
    %5025 = vmatpush2.bf16.msra.mxu0 %v3861
    %5026 = vmatprep.subr.bf16.mxu0 %v3858
    %5027 = vmatpush2.bf16.msra.mxu0 %v3857
    %5028 = vmatprep.subr.bf16.mxu0 %v3854
    %5029 = vmatpush2.bf16.msra.mxu0 %v3853
    %5030 = vmatprep.subr.bf16.mxu0 %v3850
    %5031 = vmatpush2.bf16.msra.mxu0 %v3849
    %5032 = vmatprep.subr.bf16.mxu0 %v3846
    %5033 = vmatpush2.bf16.msra.mxu0 %v3845
    %5034 = vmatprep.mubr.bf16.mxu0 %v1292
    %5035 = vmatmul.mubr.bf16.gmra.mxu0 %v1291
    %v5036 = vpop.f32.mrf.mxu0
    %v5037 = vadd.f32 %v4996, %v5036
    %v5038 = vpop.f32.mrf.mxu0
    %v5039 = vadd.f32 %v4998, %v5038
    %v5040 = vpop.f32.mrf.mxu0
    %v5041 = vpop.f32.mrf.mxu0
    %5042 = vdwg.mxu0
    %5043 = vst [vmem:[%s4] sm:$0xff] %v4709
    %5044 = vst [vmem:[%s4 + $0x8] sm:$0xff] %v4711
    %5045 = vst [vmem:[%s4 + $0x10] sm:$0xff] %v5037
    %5046 = vst [vmem:[%s4 + $0x18] sm:$0xff] %v5039
    %v5047 = vrot.slane %v4709, 4
    %v5048 = vadd.f32 %v4709, %v5047
    %v5049 = vrot.slane %v5048, 2
    %v5050 = vadd.f32 %v5048, %v5049
    %v5051 = vrot.slane %v5050, 1
    %v5052 = vadd.f32 %v5050, %v5051
    %v5053 = vrot.slane %v4711, 4
    %v5054 = vadd.f32 %v4711, %v5053
    %v5055 = vrot.slane %v5054, 2
    %v5056 = vadd.f32 %v5054, %v5055
    %v5057 = vrot.slane %v5056, 1
    %v5058 = vadd.f32 %v5056, %v5057
    %v5059 = vrot.slane %v5037, 4
    %v5060 = vadd.f32 %v5037, %v5059
    %v5061 = vrot.slane %v5060, 2
    %v5062 = vadd.f32 %v5060, %v5061
    %v5063 = vrot.slane %v5062, 1
    %v5064 = vadd.f32 %v5062, %v5063
    %v5065 = vrot.slane %v5039, 4
    %v5066 = vadd.f32 %v5039, %v5065
    %v5067 = vrot.slane %v5066, 2
    %v5068 = vadd.f32 %v5066, %v5067
    %v5069 = vrot.slane %v5068, 1
    %v5070 = vadd.f32 %v5068, %v5069
    %v5075 = vcombine.low %v5052, %v5058
    %v5076 = vcombine.low %v5064, %v5070
    %v5078 = vunpack.c.l.s4 1966171168
    %v5079 = vunpack.c.0.s8 %v5078
    %v5080 = vlaneseq
    %v5081 = vshrl.u32 %v5080, 7
    %v5082 = vsub.s32 %v5079, %v5081
    %v5083 = vrot.slane %v5075, %v5082
    %v5085 = vunpack.c.l.s4 1966171168
    %v5086 = vunpack.c.0.s8 %v5085
    %v5087 = vlaneseq
    %v5088 = vshrl.u32 %v5087, 7
    %v5089 = vsub.s32 %v5086, %v5088
    %v5090 = vrot.slane %v5076, %v5089
    %v5091 = vcombine.low %v5083, %v5090
    %v5093 = vunpack.c.l.s4 1966171168
    %v5094 = vunpack.c.0.s8 %v5093
    %v5095 = vlaneseq
    %v5096 = vshrl.u32 %v5095, 7
    %v5097 = vsub.s32 %v5094, %v5096
    %v5098 = vrot.slane %v5091, %v5097
    %v5100 = vlaneseq
    %vm5101 = vcmp.ge.s32.totalorder %v5100, 0
    %vm5102 = vcmp.lt.s32.totalorder %v5100, 512
    %vm5103 = vmand %vm5101, %vm5102
    %5104 = vst.msk [vmem:[%s5] ss:$2 sm:$0xf] %vm5103, %v5098
    %v5105 = vmul.f32 %v4709, %v4709
    %v5106 = vmul.f32 %v4711, %v4711
    %v5107 = vmul.f32 %v5037, %v5037
    %v5108 = vmul.f32 %v5039, %v5039
    %v5109 = vrot.slane %v5105, 4
    %v5110 = vadd.f32 %v5105, %v5109
    %v5111 = vrot.slane %v5110, 2
    %v5112 = vadd.f32 %v5110, %v5111
    %v5113 = vrot.slane %v5112, 1
    %v5114 = vadd.f32 %v5112, %v5113
    %v5115 = vrot.slane %v5106, 4
    %v5116 = vadd.f32 %v5106, %v5115
    %v5117 = vrot.slane %v5116, 2
    %v5118 = vadd.f32 %v5116, %v5117
    %v5119 = vrot.slane %v5118, 1
    %v5120 = vadd.f32 %v5118, %v5119
    %v5121 = vrot.slane %v5107, 4
    %v5122 = vadd.f32 %v5107, %v5121
    %v5123 = vrot.slane %v5122, 2
    %v5124 = vadd.f32 %v5122, %v5123
    %v5125 = vrot.slane %v5124, 1
    %v5126 = vadd.f32 %v5124, %v5125
    %v5127 = vrot.slane %v5108, 4
    %v5128 = vadd.f32 %v5108, %v5127
    %v5129 = vrot.slane %v5128, 2
    %v5130 = vadd.f32 %v5128, %v5129
    %v5131 = vrot.slane %v5130, 1
    %v5132 = vadd.f32 %v5130, %v5131
    %v5137 = vcombine.low %v5114, %v5120
    %v5138 = vcombine.low %v5126, %v5132
    %v5140 = vunpack.c.l.s4 1966171168
    %v5141 = vunpack.c.0.s8 %v5140
    %v5142 = vlaneseq
    %v5143 = vshrl.u32 %v5142, 7
    %v5144 = vsub.s32 %v5141, %v5143
    %v5145 = vrot.slane %v5137, %v5144
    %v5147 = vunpack.c.l.s4 1966171168
    %v5148 = vunpack.c.0.s8 %v5147
    %v5149 = vlaneseq
    %v5150 = vshrl.u32 %v5149, 7
    %v5151 = vsub.s32 %v5148, %v5150
    %v5152 = vrot.slane %v5138, %v5151
    %v5153 = vcombine.low %v5145, %v5152
    %v5155 = vunpack.c.l.s4 1966171168
    %v5156 = vunpack.c.0.s8 %v5155
    %v5157 = vlaneseq
    %v5158 = vshrl.u32 %v5157, 7
    %v5159 = vsub.s32 %v5156, %v5158
    %v5160 = vrot.slane %v5153, %v5159
    %s5162 = scalar_lea.vmem %s5, 1
    %5163 = vst.msk [vmem:[%s5162] ss:$2 sm:$0xf] %vm5103, %v5160
    // Predicated region
    $region26: #{_lambda_.3} parent=1 // pred_check
      _
    $region27: #{_lambda_.3} parent=1 // pred_check_branch
      %5165 = sbr.rel (0) target = $region29
    $region28: #{_lambda_.3} parent=1 // pred_region
      _
    $region29: #{_lambda_.3} parent=1 // pred_fallthru
      _
    // Predicated region
    $region30: #{_lambda_.3} parent=1 // pred_check
      _
    $region31: #{_lambda_.3} parent=1 // pred_check_branch
      %5167 = sbr.rel (0) target = $region33
    $region32: #{_lambda_.3} parent=1 // pred_region
      _
    $region33: #{_lambda_.3} parent=1 // pred_fallthru
      _
    // Predicated region
    $region34: #{_lambda_.3} parent=1 // pred_check
      _
    $region35: #{_lambda_.3} parent=1 // pred_check_branch
      %5169 = sbr.rel (0) target = $region37
    $region36: #{_lambda_.3} parent=1 // pred_region
      _
    $region37: #{_lambda_.3} parent=1 // pred_fallthru
      _
    // Predicated region
    $region38: #{_lambda_.3} parent=1 // pred_check
      _
    $region39: #{_lambda_.3} parent=1 // pred_check_branch
      %5171 = sbr.rel (0) target = $region41
    $region40: #{_lambda_.3} parent=1 // pred_region
      _
    $region41: #{_lambda_.3} parent=1 // pred_fallthru
      _
    %5172 = vsyncpa [#allocation3], 1
    %5173 = vsyncpa [#allocation5], 1

</llo_original>
